<compile_context>
chip_gen: v5e
topology: v5e:2x2
jax: 0.10.0
libtpu: 0.0.40
codegen_flags: <defaults>
</compile_context>

<pallas_src>
import jax
import jax.numpy as jnp
import numpy as np
from jax.experimental import pallas as pl
from jax.experimental.pallas import tpu as pltpu


def _round_up(x, m):
    return ((x + m - 1) // m) * m


# ----------------------------------------------------------------------------
# Glue: get_between_box + Fourier embedder (tiny [B, N, 4] tensors)
# ----------------------------------------------------------------------------
def get_between_box(bbox1, bbox2, alpha=1.2):
    # TODO(synk): 4-element sort has no clean in-kernel Pallas equivalent; done in JAX glue.
    all_x = jnp.concatenate([bbox1[..., 0::2], bbox2[..., 0::2]], axis=-1)
    all_y = jnp.concatenate([bbox1[..., 1::2], bbox2[..., 1::2]], axis=-1)
    all_x = jnp.sort(all_x, axis=-1)
    all_y = jnp.sort(all_y, axis=-1)
    x1, x2 = all_x[..., 1], all_x[..., 2]
    y1, y2 = all_y[..., 1], all_y[..., 2]
    cx, cy = (x1 + x2) / 2.0, (y1 + y2) / 2.0
    w, h = (x2 - x1) * alpha, (y2 - y1) * alpha
    return jnp.stack(
        [
            jnp.clip(cx - w / 2, 0.0, 1.0),
            jnp.clip(cy - h / 2, 0.0, 1.0),
            jnp.clip(cx + w / 2, 0.0, 1.0),
            jnp.clip(cy + h / 2, 0.0, 1.0),
        ],
        axis=-1,
    )


def fourier_embed(x, num_freqs=8, temperature=100.0):
    # GLIGEN FourierEmbedder: out = cat([sin(f0*x), cos(f0*x), sin(f1*x), ...], -1)
    freqs = temperature ** (jnp.arange(num_freqs, dtype=jnp.float32) / num_freqs)
    xf = x[..., None, :] * freqs[None, None, :, None]            # [B, N, F, 4]
    emb = jnp.concatenate([jnp.sin(xf), jnp.cos(xf)], axis=-1)   # [B, N, F, 8]
    B, N = x.shape[0], x.shape[1]
    return emb.reshape(B, N, num_freqs * 2 * 4)


# ----------------------------------------------------------------------------
# Pallas kernel: per-batch-tile null blending + two 3-layer SiLU MLPs + adds
# ----------------------------------------------------------------------------
def _hoi_kernel(masks2_ref, masks1_ref, so_ref, a_ref,
                null_so_ref, null_a_ref,
                w1_ref, b1_ref, w2_ref, b2_ref, w3_ref, b3_ref,
                aw1_ref, ab1_ref, aw2_ref, ab2_ref, aw3_ref, ab3_ref,
                add_ref, out_ref):
    bt, two_n, d_in = so_ref.shape
    n = two_n // 2
    out_pad = out_ref.shape[-1]

    # Null-feature blend on the VPU in f32:  x <- null + m * (x - null)
    # (inputs were streamed as bf16; upcast here, blend result goes back to
    #  bf16 as the MXU operand, so numerics match the previous version).
    m2 = masks2_ref[...]                                     # [Bt, 2N, 1]
    m1 = masks1_ref[...]                                     # [Bt, N, 1]
    null_so = null_so_ref[...][None]                         # [1, 1, d_in]
    null_a = null_a_ref[...][None]                           # [1, 1, d_in]

    so = null_so + m2 * (so_ref[...].astype(jnp.float32) - null_so)  # [Bt, 2N, d_in]
    a = null_a + m1 * (a_ref[...].astype(jnp.float32) - null_a)      # [Bt, N, d_in]

    # Flatten batch into the matmul M dimension; bf16 operands, f32 accumulation.
    so = so.reshape(bt * two_n, d_in).astype(jnp.bfloat16)
    a = a.reshape(bt * n, d_in).astype(jnp.bfloat16)

    def mlp(x, w1, b1, w2, b2, w3, b3):
        h = jnp.dot(x, w1[...], preferred_element_type=jnp.float32) + b1[...]
        h = jax.nn.silu(h).astype(jnp.bfloat16)
        h = jnp.dot(h, w2[...], preferred_element_type=jnp.float32) + b2[...]
        h = jax.nn.silu(h).astype(jnp.bfloat16)
        return jnp.dot(h, w3[...], preferred_element_type=jnp.float32) + b3[...]

    so_out = mlp(so, w1_ref, b1_ref, w2_ref, b2_ref, w3_ref, b3_ref)      # [Bt*2N, out_pad]
    a_out = mlp(a, aw1_ref, ab1_ref, aw2_ref, ab2_ref, aw3_ref, ab3_ref)  # [Bt*N, out_pad]

    so_out = so_out.reshape(bt, two_n, out_pad)
    a_out = a_out.reshape(bt, n, out_pad)

    # add_ref: [3, N, out_pad], row order [subject, action, object].
    add = add_ref[...]
    # Single contiguous batch-major store of the whole (bt, 3, N, out_pad) slab.
    out_ref[...] = jnp.stack(
        [so_out[:, :n, :] + add[0][None],    # subject
         a_out + add[1][None],               # action
         so_out[:, n:, :] + add[2][None]],   # object
        axis=1)


def _choose_batch_tile(B, N, target_rows=512, split_threshold=1024):
    """Pick the batch tile so each grid step feeds a large M to the MXU.

    Small problems (B*2N < split_threshold) get a single grid step: the fixed
    ~0.35 us per-step cost and (on v7x) duplicated weight DMA across the two
    TensorCores dominate otherwise.  Large problems get ~target_rows rows per
    step and at least 2 steps so megacore sharding has work on both cores.
    """
    rows_per_batch = 2 * N
    total_rows = B * rows_per_batch
    if total_rows < split_threshold:
        return B
    bt = max(1, target_rows // rows_per_batch)
    bt = min(bt, max(1, B // 2))
    while B % bt != 0:
        bt -= 1
    return max(bt, 1)


# ----------------------------------------------------------------------------
# One-time parameter preparation (hoisted out of the per-call hot path)
# ----------------------------------------------------------------------------
def prepare_hoi_params(params, N):
    in_dim = params["null_positive"].shape[0]
    pos_dim = params["null_position"].shape[0]
    d_in = in_dim + pos_dim
    hid = params["W1"].shape[-1]
    out_dim = params["W3"].shape[-1]
    out_pad = _round_up(out_dim, 128)   # lane-dense last matmul + stores
    max_inter = params["interaction_emb"].shape[0]
    assert N <= max_inter, f"N={N} exceeds max_interactions={max_inter}"
    assert params["W1"].shape[0] == d_in

    def w(name, pad_out=False):
        x = params[name].astype(jnp.float32)
        if pad_out and out_pad != out_dim:
            x = jnp.pad(x, ((0, 0), (0, out_pad - out_dim)))
        return x.astype(jnp.bfloat16)

    def b(name, pad_out=False):
        x = params[name].reshape(1, -1).astype(jnp.float32)
        if pad_out and out_pad != out_dim:
            x = jnp.pad(x, ((0, 0), (0, out_pad - out_dim)))
        return x

    # AbsolutePositionalEmbedding forward: emb(arange(N)) * dim**-0.5 ; the raw
    # position_embedding.emb lookup is added unscaled.  Fold both into one table.
    inter = params["interaction_emb"][:N].astype(jnp.float32) * (out_dim ** -0.5)
    posemb = params["position_emb"].astype(jnp.float32)
    add = jnp.stack([inter + posemb[0],      # subject -> position idx 0
                     inter + posemb[2],      # action  -> position idx 2
                     inter + posemb[1]],     # object  -> position idx 1
                    axis=0)                  # [3, N, out_dim]
    if out_pad != out_dim:
        add = jnp.pad(add, ((0, 0), (0, 0), (0, out_pad - out_dim)))

    null_so = jnp.concatenate(
        [params["null_positive"], params["null_position"]]).reshape(1, d_in).astype(jnp.float32)
    null_a = jnp.concatenate(
        [params["null_action"], params["null_position"]]).reshape(1, d_in).astype(jnp.float32)

    return {
        "W1": w("W1"), "b1": b("b1"), "W2": w("W2"), "b2": b("b2"),
        "W3": w("W3", True), "b3": b("b3", True),
        "aW1": w("aW1"), "ab1": b("ab1"), "aW2": w("aW2"), "ab2": b("ab2"),
        "aW3": w("aW3", True), "ab3": b("ab3", True),
        "null_so": null_so, "null_a": null_a, "add": add,
        "num_freqs": pos_dim // 8,
        "d_in": d_in, "hid": hid, "out_dim": out_dim, "out_pad": out_pad, "N": N,
    }


# ----------------------------------------------------------------------------
# Forward
# ----------------------------------------------------------------------------
def hoi_position_net_v5(prep, subject_boxes, object_boxes, masks,
                        subj_pos_emb, obj_pos_emb, act_pos_emb):
    B, N, _ = subject_boxes.shape
    assert N == prep["N"], "parameters were prepared for a different N"
    d_in, hid = prep["d_in"], prep["hid"]
    out_dim, out_pad = prep["out_dim"], prep["out_pad"]
    num_freqs = prep["num_freqs"]
    # NOTE: N that is not a multiple of 8 is still correct (blocks cover the
    # full last-two dims) but may incur an in-kernel relayout on the S/O split.

    # ---- glue (tiny [B, N, 4] tensors) ------------------------------------
    action_boxes = get_between_box(subject_boxes, object_boxes)
    s_xy = fourier_embed(subject_boxes, num_freqs)
    o_xy = fourier_embed(object_boxes, num_freqs)
    a_xy = fourier_embed(action_boxes, num_freqs)

    masks1 = masks[..., None].astype(jnp.float32)             # [B, N, 1]
    masks2 = jnp.concatenate([masks1, masks1], axis=1)        # [B, 2N, 1]

    # Lane-dense [*, d_in] slabs; subject/object stacked along rows (shared
    # MLP weights).  Streamed as bf16 -> halves the batch-scaling input DMA.
    s_in = jnp.concatenate([subj_pos_emb, s_xy], axis=-1)     # [B, N, d_in]
    o_in = jnp.concatenate([obj_pos_emb, o_xy], axis=-1)
    so_in = jnp.concatenate([s_in, o_in], axis=1).astype(jnp.bfloat16)   # [B, 2N, d_in]
    a_in = jnp.concatenate([act_pos_emb, a_xy], axis=-1).astype(jnp.bfloat16)

    bt = _choose_batch_tile(B, N)
    grid = (B // bt,)
    # Megacore sharding only when there is more than one step of real work.
    dim_sem = ("parallel",) if grid[0] > 1 else ("arbitrary",)

    def dspec(nrows, ncols):   # per-batch-tile data block
        return pl.BlockSpec((bt, nrows, ncols), lambda b: (b, 0, 0))

    def wspec(shape):          # weights / tables: same block every grid step
        # NOTE: pipeline_mode=pl.Buffered(1) would drop the dead second buffer
        # on these grid-invariant blocks; VMEM is not a constraint here.
        return pl.BlockSpec(shape, lambda b: (0,) * len(shape))

    in_specs = [
        dspec(2 * N, 1), dspec(N, 1),
        dspec(2 * N, d_in), dspec(N, d_in),
        wspec((1, d_in)), wspec((1, d_in)),
        wspec((d_in, hid)), wspec((1, hid)),
        wspec((hid, hid)), wspec((1, hid)),
        wspec((hid, out_pad)), wspec((1, out_pad)),
        wspec((d_in, hid)), wspec((1, hid)),
        wspec((hid, hid)), wspec((1, hid)),
        wspec((hid, out_pad)), wspec((1, out_pad)),
        wspec((3, N, out_pad)),
    ]
    # Batch-major, lane-dense output: one contiguous HBM slab per grid step.
    out_spec = pl.BlockSpec((bt, 3, N, out_pad), lambda b: (b, 0, 0, 0))

    raw = pl.pallas_call(
        _hoi_kernel,
        out_shape=jax.ShapeDtypeStruct((B, 3, N, out_pad), jnp.float32),
        grid=grid,
        in_specs=in_specs,
        out_specs=out_spec,
        compiler_params=pltpu.CompilerParams(dimension_semantics=dim_sem),
    )(masks2, masks1, so_in, a_in, prep["null_so"], prep["null_a"],
      prep["W1"], prep["b1"], prep["W2"], prep["b2"], prep["W3"], prep["b3"],
      prep["aW1"], prep["ab1"], prep["aW2"], prep["ab2"], prep["aW3"], prep["ab3"],
      prep["add"])

    # [B, 3, N, out_pad] -> [B, 3N, out_dim] with rows [subject, action, object]
    out = raw.reshape(B, 3 * N, out_pad)
    if out_pad != out_dim:
        out = out[..., :out_dim]
    return out


# ----------------------------------------------------------------------------
# Pure-JAX reference (mirrors the PyTorch forward) for a correctness check
# ----------------------------------------------------------------------------
def reference(params, sb, ob, masks, sp, op, ap, *, num_freqs=8):
    out_dim = params["W3"].shape[-1]
    N = sb.shape[1]
    m = masks[..., None].astype(jnp.float32)
    abox = get_between_box(sb, ob)
    s_xy = fourier_embed(sb, num_freqs)
    o_xy = fourier_embed(ob, num_freqs)
    a_xy = fourier_embed(abox, num_freqs)

    pos_null = params["null_positive"][None, None, :]
    xy_null = params["null_position"][None, None, :]
    act_null = params["null_action"][None, None, :]

    sp = sp * m + (1 - m) * pos_null
    op_ = op * m + (1 - m) * pos_null
    s_xy = s_xy * m + (1 - m) * xy_null
    o_xy = o_xy * m + (1 - m) * xy_null
    a_xy = a_xy * m + (1 - m) * xy_null
    ap = ap * m + (1 - m) * act_null

    def mlp(x, p):
        h = jax.nn.silu(x @ params[p + "W1"] + params[p + "b1"])
        h = jax.nn.silu(h @ params[p + "W2"] + params[p + "b2"])
        return h @ params[p + "W3"] + params[p + "b3"]

    o_s = mlp(jnp.concatenate([sp, s_xy], -1), "")
    o_o = mlp(jnp.concatenate([op_, o_xy], -1), "")
    o_a = mlp(jnp.concatenate([ap, a_xy], -1), "a")

    inter = params["interaction_emb"][:N] * (out_dim ** -0.5)
    o_s = o_s + inter + params["position_emb"][0]
    o_o = o_o + inter + params["position_emb"][1]
    o_a = o_a + inter + params["position_emb"][2]
    return jnp.concatenate([o_s, o_a, o_o], axis=1)


# ----------------------------------------------------------------------------
if __name__ == "__main__":
    B, N = 2, 8
    in_dim, out_dim = 64, 64
    fourier_freqs = 8
    max_interactions = 30
    pos_dim = fourier_freqs * 2 * 4
    d_in = in_dim + pos_dim

    key = jax.random.PRNGKey(0)
    ks = jax.random.split(key, 24)

    def rnd(k, shape, scale=0.02):
        return jax.random.normal(k, shape, jnp.float32) * scale

    # Deterministic synthetic parameters (torch inits the null features to zeros;
    # random small values here so the masking path is actually exercised).
    params = {
        "W1": rnd(ks[0], (d_in, 512)), "b1": rnd(ks[1], (512,)),
        "W2": rnd(ks[2], (512, 512)), "b2": rnd(ks[3], (512,)),
        "W3": rnd(ks[4], (512, out_dim)), "b3": rnd(ks[5], (out_dim,)),
        "aW1": rnd(ks[6], (d_in, 512)), "ab1": rnd(ks[7], (512,)),
        "aW2": rnd(ks[8], (512, 512)), "ab2": rnd(ks[9], (512,)),
        "aW3": rnd(ks[10], (512, out_dim)), "ab3": rnd(ks[11], (out_dim,)),
        "null_positive": rnd(ks[12], (in_dim,), 0.1),
        "null_action": rnd(ks[13], (in_dim,), 0.1),
        "null_position": rnd(ks[14], (pos_dim,), 0.1),
        "interaction_emb": rnd(ks[15], (max_interactions, out_dim), 0.1),
        "position_emb": rnd(ks[16], (3, out_dim), 0.1),
    }

    subject_boxes = jax.random.uniform(ks[17], (B, N, 4), jnp.float32)
    object_boxes = jax.random.uniform(ks[18], (B, N, 4), jnp.float32)
    masks = jnp.stack([
        (jnp.arange(N) < 5).astype(jnp.float32),
        (jnp.arange(N) < 3).astype(jnp.float32),
    ], axis=0)                                                    # [B, N]
    subj_pos = rnd(ks[19], (B, N, in_dim), 0.5)
    obj_pos = rnd(ks[20], (B, N, in_dim), 0.5)
    act_pos = rnd(ks[21], (B, N, in_dim), 0.5)

    # One-time parameter prep (bf16 cast, padding, null/add folding).
    prep = prepare_hoi_params(params, N)
    prep = jax.block_until_ready(prep)

    out = hoi_position_net_v5(prep, subject_boxes, object_boxes, masks,
                              subj_pos, obj_pos, act_pos)
    out = jax.block_until_ready(out)
    assert out.shape == (B, 3 * N, out_dim), out.shape

    ref = jax.block_until_ready(
        reference(params, subject_boxes, object_boxes, masks,
                  subj_pos, obj_pos, act_pos, num_freqs=fourier_freqs))

    # Intentionally relaxed tolerance: matmul operands are bf16 (f32 accumulate)
    # while the reference is full f32.
    if not np.allclose(np.asarray(out), np.asarray(ref), atol=1e-2, rtol=1e-2):
        diff = np.max(np.abs(np.asarray(out) - np.asarray(ref)))
        raise AssertionError(f"Pallas kernel output mismatch (max abs diff {diff})")

    print("KERNEL_OK")
</pallas_src>

<mosaic_0001>
module attributes {stable_mosaic.version = 11 : i64} {
  func.func @_hoi_kernel(%arg0: i32, %arg1: memref<2x16x1xf32, #tpu.memory_space<vmem>>, %arg2: memref<2x8x1xf32, #tpu.memory_space<vmem>>, %arg3: memref<2x16x128xbf16, #tpu.memory_space<vmem>>, %arg4: memref<2x8x128xbf16, #tpu.memory_space<vmem>>, %arg5: memref<1x128xf32, #tpu.memory_space<vmem>>, %arg6: memref<1x128xf32, #tpu.memory_space<vmem>>, %arg7: memref<128x512xbf16, #tpu.memory_space<vmem>>, %arg8: memref<1x512xf32, #tpu.memory_space<vmem>>, %arg9: memref<512x512xbf16, #tpu.memory_space<vmem>>, %arg10: memref<1x512xf32, #tpu.memory_space<vmem>>, %arg11: memref<512x128xbf16, #tpu.memory_space<vmem>>, %arg12: memref<1x128xf32, #tpu.memory_space<vmem>>, %arg13: memref<128x512xbf16, #tpu.memory_space<vmem>>, %arg14: memref<1x512xf32, #tpu.memory_space<vmem>>, %arg15: memref<512x512xbf16, #tpu.memory_space<vmem>>, %arg16: memref<1x512xf32, #tpu.memory_space<vmem>>, %arg17: memref<512x128xbf16, #tpu.memory_space<vmem>>, %arg18: memref<1x128xf32, #tpu.memory_space<vmem>>, %arg19: memref<3x8x128xf32, #tpu.memory_space<vmem>>, %arg20: memref<2x3x8x128xf32, #tpu.memory_space<vmem>>) attributes {dimension_semantics = [#tpu.dimension_semantics<arbitrary>], iteration_bounds = array<i64: 1>, scalar_prefetch = 0 : i64, scratch_operands = 0 : i64, tpu.core_type = #tpu.core_type<tc>, window_params = [{transform_indices = @transform_0, window_bounds = array<i64: 2, 16, 1>}, {transform_indices = @transform_1, window_bounds = array<i64: 2, 8, 1>}, {transform_indices = @transform_2, window_bounds = array<i64: 2, 16, 128>}, {transform_indices = @transform_3, window_bounds = array<i64: 2, 8, 128>}, {pipeline_mode = #tpu.pipeline_mode<synchronous>, transform_indices = @transform_4, window_bounds = array<i64: 1, 128>}, {pipeline_mode = #tpu.pipeline_mode<synchronous>, transform_indices = @transform_5, window_bounds = array<i64: 1, 128>}, {pipeline_mode = #tpu.pipeline_mode<synchronous>, transform_indices = @transform_6, window_bounds = array<i64: 128, 512>}, {pipeline_mode = #tpu.pipeline_mode<synchronous>, transform_indices = @transform_7, window_bounds = array<i64: 1, 512>}, {pipeline_mode = #tpu.pipeline_mode<synchronous>, transform_indices = @transform_8, window_bounds = array<i64: 512, 512>}, {pipeline_mode = #tpu.pipeline_mode<synchronous>, transform_indices = @transform_9, window_bounds = array<i64: 1, 512>}, {pipeline_mode = #tpu.pipeline_mode<synchronous>, transform_indices = @transform_10, window_bounds = array<i64: 512, 128>}, {pipeline_mode = #tpu.pipeline_mode<synchronous>, transform_indices = @transform_11, window_bounds = array<i64: 1, 128>}, {pipeline_mode = #tpu.pipeline_mode<synchronous>, transform_indices = @transform_12, window_bounds = array<i64: 128, 512>}, {pipeline_mode = #tpu.pipeline_mode<synchronous>, transform_indices = @transform_13, window_bounds = array<i64: 1, 512>}, {pipeline_mode = #tpu.pipeline_mode<synchronous>, transform_indices = @transform_14, window_bounds = array<i64: 512, 512>}, {pipeline_mode = #tpu.pipeline_mode<synchronous>, transform_indices = @transform_15, window_bounds = array<i64: 1, 512>}, {pipeline_mode = #tpu.pipeline_mode<synchronous>, transform_indices = @transform_16, window_bounds = array<i64: 512, 128>}, {pipeline_mode = #tpu.pipeline_mode<synchronous>, transform_indices = @transform_17, window_bounds = array<i64: 1, 128>}, {pipeline_mode = #tpu.pipeline_mode<synchronous>, transform_indices = @transform_18, window_bounds = array<i64: 3, 8, 128>}, {transform_indices = @transform_19, window_bounds = array<i64: 2, 3, 8, 128>}]} {
    %c0 = arith.constant 0 : index
    %c0_0 = arith.constant 0 : index
    %c0_1 = arith.constant 0 : index
    %0 = vector.load %arg1[%c0, %c0_0, %c0_1] : memref<2x16x1xf32, #tpu.memory_space<vmem>>, vector<2x16x1xf32>
    %c0_2 = arith.constant 0 : index
    %c0_3 = arith.constant 0 : index
    %c0_4 = arith.constant 0 : index
    %1 = vector.load %arg2[%c0_2, %c0_3, %c0_4] : memref<2x8x1xf32, #tpu.memory_space<vmem>>, vector<2x8x1xf32>
    %c0_5 = arith.constant 0 : index
    %c0_6 = arith.constant 0 : index
    %2 = vector.load %arg5[%c0_5, %c0_6] : memref<1x128xf32, #tpu.memory_space<vmem>>, vector<1x128xf32>
    %3 = vector.shape_cast %2 : vector<1x128xf32> to vector<1x1x128xf32>
    %c0_7 = arith.constant 0 : index
    %c0_8 = arith.constant 0 : index
    %4 = vector.load %arg6[%c0_7, %c0_8] : memref<1x128xf32, #tpu.memory_space<vmem>>, vector<1x128xf32>
    %5 = vector.shape_cast %4 : vector<1x128xf32> to vector<1x1x128xf32>
    %c0_9 = arith.constant 0 : index
    %c0_10 = arith.constant 0 : index
    %c0_11 = arith.constant 0 : index
    %6 = vector.load %arg3[%c0_9, %c0_10, %c0_11] : memref<2x16x128xbf16, #tpu.memory_space<vmem>>, vector<2x16x128xbf16>
    %7 = arith.extf %6 : vector<2x16x128xbf16> to vector<2x16x128xf32>
    %8 = vector.broadcast %3 : vector<1x1x128xf32> to vector<2x16x128xf32>
    %9 = arith.subf %7, %8 : vector<2x16x128xf32>
    %10 = vector.broadcast %0 : vector<2x16x1xf32> to vector<2x16x128xf32>
    %11 = arith.mulf %10, %9 : vector<2x16x128xf32>
    %12 = vector.broadcast %3 : vector<1x1x128xf32> to vector<2x16x128xf32>
    %13 = arith.addf %12, %11 : vector<2x16x128xf32>
    %c0_12 = arith.constant 0 : index
    %c0_13 = arith.constant 0 : index
    %c0_14 = arith.constant 0 : index
    %14 = vector.load %arg4[%c0_12, %c0_13, %c0_14] : memref<2x8x128xbf16, #tpu.memory_space<vmem>>, vector<2x8x128xbf16>
    %15 = arith.extf %14 : vector<2x8x128xbf16> to vector<2x8x128xf32>
    %16 = vector.broadcast %5 : vector<1x1x128xf32> to vector<2x8x128xf32>
    %17 = arith.subf %15, %16 : vector<2x8x128xf32>
    %18 = vector.broadcast %1 : vector<2x8x1xf32> to vector<2x8x128xf32>
    %19 = arith.mulf %18, %17 : vector<2x8x128xf32>
    %20 = vector.broadcast %5 : vector<1x1x128xf32> to vector<2x8x128xf32>
    %21 = arith.addf %20, %19 : vector<2x8x128xf32>
    %22 = vector.shape_cast %13 : vector<2x16x128xf32> to vector<32x128xf32>
    %23 = arith.truncf %22 : vector<32x128xf32> to vector<32x128xbf16>
    %24 = vector.shape_cast %21 : vector<2x8x128xf32> to vector<16x128xf32>
    %25 = arith.truncf %24 : vector<16x128xf32> to vector<16x128xbf16>
    %c0_15 = arith.constant 0 : index
    %c0_16 = arith.constant 0 : index
    %26 = vector.load %arg7[%c0_15, %c0_16] : memref<128x512xbf16, #tpu.memory_space<vmem>>, vector<128x512xbf16>
    %cst = arith.constant dense<0.000000e+00> : vector<32x512xf32>
    %27 = tpu.matmul %23, %26, %cst {dimension_numbers = #tpu.dot_dimension_numbers<[1], [0], [0], [1], [0, 0, 1, 1], [], []>} : vector<32x128xbf16>, vector<128x512xbf16>, vector<32x512xf32> -> vector<32x512xf32>
    %c0_17 = arith.constant 0 : index
    %c0_18 = arith.constant 0 : index
    %28 = vector.load %arg8[%c0_17, %c0_18] : memref<1x512xf32, #tpu.memory_space<vmem>>, vector<1x512xf32>
    %29 = vector.broadcast %28 : vector<1x512xf32> to vector<32x512xf32>
    %30 = arith.addf %27, %29 : vector<32x512xf32>
    %31 = arith.negf %30 : vector<32x512xf32>
    %32 = math.exp %31 : vector<32x512xf32>
    %cst_19 = arith.constant 1.000000e+00 : f32
    %33 = vector.broadcast %cst_19 : f32 to vector<32x512xf32>
    %34 = arith.addf %33, %32 : vector<32x512xf32>
    %35 = arith.divf %33, %34 : vector<32x512xf32>
    %36 = arith.mulf %30, %35 : vector<32x512xf32>
    %37 = arith.truncf %36 : vector<32x512xf32> to vector<32x512xbf16>
    %c0_20 = arith.constant 0 : index
    %c0_21 = arith.constant 0 : index
    %38 = vector.load %arg9[%c0_20, %c0_21] : memref<512x512xbf16, #tpu.memory_space<vmem>>, vector<512x512xbf16>
    %cst_22 = arith.constant dense<0.000000e+00> : vector<32x512xf32>
    %39 = tpu.matmul %37, %38, %cst_22 {dimension_numbers = #tpu.dot_dimension_numbers<[1], [0], [0], [1], [0, 0, 1, 1], [], []>} : vector<32x512xbf16>, vector<512x512xbf16>, vector<32x512xf32> -> vector<32x512xf32>
    %c0_23 = arith.constant 0 : index
    %c0_24 = arith.constant 0 : index
    %40 = vector.load %arg10[%c0_23, %c0_24] : memref<1x512xf32, #tpu.memory_space<vmem>>, vector<1x512xf32>
    %41 = vector.broadcast %40 : vector<1x512xf32> to vector<32x512xf32>
    %42 = arith.addf %39, %41 : vector<32x512xf32>
    %43 = arith.negf %42 : vector<32x512xf32>
    %44 = math.exp %43 : vector<32x512xf32>
    %cst_25 = arith.constant 1.000000e+00 : f32
    %45 = vector.broadcast %cst_25 : f32 to vector<32x512xf32>
    %46 = arith.addf %45, %44 : vector<32x512xf32>
    %47 = arith.divf %45, %46 : vector<32x512xf32>
    %48 = arith.mulf %42, %47 : vector<32x512xf32>
    %49 = arith.truncf %48 : vector<32x512xf32> to vector<32x512xbf16>
    %c0_26 = arith.constant 0 : index
    %c0_27 = arith.constant 0 : index
    %50 = vector.load %arg11[%c0_26, %c0_27] : memref<512x128xbf16, #tpu.memory_space<vmem>>, vector<512x128xbf16>
    %cst_28 = arith.constant dense<0.000000e+00> : vector<32x128xf32>
    %51 = tpu.matmul %49, %50, %cst_28 {dimension_numbers = #tpu.dot_dimension_numbers<[1], [0], [0], [1], [0, 0, 1, 1], [], []>} : vector<32x512xbf16>, vector<512x128xbf16>, vector<32x128xf32> -> vector<32x128xf32>
    %c0_29 = arith.constant 0 : index
    %c0_30 = arith.constant 0 : index
    %52 = vector.load %arg12[%c0_29, %c0_30] : memref<1x128xf32, #tpu.memory_space<vmem>>, vector<1x128xf32>
    %53 = vector.broadcast %52 : vector<1x128xf32> to vector<32x128xf32>
    %54 = arith.addf %51, %53 : vector<32x128xf32>
    %c0_31 = arith.constant 0 : index
    %c0_32 = arith.constant 0 : index
    %55 = vector.load %arg13[%c0_31, %c0_32] : memref<128x512xbf16, #tpu.memory_space<vmem>>, vector<128x512xbf16>
    %cst_33 = arith.constant dense<0.000000e+00> : vector<16x512xf32>
    %56 = tpu.matmul %25, %55, %cst_33 {dimension_numbers = #tpu.dot_dimension_numbers<[1], [0], [0], [1], [0, 0, 1, 1], [], []>} : vector<16x128xbf16>, vector<128x512xbf16>, vector<16x512xf32> -> vector<16x512xf32>
    %c0_34 = arith.constant 0 : index
    %c0_35 = arith.constant 0 : index
    %57 = vector.load %arg14[%c0_34, %c0_35] : memref<1x512xf32, #tpu.memory_space<vmem>>, vector<1x512xf32>
    %58 = vector.broadcast %57 : vector<1x512xf32> to vector<16x512xf32>
    %59 = arith.addf %56, %58 : vector<16x512xf32>
    %60 = arith.negf %59 : vector<16x512xf32>
    %61 = math.exp %60 : vector<16x512xf32>
    %cst_36 = arith.constant 1.000000e+00 : f32
    %62 = vector.broadcast %cst_36 : f32 to vector<16x512xf32>
    %63 = arith.addf %62, %61 : vector<16x512xf32>
    %64 = arith.divf %62, %63 : vector<16x512xf32>
    %65 = arith.mulf %59, %64 : vector<16x512xf32>
    %66 = arith.truncf %65 : vector<16x512xf32> to vector<16x512xbf16>
    %c0_37 = arith.constant 0 : index
    %c0_38 = arith.constant 0 : index
    %67 = vector.load %arg15[%c0_37, %c0_38] : memref<512x512xbf16, #tpu.memory_space<vmem>>, vector<512x512xbf16>
    %cst_39 = arith.constant dense<0.000000e+00> : vector<16x512xf32>
    %68 = tpu.matmul %66, %67, %cst_39 {dimension_numbers = #tpu.dot_dimension_numbers<[1], [0], [0], [1], [0, 0, 1, 1], [], []>} : vector<16x512xbf16>, vector<512x512xbf16>, vector<16x512xf32> -> vector<16x512xf32>
    %c0_40 = arith.constant 0 : index
    %c0_41 = arith.constant 0 : index
    %69 = vector.load %arg16[%c0_40, %c0_41] : memref<1x512xf32, #tpu.memory_space<vmem>>, vector<1x512xf32>
    %70 = vector.broadcast %69 : vector<1x512xf32> to vector<16x512xf32>
    %71 = arith.addf %68, %70 : vector<16x512xf32>
    %72 = arith.negf %71 : vector<16x512xf32>
    %73 = math.exp %72 : vector<16x512xf32>
    %cst_42 = arith.constant 1.000000e+00 : f32
    %74 = vector.broadcast %cst_42 : f32 to vector<16x512xf32>
    %75 = arith.addf %74, %73 : vector<16x512xf32>
    %76 = arith.divf %74, %75 : vector<16x512xf32>
    %77 = arith.mulf %71, %76 : vector<16x512xf32>
    %78 = arith.truncf %77 : vector<16x512xf32> to vector<16x512xbf16>
    %c0_43 = arith.constant 0 : index
    %c0_44 = arith.constant 0 : index
    %79 = vector.load %arg17[%c0_43, %c0_44] : memref<512x128xbf16, #tpu.memory_space<vmem>>, vector<512x128xbf16>
    %cst_45 = arith.constant dense<0.000000e+00> : vector<16x128xf32>
    %80 = tpu.matmul %78, %79, %cst_45 {dimension_numbers = #tpu.dot_dimension_numbers<[1], [0], [0], [1], [0, 0, 1, 1], [], []>} : vector<16x512xbf16>, vector<512x128xbf16>, vector<16x128xf32> -> vector<16x128xf32>
    %c0_46 = arith.constant 0 : index
    %c0_47 = arith.constant 0 : index
    %81 = vector.load %arg18[%c0_46, %c0_47] : memref<1x128xf32, #tpu.memory_space<vmem>>, vector<1x128xf32>
    %82 = vector.broadcast %81 : vector<1x128xf32> to vector<16x128xf32>
    %83 = arith.addf %80, %82 : vector<16x128xf32>
    %84 = vector.shape_cast %54 : vector<32x128xf32> to vector<2x16x128xf32>
    %85 = vector.shape_cast %83 : vector<16x128xf32> to vector<2x8x128xf32>
    %c0_48 = arith.constant 0 : index
    %c0_49 = arith.constant 0 : index
    %c0_50 = arith.constant 0 : index
    %86 = vector.load %arg19[%c0_48, %c0_49, %c0_50] : memref<3x8x128xf32, #tpu.memory_space<vmem>>, vector<3x8x128xf32>
    %87 = vector.extract_strided_slice %84 {offsets = [0, 0, 0], sizes = [2, 8, 128], strides = [1, 1, 1]} : vector<2x16x128xf32> to vector<2x8x128xf32>
    %88 = vector.extract_strided_slice %86 {offsets = [0, 0, 0], sizes = [1, 8, 128], strides = [1, 1, 1]} : vector<3x8x128xf32> to vector<1x8x128xf32>
    %89 = vector.shape_cast %88 : vector<1x8x128xf32> to vector<8x128xf32>
    %90 = vector.shape_cast %89 : vector<8x128xf32> to vector<1x8x128xf32>
    %91 = vector.broadcast %90 : vector<1x8x128xf32> to vector<2x8x128xf32>
    %92 = arith.addf %87, %91 : vector<2x8x128xf32>
    %93 = vector.extract_strided_slice %86 {offsets = [1, 0, 0], sizes = [1, 8, 128], strides = [1, 1, 1]} : vector<3x8x128xf32> to vector<1x8x128xf32>
    %94 = vector.shape_cast %93 : vector<1x8x128xf32> to vector<8x128xf32>
    %95 = vector.shape_cast %94 : vector<8x128xf32> to vector<1x8x128xf32>
    %96 = vector.broadcast %95 : vector<1x8x128xf32> to vector<2x8x128xf32>
    %97 = arith.addf %85, %96 : vector<2x8x128xf32>
    %98 = vector.extract_strided_slice %84 {offsets = [0, 8, 0], sizes = [2, 8, 128], strides = [1, 1, 1]} : vector<2x16x128xf32> to vector<2x8x128xf32>
    %99 = vector.extract_strided_slice %86 {offsets = [2, 0, 0], sizes = [1, 8, 128], strides = [1, 1, 1]} : vector<3x8x128xf32> to vector<1x8x128xf32>
    %100 = vector.shape_cast %99 : vector<1x8x128xf32> to vector<8x128xf32>
    %101 = vector.shape_cast %100 : vector<8x128xf32> to vector<1x8x128xf32>
    %102 = vector.broadcast %101 : vector<1x8x128xf32> to vector<2x8x128xf32>
    %103 = arith.addf %98, %102 : vector<2x8x128xf32>
    %104 = vector.shape_cast %92 : vector<2x8x128xf32> to vector<2x1x8x128xf32>
    %105 = vector.shape_cast %97 : vector<2x8x128xf32> to vector<2x1x8x128xf32>
    %106 = vector.shape_cast %103 : vector<2x8x128xf32> to vector<2x1x8x128xf32>
    %107 = tpu.concatenate %104, %105, %106 in 1 : vector<2x1x8x128xf32>, vector<2x1x8x128xf32>, vector<2x1x8x128xf32> -> vector<2x3x8x128xf32>
    %c0_51 = arith.constant 0 : index
    %c0_52 = arith.constant 0 : index
    %c0_53 = arith.constant 0 : index
    %c0_54 = arith.constant 0 : index
    %108 = vector.load %arg20[%c0_51, %c0_52, %c0_53, %c0_54] : memref<2x3x8x128xf32, #tpu.memory_space<vmem>>, vector<2x3x8x128xf32>
    tpu.vector_store %arg20[%c0_51, %c0_52, %c0_53, %c0_54], %107 {strides = array<i32>} : memref<2x3x8x128xf32, #tpu.memory_space<vmem>>, vector<2x3x8x128xf32>,
    return
  }
  func.func @transform_0(%arg0: i32) -> (i32, i32, i32) {
    %c0_i32 = arith.constant 0 : i32
    %c0_i32_0 = arith.constant 0 : i32
    %c0_i32_1 = arith.constant 0 : i32
    return %arg0, %c0_i32, %c0_i32_0 : i32, i32, i32
  }
  func.func @transform_1(%arg0: i32) -> (i32, i32, i32) {
    %c0_i32 = arith.constant 0 : i32
    %c0_i32_0 = arith.constant 0 : i32
    %c0_i32_1 = arith.constant 0 : i32
    return %arg0, %c0_i32, %c0_i32_0 : i32, i32, i32
  }
  func.func @transform_2(%arg0: i32) -> (i32, i32, i32) {
    %c0_i32 = arith.constant 0 : i32
    %c0_i32_0 = arith.constant 0 : i32
    %c0_i32_1 = arith.constant 0 : i32
    return %arg0, %c0_i32, %c0_i32_0 : i32, i32, i32
  }
  func.func @transform_3(%arg0: i32) -> (i32, i32, i32) {
    %c0_i32 = arith.constant 0 : i32
    %c0_i32_0 = arith.constant 0 : i32
    %c0_i32_1 = arith.constant 0 : i32
    return %arg0, %c0_i32, %c0_i32_0 : i32, i32, i32
  }
  func.func @transform_4(%arg0: i32) -> (i32, i32) {
    %c0_i32 = arith.constant 0 : i32
    %c0_i32_0 = arith.constant 0 : i32
    %c0_i32_1 = arith.constant 0 : i32
    return %c0_i32, %c0_i32_0 : i32, i32
  }
  func.func @transform_5(%arg0: i32) -> (i32, i32) {
    %c0_i32 = arith.constant 0 : i32
    %c0_i32_0 = arith.constant 0 : i32
    %c0_i32_1 = arith.constant 0 : i32
    return %c0_i32, %c0_i32_0 : i32, i32
  }
  func.func @transform_6(%arg0: i32) -> (i32, i32) {
    %c0_i32 = arith.constant 0 : i32
    %c0_i32_0 = arith.constant 0 : i32
    %c0_i32_1 = arith.constant 0 : i32
    return %c0_i32, %c0_i32_0 : i32, i32
  }
  func.func @transform_7(%arg0: i32) -> (i32, i32) {
    %c0_i32 = arith.constant 0 : i32
    %c0_i32_0 = arith.constant 0 : i32
    %c0_i32_1 = arith.constant 0 : i32
    return %c0_i32, %c0_i32_0 : i32, i32
  }
  func.func @transform_8(%arg0: i32) -> (i32, i32) {
    %c0_i32 = arith.constant 0 : i32
    %c0_i32_0 = arith.constant 0 : i32
    %c0_i32_1 = arith.constant 0 : i32
    return %c0_i32, %c0_i32_0 : i32, i32
  }
  func.func @transform_9(%arg0: i32) -> (i32, i32) {
    %c0_i32 = arith.constant 0 : i32
    %c0_i32_0 = arith.constant 0 : i32
    %c0_i32_1 = arith.constant 0 : i32
    return %c0_i32, %c0_i32_0 : i32, i32
  }
  func.func @transform_10(%arg0: i32) -> (i32, i32) {
    %c0_i32 = arith.constant 0 : i32
    %c0_i32_0 = arith.constant 0 : i32
    %c0_i32_1 = arith.constant 0 : i32
    return %c0_i32, %c0_i32_0 : i32, i32
  }
  func.func @transform_11(%arg0: i32) -> (i32, i32) {
    %c0_i32 = arith.constant 0 : i32
    %c0_i32_0 = arith.constant 0 : i32
    %c0_i32_1 = arith.constant 0 : i32
    return %c0_i32, %c0_i32_0 : i32, i32
  }
  func.func @transform_12(%arg0: i32) -> (i32, i32) {
    %c0_i32 = arith.constant 0 : i32
    %c0_i32_0 = arith.constant 0 : i32
    %c0_i32_1 = arith.constant 0 : i32
    return %c0_i32, %c0_i32_0 : i32, i32
  }
  func.func @transform_13(%arg0: i32) -> (i32, i32) {
    %c0_i32 = arith.constant 0 : i32
    %c0_i32_0 = arith.constant 0 : i32
    %c0_i32_1 = arith.constant 0 : i32
    return %c0_i32, %c0_i32_0 : i32, i32
  }
  func.func @transform_14(%arg0: i32) -> (i32, i32) {
    %c0_i32 = arith.constant 0 : i32
    %c0_i32_0 = arith.constant 0 : i32
    %c0_i32_1 = arith.constant 0 : i32
    return %c0_i32, %c0_i32_0 : i32, i32
  }
  func.func @transform_15(%arg0: i32) -> (i32, i32) {
    %c0_i32 = arith.constant 0 : i32
    %c0_i32_0 = arith.constant 0 : i32
    %c0_i32_1 = arith.constant 0 : i32
    return %c0_i32, %c0_i32_0 : i32, i32
  }
  func.func @transform_16(%arg0: i32) -> (i32, i32) {
    %c0_i32 = arith.constant 0 : i32
    %c0_i32_0 = arith.constant 0 : i32
    %c0_i32_1 = arith.constant 0 : i32
    return %c0_i32, %c0_i32_0 : i32, i32
  }
  func.func @transform_17(%arg0: i32) -> (i32, i32) {
    %c0_i32 = arith.constant 0 : i32
    %c0_i32_0 = arith.constant 0 : i32
    %c0_i32_1 = arith.constant 0 : i32
    return %c0_i32, %c0_i32_0 : i32, i32
  }
  func.func @transform_18(%arg0: i32) -> (i32, i32, i32) {
    %c0_i32 = arith.constant 0 : i32
    %c0_i32_0 = arith.constant 0 : i32
    %c0_i32_1 = arith.constant 0 : i32
    %c0_i32_2 = arith.constant 0 : i32
    return %c0_i32, %c0_i32_0, %c0_i32_1 : i32, i32, i32
  }
  func.func @transform_19(%arg0: i32) -> (i32, i32, i32, i32) {
    %c0_i32 = arith.constant 0 : i32
    %c0_i32_0 = arith.constant 0 : i32
    %c0_i32_1 = arith.constant 0 : i32
    %c0_i32_2 = arith.constant 0 : i32
    return %arg0, %c0_i32, %c0_i32_0, %c0_i32_1 : i32, i32, i32, i32
  }
}

</mosaic_0001>

<llo_original>
// kernel: tpu_custom_call.1
$region0: #{tpu_custom_call.1}
  #allocation0 [shape = 'u32[]', space=smem, size = 0x4, offset = 0x4, fixed_abs, tag = 'smem constant byte address 0x4 - core index']
  #allocation1 [shape = 'u32[72,128]{1,0:T(1,128)}', space=vmem, size = 0x9000, scoped, tag = 'internal scratch']
  %s0 = inlined_call_operand.vmem [shape: f32[2,16,1], index: 0, kind: input, shape index: {}]
  %s1 = inlined_call_operand.vmem [shape: f32[2,8,1], index: 1, kind: input, shape index: {}]
  %s2 = inlined_call_operand.vmem [shape: bf16[2,16,128], index: 2, kind: input, shape index: {}]
  %s3 = inlined_call_operand.vmem [shape: bf16[2,8,128], index: 3, kind: input, shape index: {}]
  %s4 = inlined_call_operand.hbm [shape: f32[1,128], index: 4, kind: input, shape index: {}]
  %s5 = inlined_call_operand.hbm [shape: f32[1,128], index: 5, kind: input, shape index: {}]
  %s6 = inlined_call_operand.hbm [shape: bf16[128,512], index: 6, kind: input, shape index: {}]
  %s7 = inlined_call_operand.vmem [shape: f32[1,512], index: 7, kind: input, shape index: {}]
  %s8 = inlined_call_operand.hbm [shape: bf16[512,512], index: 8, kind: input, shape index: {}]
  %s9 = inlined_call_operand.vmem [shape: f32[1,512], index: 9, kind: input, shape index: {}]
  %s10 = inlined_call_operand.hbm [shape: bf16[512,128], index: 10, kind: input, shape index: {}]
  %s11 = inlined_call_operand.hbm [shape: f32[1,128], index: 11, kind: input, shape index: {}]
  %s12 = inlined_call_operand.hbm [shape: bf16[128,512], index: 12, kind: input, shape index: {}]
  %s13 = inlined_call_operand.vmem [shape: f32[1,512], index: 13, kind: input, shape index: {}]
  %s14 = inlined_call_operand.hbm [shape: bf16[512,512], index: 14, kind: input, shape index: {}]
  %s15 = inlined_call_operand.vmem [shape: f32[1,512], index: 15, kind: input, shape index: {}]
  %s16 = inlined_call_operand.hbm [shape: bf16[512,128], index: 16, kind: input, shape index: {}]
  %s17 = inlined_call_operand.vmem [shape: f32[1,128], index: 17, kind: input, shape index: {}]
  %s18 = inlined_call_operand.vmem [shape: f32[3,8,128], index: 18, kind: input, shape index: {}]
  %s19 = inlined_call_operand.hbm [shape: f32[2,3,8,128], index: 19, kind: output, shape index: {}]
  %s20 = sld [smem:[#allocation0]]
  $region122: #{tpu_custom_call.1} parent=0
    _
  %s22 = ssub.s32 1, %s20
  %s23 = scalar_select 0, %s22, %s20
  $region1: #{tpu_custom_call.1} parent=0
    #allocation2 [shape = 'u8[512]{0}', space=vmem, size = 0x400, scoped, tag = 'input window, operand 4, single buffered']
    #allocation3 [shape = 's32[1]{0}', space=sflag, size = 0x4, scoped, tag = 'scoped memory for tpu_custom_call.1']
    #allocation4 [shape = 's32[1]{0}', space=sflag, size = 0x4, scoped, tag = 'scoped memory for tpu_custom_call.1']
    #allocation5 [shape = 'u8[512]{0}', space=vmem, size = 0x400, scoped, tag = 'input window, operand 5, single buffered']
    #allocation6 [shape = 's32[1]{0}', space=sflag, size = 0x4, scoped, tag = 'scoped memory for tpu_custom_call.1']
    #allocation7 [shape = 'u8[131072]{0}', space=vmem, size = 0x20000, scoped, tag = 'input window, operand 6, single buffered']
    #allocation8 [shape = 'u8[524288]{0}', space=vmem, size = 0x80000, scoped, tag = 'input window, operand 8, single buffered']
    #allocation9 [shape = 's32[1]{0}', space=sflag, size = 0x4, scoped, tag = 'scoped memory for tpu_custom_call.1']
    #allocation10 [shape = 'u8[131072]{0}', space=vmem, size = 0x20000, scoped, tag = 'input window, operand 10, single buffered']
    #allocation11 [shape = 'u8[512]{0}', space=vmem, size = 0x400, scoped, tag = 'input window, operand 11, single buffered']
    #allocation12 [shape = 's32[1]{0}', space=sflag, size = 0x4, scoped, tag = 'scoped memory for tpu_custom_call.1']
    #allocation13 [shape = 'u8[131072]{0}', space=vmem, size = 0x20000, scoped, tag = 'input window, operand 12, single buffered']
    #allocation14 [shape = 'u8[524288]{0}', space=vmem, size = 0x80000, scoped, tag = 'input window, operand 14, single buffered']
    #allocation15 [shape = 's32[1]{0}', space=sflag, size = 0x4, scoped, tag = 'scoped memory for tpu_custom_call.1']
    #allocation16 [shape = 'u8[131072]{0}', space=vmem, size = 0x20000, scoped, tag = 'input window, operand 16, single buffered']
    #allocation17 [shape = 'u8[24576]{0}', space=vmem, size = 0x6000, scoped, tag = 'output window, operand 0, single buffered']
    %24 = vsyncpa [#allocation3], 0
    %25 = vsyncpa [#allocation6], 0
    %26 = vsyncpa [#allocation9], 0
    %27 = vsyncpa [#allocation12], 0
    %28 = vsyncpa [#allocation15], 0
    %29 = vsyncpa [#allocation4], 0
    // Predicated region
    $region2: #{tpu_custom_call.1} parent=1 // pred_check
      _
    $region3: #{tpu_custom_call.1} parent=1 // pred_check_branch
      %31 = sbr.rel (0) target = $region5
    $region4: #{tpu_custom_call.1} parent=1 // pred_region
      _
    $region5: #{tpu_custom_call.1} parent=1 // pred_fallthru
      _
    // Predicated region
    $region6: #{tpu_custom_call.1} parent=1 // pred_check
      _
    $region7: #{tpu_custom_call.1} parent=1 // pred_check_branch
      %33 = sbr.rel (0) target = $region9
    $region8: #{tpu_custom_call.1} parent=1 // pred_region
      _
    $region9: #{tpu_custom_call.1} parent=1 // pred_fallthru
      _
    // Predicated region
    $region10: #{tpu_custom_call.1} parent=1 // pred_check
      _
    $region11: #{tpu_custom_call.1} parent=1 // pred_check_branch
      %35 = sbr.rel (0) target = $region13
    $region12: #{tpu_custom_call.1} parent=1 // pred_region
      _
    $region13: #{tpu_custom_call.1} parent=1 // pred_fallthru
      _
    // Predicated region
    $region14: #{tpu_custom_call.1} parent=1 // pred_check
      _
    $region15: #{tpu_custom_call.1} parent=1 // pred_check_branch
      %37 = sbr.rel (0) target = $region17
    $region16: #{tpu_custom_call.1} parent=1 // pred_region
      _
    $region17: #{tpu_custom_call.1} parent=1 // pred_fallthru
      _
    // Predicated region
    $region18: #{tpu_custom_call.1} parent=1 // pred_check
      _
    $region19: #{tpu_custom_call.1} parent=1 // pred_check_branch
      %39 = sbr.rel (0) target = $region21
    $region20: #{tpu_custom_call.1} parent=1 // pred_region
      %41 = vsyncadd [#allocation3], 0
      %s43 = sshll.u32 %s4, 4
      %s44 = int_to_ptr.hbm [resolvable:$true] %s43
      %s45 = sshll.u32 [#allocation2], 4
      %s46 = int_to_ptr.vmem [resolvable:$true] %s45
      %48 = dma.hbm_to_vmem [thread:$0]  %s44, 16, %s46, [#allocation3]
    $region21: #{tpu_custom_call.1} parent=1 // pred_fallthru
      _
    // Predicated region
    $region22: #{tpu_custom_call.1} parent=1 // pred_check
      _
    $region23: #{tpu_custom_call.1} parent=1 // pred_check_branch
      %50 = sbr.rel (0) target = $region25
    $region24: #{tpu_custom_call.1} parent=1 // pred_region
      %52 = vsyncadd [#allocation6], 0
      %s54 = sshll.u32 %s5, 4
      %s55 = int_to_ptr.hbm [resolvable:$true] %s54
      %s56 = sshll.u32 [#allocation5], 4
      %s57 = int_to_ptr.vmem [resolvable:$true] %s56
      %59 = dma.hbm_to_vmem [thread:$0]  %s55, 16, %s57, [#allocation6]
    $region25: #{tpu_custom_call.1} parent=1 // pred_fallthru
      _
    // Predicated region
    $region26: #{tpu_custom_call.1} parent=1 // pred_check
      _
    $region27: #{tpu_custom_call.1} parent=1 // pred_check_branch
      %61 = sbr.rel (0) target = $region29
    $region28: #{tpu_custom_call.1} parent=1 // pred_region
      %63 = vsyncadd [#allocation6], 0
      %s64 = sshll.u32 %s6, 4
      %s65 = int_to_ptr.hbm [resolvable:$true] %s64
      %s66 = sshll.u32 [#allocation7], 4
      %s67 = int_to_ptr.vmem [resolvable:$true] %s66
      %72 = dma.hbm_to_vmem [thread:$0]  %s65, 4096, %s67, [#allocation6], 256, 256, 16
    $region29: #{tpu_custom_call.1} parent=1 // pred_fallthru
      _
    // Predicated region
    $region30: #{tpu_custom_call.1} parent=1 // pred_check
      _
    $region31: #{tpu_custom_call.1} parent=1 // pred_check_branch
      %74 = sbr.rel (0) target = $region33
    $region32: #{tpu_custom_call.1} parent=1 // pred_region
      _
    $region33: #{tpu_custom_call.1} parent=1 // pred_fallthru
      _
    // Predicated region
    $region34: #{tpu_custom_call.1} parent=1 // pred_check
      _
    $region35: #{tpu_custom_call.1} parent=1 // pred_check_branch
      %76 = sbr.rel (0) target = $region37
    $region36: #{tpu_custom_call.1} parent=1 // pred_region
      %78 = vsyncadd [#allocation9], 0
      %s79 = sshll.u32 %s8, 4
      %s80 = int_to_ptr.hbm [resolvable:$true] %s79
      %s81 = sshll.u32 [#allocation8], 4
      %s82 = int_to_ptr.vmem [resolvable:$true] %s81
      %87 = dma.hbm_to_vmem [thread:$0]  %s80, 16384, %s82, [#allocation9], 256, 256, 16
    $region37: #{tpu_custom_call.1} parent=1 // pred_fallthru
      _
    // Predicated region
    $region38: #{tpu_custom_call.1} parent=1 // pred_check
      _
    $region39: #{tpu_custom_call.1} parent=1 // pred_check_branch
      %89 = sbr.rel (0) target = $region41
    $region40: #{tpu_custom_call.1} parent=1 // pred_region
      _
    $region41: #{tpu_custom_call.1} parent=1 // pred_fallthru
      _
    // Predicated region
    $region42: #{tpu_custom_call.1} parent=1 // pred_check
      _
    $region43: #{tpu_custom_call.1} parent=1 // pred_check_branch
      %91 = sbr.rel (0) target = $region45
    $region44: #{tpu_custom_call.1} parent=1 // pred_region
      %93 = vsyncadd [#allocation9], 0
      %s94 = sshll.u32 %s10, 4
      %s95 = int_to_ptr.hbm [resolvable:$true] %s94
      %s96 = sshll.u32 [#allocation10], 4
      %s97 = int_to_ptr.vmem [resolvable:$true] %s96
      %102 = dma.hbm_to_vmem [thread:$0]  %s95, 4096, %s97, [#allocation9], 64, 64, 4
    $region45: #{tpu_custom_call.1} parent=1 // pred_fallthru
      _
    // Predicated region
    $region46: #{tpu_custom_call.1} parent=1 // pred_check
      _
    $region47: #{tpu_custom_call.1} parent=1 // pred_check_branch
      %104 = sbr.rel (0) target = $region49
    $region48: #{tpu_custom_call.1} parent=1 // pred_region
      %106 = vsyncadd [#allocation12], 0
      %s108 = sshll.u32 %s11, 4
      %s109 = int_to_ptr.hbm [resolvable:$true] %s108
      %s110 = sshll.u32 [#allocation11], 4
      %s111 = int_to_ptr.vmem [resolvable:$true] %s110
      %113 = dma.hbm_to_vmem [thread:$0]  %s109, 16, %s111, [#allocation12]
    $region49: #{tpu_custom_call.1} parent=1 // pred_fallthru
      _
    // Predicated region
    $region50: #{tpu_custom_call.1} parent=1 // pred_check
      _
    $region51: #{tpu_custom_call.1} parent=1 // pred_check_branch
      %115 = sbr.rel (0) target = $region53
    $region52: #{tpu_custom_call.1} parent=1 // pred_region
      %117 = vsyncadd [#allocation12], 0
      %s118 = sshll.u32 %s12, 4
      %s119 = int_to_ptr.hbm [resolvable:$true] %s118
      %s120 = sshll.u32 [#allocation13], 4
      %s121 = int_to_ptr.vmem [resolvable:$true] %s120
      %126 = dma.hbm_to_vmem [thread:$0]  %s119, 4096, %s121, [#allocation12], 256, 256, 16
    $region53: #{tpu_custom_call.1} parent=1 // pred_fallthru
      _
    // Predicated region
    $region54: #{tpu_custom_call.1} parent=1 // pred_check
      _
    $region55: #{tpu_custom_call.1} parent=1 // pred_check_branch
      %128 = sbr.rel (0) target = $region57
    $region56: #{tpu_custom_call.1} parent=1 // pred_region
      _
    $region57: #{tpu_custom_call.1} parent=1 // pred_fallthru
      _
    // Predicated region
    $region58: #{tpu_custom_call.1} parent=1 // pred_check
      _
    $region59: #{tpu_custom_call.1} parent=1 // pred_check_branch
      %130 = sbr.rel (0) target = $region61
    $region60: #{tpu_custom_call.1} parent=1 // pred_region
      %132 = vsyncadd [#allocation15], 0
      %s133 = sshll.u32 %s14, 4
      %s134 = int_to_ptr.hbm [resolvable:$true] %s133
      %s135 = sshll.u32 [#allocation14], 4
      %s136 = int_to_ptr.vmem [resolvable:$true] %s135
      %141 = dma.hbm_to_vmem [thread:$0]  %s134, 16384, %s136, [#allocation15], 256, 256, 16
    $region61: #{tpu_custom_call.1} parent=1 // pred_fallthru
      _
    // Predicated region
    $region62: #{tpu_custom_call.1} parent=1 // pred_check
      _
    $region63: #{tpu_custom_call.1} parent=1 // pred_check_branch
      %143 = sbr.rel (0) target = $region65
    $region64: #{tpu_custom_call.1} parent=1 // pred_region
      _
    $region65: #{tpu_custom_call.1} parent=1 // pred_fallthru
      _
    // Predicated region
    $region66: #{tpu_custom_call.1} parent=1 // pred_check
      _
    $region67: #{tpu_custom_call.1} parent=1 // pred_check_branch
      %145 = sbr.rel (0) target = $region69
    $region68: #{tpu_custom_call.1} parent=1 // pred_region
      %147 = vsyncadd [#allocation15], 0
      %s148 = sshll.u32 %s16, 4
      %s149 = int_to_ptr.hbm [resolvable:$true] %s148
      %s150 = sshll.u32 [#allocation16], 4
      %s151 = int_to_ptr.vmem [resolvable:$true] %s150
      %156 = dma.hbm_to_vmem [thread:$0]  %s149, 4096, %s151, [#allocation15], 64, 64, 4
    $region69: #{tpu_custom_call.1} parent=1 // pred_fallthru
      _
    // Predicated region
    $region70: #{tpu_custom_call.1} parent=1 // pred_check
      _
    $region71: #{tpu_custom_call.1} parent=1 // pred_check_branch
      %158 = sbr.rel (0) target = $region73
    $region72: #{tpu_custom_call.1} parent=1 // pred_region
      _
    $region73: #{tpu_custom_call.1} parent=1 // pred_fallthru
      _
    // Predicated region
    $region74: #{tpu_custom_call.1} parent=1 // pred_check
      _
    $region75: #{tpu_custom_call.1} parent=1 // pred_check_branch
      %160 = sbr.rel (0) target = $region77
    $region76: #{tpu_custom_call.1} parent=1 // pred_region
      _
    $region77: #{tpu_custom_call.1} parent=1 // pred_fallthru
      _
    // Predicated region
    $region78: #{tpu_custom_call.1} parent=1 // pred_check
      _
    $region79: #{tpu_custom_call.1} parent=1 // pred_check_branch
      %162 = sbr.rel (0) target = $region81
    $region80: #{tpu_custom_call.1} parent=1 // pred_region
      %164 = dma.done [#allocation3], 16
    $region81: #{tpu_custom_call.1} parent=1 // pred_fallthru
      _
    // Predicated region
    $region82: #{tpu_custom_call.1} parent=1 // pred_check
      _
    $region83: #{tpu_custom_call.1} parent=1 // pred_check_branch
      %166 = sbr.rel (0) target = $region85
    $region84: #{tpu_custom_call.1} parent=1 // pred_region
      %168 = dma.done [#allocation6], 16
    $region85: #{tpu_custom_call.1} parent=1 // pred_fallthru
      _
    // Predicated region
    $region86: #{tpu_custom_call.1} parent=1 // pred_check
      _
    $region87: #{tpu_custom_call.1} parent=1 // pred_check_branch
      %170 = sbr.rel (0) target = $region89
    $region88: #{tpu_custom_call.1} parent=1 // pred_region
      %172 = dma.done [#allocation6], 4096
    $region89: #{tpu_custom_call.1} parent=1 // pred_fallthru
      _
    // Predicated region
    $region90: #{tpu_custom_call.1} parent=1 // pred_check
      _
    $region91: #{tpu_custom_call.1} parent=1 // pred_check_branch
      %174 = sbr.rel (0) target = $region93
    $region92: #{tpu_custom_call.1} parent=1 // pred_region
      %176 = dma.done [#allocation9], 16384
    $region93: #{tpu_custom_call.1} parent=1 // pred_fallthru
      _
    // Predicated region
    $region94: #{tpu_custom_call.1} parent=1 // pred_check
      _
    $region95: #{tpu_custom_call.1} parent=1 // pred_check_branch
      %178 = sbr.rel (0) target = $region97
    $region96: #{tpu_custom_call.1} parent=1 // pred_region
      %180 = dma.done [#allocation9], 4096
    $region97: #{tpu_custom_call.1} parent=1 // pred_fallthru
      _
    // Predicated region
    $region98: #{tpu_custom_call.1} parent=1 // pred_check
      _
    $region99: #{tpu_custom_call.1} parent=1 // pred_check_branch
      %182 = sbr.rel (0) target = $region101
    $region100: #{tpu_custom_call.1} parent=1 // pred_region
      %184 = dma.done [#allocation12], 16
    $region101: #{tpu_custom_call.1} parent=1 // pred_fallthru
      _
    // Predicated region
    $region102: #{tpu_custom_call.1} parent=1 // pred_check
      _
    $region103: #{tpu_custom_call.1} parent=1 // pred_check_branch
      %186 = sbr.rel (0) target = $region105
    $region104: #{tpu_custom_call.1} parent=1 // pred_region
      %188 = dma.done [#allocation12], 4096
    $region105: #{tpu_custom_call.1} parent=1 // pred_fallthru
      _
    // Predicated region
    $region106: #{tpu_custom_call.1} parent=1 // pred_check
      _
    $region107: #{tpu_custom_call.1} parent=1 // pred_check_branch
      %190 = sbr.rel (0) target = $region109
    $region108: #{tpu_custom_call.1} parent=1 // pred_region
      %192 = dma.done [#allocation15], 16384
    $region109: #{tpu_custom_call.1} parent=1 // pred_fallthru
      _
    // Predicated region
    $region110: #{tpu_custom_call.1} parent=1 // pred_check
      _
    $region111: #{tpu_custom_call.1} parent=1 // pred_check_branch
      %194 = sbr.rel (0) target = $region113
    $region112: #{tpu_custom_call.1} parent=1 // pred_region
      %196 = dma.done [#allocation15], 4096
    $region113: #{tpu_custom_call.1} parent=1 // pred_fallthru
      _
    %v197 = vld [vmem:[%s0] sm:$0xff]
    %v198 = vld [vmem:[%s0 + $0x8] sm:$0xff]
    %v199 = vld [vmem:[%s0 + $0x10] sm:$0xff]
    %v200 = vld [vmem:[%s0 + $0x18] sm:$0xff]
    %v201 = vld [vmem:[%s1] sm:$0xff]
    %v202 = vld [vmem:[%s1 + $0x8] sm:$0xff]
    %v203 = vld [vmem:[#allocation2] sm:$0x1]
    %v204 = vld [vmem:[#allocation5] sm:$0x1]
    %v205 = vld [vmem:[%s2] sm:$0xf]
    %v206 = vld [vmem:[%s2 + $0x4] sm:$0xf]
    %v207 = vld [vmem:[%s2 + $0x8] sm:$0xf]
    %v208 = vld [vmem:[%s2 + $0xc] sm:$0xf]
    %v209 = vunpack.c.l.bf16 %v205
    %v210 = vunpack.c.l.bf16 %v206
    %v211 = vunpack.c.l.bf16 %v207
    %v212 = vunpack.c.l.bf16 %v208
    %v214 = vperm.slane %v203, 0
    %v216 = vsub.f32 %v209, %v214
    %v217 = vsub.f32 %v210, %v214
    %v218 = vsub.f32 %v211, %v214
    %v219 = vsub.f32 %v212, %v214
    %221 = vset.pattern.permute.xlu0 0
    %222 = vperm.xlu0 %221, %v197
    %v223 = vpop.permute.xlu0 %222
    %226 = vset.pattern.permute.xlu0 0
    %227 = vperm.xlu0 %226, %v198
    %v228 = vpop.permute.xlu0 %227
    %231 = vset.pattern.permute.xlu0 0
    %232 = vperm.xlu0 %231, %v199
    %v233 = vpop.permute.xlu0 %232
    %236 = vset.pattern.permute.xlu0 0
    %237 = vperm.xlu0 %236, %v200
    %v238 = vpop.permute.xlu0 %237
    %v240 = vmul.f32 %v223, %v216
    %v241 = vmul.f32 %v228, %v217
    %v242 = vmul.f32 %v233, %v218
    %v243 = vmul.f32 %v238, %v219
    %v244 = vadd.f32 %v214, %v240
    %v245 = vadd.f32 %v214, %v241
    %v246 = vadd.f32 %v214, %v242
    %v247 = vadd.f32 %v214, %v243
    %v248 = vld [vmem:[%s3] sm:$0xf]
    %v249 = vld [vmem:[%s3 + $0x4] sm:$0xf]
    %v250 = vunpack.c.l.bf16 %v248
    %v251 = vunpack.c.l.bf16 %v249
    %v253 = vperm.slane %v204, 0
    %v255 = vsub.f32 %v250, %v253
    %v256 = vsub.f32 %v251, %v253
    %258 = vset.pattern.permute.xlu0 0
    %259 = vperm.xlu0 %258, %v201
    %v260 = vpop.permute.xlu0 %259
    %263 = vset.pattern.permute.xlu0 0
    %264 = vperm.xlu0 %263, %v202
    %v265 = vpop.permute.xlu0 %264
    %v267 = vmul.f32 %v260, %v255
    %v268 = vmul.f32 %v265, %v256
    %v269 = vadd.f32 %v253, %v267
    %v270 = vadd.f32 %v253, %v268
    %v271 = vpack.c.bf16 %v245, %v244
    %v272 = vpack.c.bf16 %v247, %v246
    %v273 = vpack.c.bf16 %v270, %v269
    %v274 = vld [vmem:[#allocation7] sm:$0xff]
    %v275 = vld [vmem:[#allocation7 + $0x8] sm:$0xff]
    %v276 = vld [vmem:[#allocation7 + $0x10] sm:$0xff]
    %v277 = vld [vmem:[#allocation7 + $0x18] sm:$0xff]
    %v278 = vld [vmem:[#allocation7 + $0x20] sm:$0xff]
    %v279 = vld [vmem:[#allocation7 + $0x28] sm:$0xff]
    %v280 = vld [vmem:[#allocation7 + $0x30] sm:$0xff]
    %v281 = vld [vmem:[#allocation7 + $0x38] sm:$0xff]
    %v282 = vld [vmem:[#allocation7 + $0x40] sm:$0xff]
    %v283 = vld [vmem:[#allocation7 + $0x48] sm:$0xff]
    %v284 = vld [vmem:[#allocation7 + $0x50] sm:$0xff]
    %v285 = vld [vmem:[#allocation7 + $0x58] sm:$0xff]
    %v286 = vld [vmem:[#allocation7 + $0x60] sm:$0xff]
    %v287 = vld [vmem:[#allocation7 + $0x68] sm:$0xff]
    %v288 = vld [vmem:[#allocation7 + $0x70] sm:$0xff]
    %v289 = vld [vmem:[#allocation7 + $0x78] sm:$0xff]
    %v290 = vld [vmem:[#allocation7 + $0x80] sm:$0xff]
    %v291 = vld [vmem:[#allocation7 + $0x88] sm:$0xff]
    %v292 = vld [vmem:[#allocation7 + $0x90] sm:$0xff]
    %v293 = vld [vmem:[#allocation7 + $0x98] sm:$0xff]
    %v294 = vld [vmem:[#allocation7 + $0xa0] sm:$0xff]
    %v295 = vld [vmem:[#allocation7 + $0xa8] sm:$0xff]
    %v296 = vld [vmem:[#allocation7 + $0xb0] sm:$0xff]
    %v297 = vld [vmem:[#allocation7 + $0xb8] sm:$0xff]
    %v298 = vld [vmem:[#allocation7 + $0xc0] sm:$0xff]
    %v299 = vld [vmem:[#allocation7 + $0xc8] sm:$0xff]
    %v300 = vld [vmem:[#allocation7 + $0xd0] sm:$0xff]
    %v301 = vld [vmem:[#allocation7 + $0xd8] sm:$0xff]
    %v302 = vld [vmem:[#allocation7 + $0xe0] sm:$0xff]
    %v303 = vld [vmem:[#allocation7 + $0xe8] sm:$0xff]
    %v304 = vld [vmem:[#allocation7 + $0xf0] sm:$0xff]
    %v305 = vld [vmem:[#allocation7 + $0xf8] sm:$0xff]
    %v306 = vld [vmem:[%s7] sm:$0xf]
    %v308 = vperm.slane %v306, 0
    %v309 = vperm.slane %v306, 1
    %v310 = vperm.slane %v306, 2
    %v311 = vperm.slane %v306, 3
    %v348 = vunpack.c.l.b16 %v274
    %v349 = vunpack.c.h.b16 %v274
    %v350 = vunpack.c.l.b16 %v275
    %v351 = vunpack.c.h.b16 %v275
    %v352 = vunpack.c.l.b16 %v276
    %v353 = vunpack.c.h.b16 %v276
    %v354 = vunpack.c.l.b16 %v277
    %v355 = vunpack.c.h.b16 %v277
    %v356 = vunpack.c.l.b16 %v278
    %v357 = vunpack.c.h.b16 %v278
    %v358 = vunpack.c.l.b16 %v279
    %v359 = vunpack.c.h.b16 %v279
    %v360 = vunpack.c.l.b16 %v280
    %v361 = vunpack.c.h.b16 %v280
    %v362 = vunpack.c.l.b16 %v281
    %v363 = vunpack.c.h.b16 %v281
    %v364 = vunpack.c.l.b16 %v282
    %v365 = vunpack.c.h.b16 %v282
    %v366 = vunpack.c.l.b16 %v283
    %v367 = vunpack.c.h.b16 %v283
    %v368 = vunpack.c.l.b16 %v284
    %v369 = vunpack.c.h.b16 %v284
    %v370 = vunpack.c.l.b16 %v285
    %v371 = vunpack.c.h.b16 %v285
    %v372 = vunpack.c.l.b16 %v286
    %v373 = vunpack.c.h.b16 %v286
    %v374 = vunpack.c.l.b16 %v287
    %v375 = vunpack.c.h.b16 %v287
    %v376 = vunpack.c.l.b16 %v288
    %v377 = vunpack.c.h.b16 %v288
    %v378 = vunpack.c.l.b16 %v289
    %v379 = vunpack.c.h.b16 %v289
    %v380 = vunpack.c.l.b16 %v290
    %v381 = vunpack.c.h.b16 %v290
    %v382 = vunpack.c.l.b16 %v291
    %v383 = vunpack.c.h.b16 %v291
    %v384 = vunpack.c.l.b16 %v292
    %v385 = vunpack.c.h.b16 %v292
    %v386 = vunpack.c.l.b16 %v293
    %v387 = vunpack.c.h.b16 %v293
    %v388 = vunpack.c.l.b16 %v294
    %v389 = vunpack.c.h.b16 %v294
    %v390 = vunpack.c.l.b16 %v295
    %v391 = vunpack.c.h.b16 %v295
    %v392 = vunpack.c.l.b16 %v296
    %v393 = vunpack.c.h.b16 %v296
    %v394 = vunpack.c.l.b16 %v297
    %v395 = vunpack.c.h.b16 %v297
    %v396 = vunpack.c.l.b16 %v298
    %v397 = vunpack.c.h.b16 %v298
    %v398 = vunpack.c.l.b16 %v299
    %v399 = vunpack.c.h.b16 %v299
    %v400 = vunpack.c.l.b16 %v300
    %v401 = vunpack.c.h.b16 %v300
    %v402 = vunpack.c.l.b16 %v301
    %v403 = vunpack.c.h.b16 %v301
    %v404 = vunpack.c.l.b16 %v302
    %v405 = vunpack.c.h.b16 %v302
    %v406 = vunpack.c.l.b16 %v303
    %v407 = vunpack.c.h.b16 %v303
    %v408 = vunpack.c.l.b16 %v304
    %v409 = vunpack.c.h.b16 %v304
    %v410 = vunpack.c.l.b16 %v305
    %v411 = vunpack.c.h.b16 %v305
    %v412 = vpack.c.b16 %v352, %v348
    %v413 = vpack.c.b16 %v353, %v349
    %v414 = vpack.c.b16 %v354, %v350
    %v415 = vpack.c.b16 %v355, %v351
    %v416 = vpack.c.b16 %v360, %v356
    %v417 = vpack.c.b16 %v361, %v357
    %v418 = vpack.c.b16 %v362, %v358
    %v419 = vpack.c.b16 %v363, %v359
    %v420 = vpack.c.b16 %v368, %v364
    %v421 = vpack.c.b16 %v369, %v365
    %v422 = vpack.c.b16 %v370, %v366
    %v423 = vpack.c.b16 %v371, %v367
    %v424 = vpack.c.b16 %v376, %v372
    %v425 = vpack.c.b16 %v377, %v373
    %v426 = vpack.c.b16 %v378, %v374
    %v427 = vpack.c.b16 %v379, %v375
    %v428 = vpack.c.b16 %v384, %v380
    %v429 = vpack.c.b16 %v385, %v381
    %v430 = vpack.c.b16 %v386, %v382
    %v431 = vpack.c.b16 %v387, %v383
    %v432 = vpack.c.b16 %v392, %v388
    %v433 = vpack.c.b16 %v393, %v389
    %v434 = vpack.c.b16 %v394, %v390
    %v435 = vpack.c.b16 %v395, %v391
    %v436 = vpack.c.b16 %v400, %v396
    %v437 = vpack.c.b16 %v401, %v397
    %v438 = vpack.c.b16 %v402, %v398
    %v439 = vpack.c.b16 %v403, %v399
    %v440 = vpack.c.b16 %v408, %v404
    %v441 = vpack.c.b16 %v409, %v405
    %v442 = vpack.c.b16 %v410, %v406
    %v443 = vpack.c.b16 %v411, %v407
    %476 = vmatpush.bf16.msra.mxu0 %v440
    %477 = vmatpush.bf16.msra.mxu0 %v436
    %478 = vmatpush.bf16.msra.mxu0 %v432
    %479 = vmatpush.bf16.msra.mxu0 %v428
    %480 = vmatpush.bf16.msra.mxu0 %v424
    %481 = vmatpush.bf16.msra.mxu0 %v420
    %482 = vmatpush.bf16.msra.mxu0 %v416
    %483 = vmatpush.bf16.msra.mxu0 %v412
    %484 = vmatmul.bf16.gmra.mxu0 %v271
    %v485 = vpop.f32.mrf.mxu0
    %v486 = vadd.f32 %v308, %v485
    %v487 = vpop.f32.mrf.mxu0
    %v488 = vadd.f32 %v308, %v487
    %489 = vmatmul.bf16.gmra.mxu0 %v272
    %v490 = vpop.f32.mrf.mxu0
    %v491 = vadd.f32 %v308, %v490
    %v492 = vpop.f32.mrf.mxu0
    %v493 = vadd.f32 %v308, %v492
    %494 = vdwg.mxu0
    %495 = vmatpush.bf16.msra.mxu0 %v441
    %496 = vmatpush.bf16.msra.mxu0 %v437
    %497 = vmatpush.bf16.msra.mxu0 %v433
    %498 = vmatpush.bf16.msra.mxu0 %v429
    %499 = vmatpush.bf16.msra.mxu0 %v425
    %500 = vmatpush.bf16.msra.mxu0 %v421
    %501 = vmatpush.bf16.msra.mxu0 %v417
    %502 = vmatpush.bf16.msra.mxu0 %v413
    %503 = vmatmul.bf16.gmra.mxu0 %v271
    %v504 = vpop.f32.mrf.mxu0
    %v505 = vadd.f32 %v309, %v504
    %v506 = vpop.f32.mrf.mxu0
    %v507 = vadd.f32 %v309, %v506
    %508 = vmatmul.bf16.gmra.mxu0 %v272
    %v509 = vpop.f32.mrf.mxu0
    %v510 = vadd.f32 %v309, %v509
    %v511 = vpop.f32.mrf.mxu0
    %v512 = vadd.f32 %v309, %v511
    %513 = vdwg.mxu0
    %514 = vmatpush.bf16.msra.mxu0 %v442
    %515 = vmatpush.bf16.msra.mxu0 %v438
    %516 = vmatpush.bf16.msra.mxu0 %v434
    %517 = vmatpush.bf16.msra.mxu0 %v430
    %518 = vmatpush.bf16.msra.mxu0 %v426
    %519 = vmatpush.bf16.msra.mxu0 %v422
    %520 = vmatpush.bf16.msra.mxu0 %v418
    %521 = vmatpush.bf16.msra.mxu0 %v414
    %522 = vmatmul.bf16.gmra.mxu0 %v271
    %v523 = vpop.f32.mrf.mxu0
    %v524 = vadd.f32 %v310, %v523
    %v525 = vpop.f32.mrf.mxu0
    %v526 = vadd.f32 %v310, %v525
    %527 = vmatmul.bf16.gmra.mxu0 %v272
    %v528 = vpop.f32.mrf.mxu0
    %v529 = vadd.f32 %v310, %v528
    %v530 = vpop.f32.mrf.mxu0
    %v531 = vadd.f32 %v310, %v530
    %532 = vdwg.mxu0
    %533 = vmatpush.bf16.msra.mxu0 %v443
    %534 = vmatpush.bf16.msra.mxu0 %v439
    %535 = vmatpush.bf16.msra.mxu0 %v435
    %536 = vmatpush.bf16.msra.mxu0 %v431
    %537 = vmatpush.bf16.msra.mxu0 %v427
    %538 = vmatpush.bf16.msra.mxu0 %v423
    %539 = vmatpush.bf16.msra.mxu0 %v419
    %540 = vmatpush.bf16.msra.mxu0 %v415
    %541 = vmatmul.bf16.gmra.mxu0 %v271
    %v542 = vpop.f32.mrf.mxu0
    %v543 = vadd.f32 %v311, %v542
    %v544 = vpop.f32.mrf.mxu0
    %v545 = vadd.f32 %v311, %v544
    %546 = vmatmul.bf16.gmra.mxu0 %v272
    %v547 = vpop.f32.mrf.mxu0
    %v548 = vadd.f32 %v311, %v547
    %v549 = vpop.f32.mrf.mxu0
    %v550 = vadd.f32 %v311, %v549
    %551 = vdwg.mxu0
    %v552 = vxor.u32 %v486, 2147483648
    %v553 = vxor.u32 %v505, 2147483648
    %v554 = vxor.u32 %v524, 2147483648
    %v555 = vxor.u32 %v543, 2147483648
    %v556 = vxor.u32 %v488, 2147483648
    %v557 = vxor.u32 %v507, 2147483648
    %v558 = vxor.u32 %v526, 2147483648
    %v559 = vxor.u32 %v545, 2147483648
    %v560 = vxor.u32 %v491, 2147483648
    %v561 = vxor.u32 %v510, 2147483648
    %v562 = vxor.u32 %v529, 2147483648
    %v563 = vxor.u32 %v548, 2147483648
    %v564 = vxor.u32 %v493, 2147483648
    %v565 = vxor.u32 %v512, 2147483648
    %v566 = vxor.u32 %v531, 2147483648
    %v567 = vxor.u32 %v550, 2147483648
    %v568 = vmul.f32 %v552, 1.442695
    %v569 = vpow.pop %v568
    %v570 = vmul.f32 %v553, 1.442695
    %v571 = vpow.pop %v570
    %v572 = vmul.f32 %v554, 1.442695
    %v573 = vpow.pop %v572
    %v574 = vmul.f32 %v555, 1.442695
    %v575 = vpow.pop %v574
    %v576 = vmul.f32 %v556, 1.442695
    %v577 = vpow.pop %v576
    %v578 = vmul.f32 %v557, 1.442695
    %v579 = vpow.pop %v578
    %v580 = vmul.f32 %v558, 1.442695
    %v581 = vpow.pop %v580
    %v582 = vmul.f32 %v559, 1.442695
    %v583 = vpow.pop %v582
    %v584 = vmul.f32 %v560, 1.442695
    %v585 = vpow.pop %v584
    %v586 = vmul.f32 %v561, 1.442695
    %v587 = vpow.pop %v586
    %v588 = vmul.f32 %v562, 1.442695
    %v589 = vpow.pop %v588
    %v590 = vmul.f32 %v563, 1.442695
    %v591 = vpow.pop %v590
    %v592 = vmul.f32 %v564, 1.442695
    %v593 = vpow.pop %v592
    %v594 = vmul.f32 %v565, 1.442695
    %v595 = vpow.pop %v594
    %v596 = vmul.f32 %v566, 1.442695
    %v597 = vpow.pop %v596
    %v598 = vmul.f32 %v567, 1.442695
    %v599 = vpow.pop %v598
    %v600 = vadd.f32 %v569, 1.0
    %v601 = vadd.f32 %v571, 1.0
    %v602 = vadd.f32 %v573, 1.0
    %v603 = vadd.f32 %v575, 1.0
    %v604 = vadd.f32 %v577, 1.0
    %v605 = vadd.f32 %v579, 1.0
    %v606 = vadd.f32 %v581, 1.0
    %v607 = vadd.f32 %v583, 1.0
    %v608 = vadd.f32 %v585, 1.0
    %v609 = vadd.f32 %v587, 1.0
    %v610 = vadd.f32 %v589, 1.0
    %v611 = vadd.f32 %v591, 1.0
    %v612 = vadd.f32 %v593, 1.0
    %v613 = vadd.f32 %v595, 1.0
    %v614 = vadd.f32 %v597, 1.0
    %v615 = vadd.f32 %v599, 1.0
    %v616 = vrcp.pop %v600
    %v617 = vmul.f32 %v600, %v616
    %v618 = vsub.f32 1.0, %v617
    %v619 = vmul.f32 %v616, %v618
    %v620 = vadd.f32 %v616, %v619
    %vm621 = vweird.f32 %v600
    %vm622 = vweird.f32 %v616
    %vm623 = vmor %vm621, %vm622
    %v624 = vsel %vm623, %v616, %v620
    %v625 = vand.u32 2147483647, %v600
    %vm626 = vcmp.eq.f32.partialorder %v625, 8.507059e+37
    %v627 = vand.u32 %v600, 2147483648
    %v628 = vor.u32 1.1754944e-38, %v627
    %v629 = vsel %vm626, %v628, %v624
    %v630 = vmul.f32 1.0, %v629
    %v631 = vrcp.pop %v601
    %v632 = vmul.f32 %v601, %v631
    %v633 = vsub.f32 1.0, %v632
    %v634 = vmul.f32 %v631, %v633
    %v635 = vadd.f32 %v631, %v634
    %vm636 = vweird.f32 %v601
    %vm637 = vweird.f32 %v631
    %vm638 = vmor %vm636, %vm637
    %v639 = vsel %vm638, %v631, %v635
    %v640 = vand.u32 2147483647, %v601
    %vm641 = vcmp.eq.f32.partialorder %v640, 8.507059e+37
    %v642 = vand.u32 %v601, 2147483648
    %v643 = vor.u32 1.1754944e-38, %v642
    %v644 = vsel %vm641, %v643, %v639
    %v645 = vmul.f32 1.0, %v644
    %v646 = vrcp.pop %v602
    %v647 = vmul.f32 %v602, %v646
    %v648 = vsub.f32 1.0, %v647
    %v649 = vmul.f32 %v646, %v648
    %v650 = vadd.f32 %v646, %v649
    %vm651 = vweird.f32 %v602
    %vm652 = vweird.f32 %v646
    %vm653 = vmor %vm651, %vm652
    %v654 = vsel %vm653, %v646, %v650
    %v655 = vand.u32 2147483647, %v602
    %vm656 = vcmp.eq.f32.partialorder %v655, 8.507059e+37
    %v657 = vand.u32 %v602, 2147483648
    %v658 = vor.u32 1.1754944e-38, %v657
    %v659 = vsel %vm656, %v658, %v654
    %v660 = vmul.f32 1.0, %v659
    %v661 = vrcp.pop %v603
    %v662 = vmul.f32 %v603, %v661
    %v663 = vsub.f32 1.0, %v662
    %v664 = vmul.f32 %v661, %v663
    %v665 = vadd.f32 %v661, %v664
    %vm666 = vweird.f32 %v603
    %vm667 = vweird.f32 %v661
    %vm668 = vmor %vm666, %vm667
    %v669 = vsel %vm668, %v661, %v665
    %v670 = vand.u32 2147483647, %v603
    %vm671 = vcmp.eq.f32.partialorder %v670, 8.507059e+37
    %v672 = vand.u32 %v603, 2147483648
    %v673 = vor.u32 1.1754944e-38, %v672
    %v674 = vsel %vm671, %v673, %v669
    %v675 = vmul.f32 1.0, %v674
    %v676 = vrcp.pop %v604
    %v677 = vmul.f32 %v604, %v676
    %v678 = vsub.f32 1.0, %v677
    %v679 = vmul.f32 %v676, %v678
    %v680 = vadd.f32 %v676, %v679
    %vm681 = vweird.f32 %v604
    %vm682 = vweird.f32 %v676
    %vm683 = vmor %vm681, %vm682
    %v684 = vsel %vm683, %v676, %v680
    %v685 = vand.u32 2147483647, %v604
    %vm686 = vcmp.eq.f32.partialorder %v685, 8.507059e+37
    %v687 = vand.u32 %v604, 2147483648
    %v688 = vor.u32 1.1754944e-38, %v687
    %v689 = vsel %vm686, %v688, %v684
    %v690 = vmul.f32 1.0, %v689
    %v691 = vrcp.pop %v605
    %v692 = vmul.f32 %v605, %v691
    %v693 = vsub.f32 1.0, %v692
    %v694 = vmul.f32 %v691, %v693
    %v695 = vadd.f32 %v691, %v694
    %vm696 = vweird.f32 %v605
    %vm697 = vweird.f32 %v691
    %vm698 = vmor %vm696, %vm697
    %v699 = vsel %vm698, %v691, %v695
    %v700 = vand.u32 2147483647, %v605
    %vm701 = vcmp.eq.f32.partialorder %v700, 8.507059e+37
    %v702 = vand.u32 %v605, 2147483648
    %v703 = vor.u32 1.1754944e-38, %v702
    %v704 = vsel %vm701, %v703, %v699
    %v705 = vmul.f32 1.0, %v704
    %v706 = vrcp.pop %v606
    %v707 = vmul.f32 %v606, %v706
    %v708 = vsub.f32 1.0, %v707
    %v709 = vmul.f32 %v706, %v708
    %v710 = vadd.f32 %v706, %v709
    %vm711 = vweird.f32 %v606
    %vm712 = vweird.f32 %v706
    %vm713 = vmor %vm711, %vm712
    %v714 = vsel %vm713, %v706, %v710
    %v715 = vand.u32 2147483647, %v606
    %vm716 = vcmp.eq.f32.partialorder %v715, 8.507059e+37
    %v717 = vand.u32 %v606, 2147483648
    %v718 = vor.u32 1.1754944e-38, %v717
    %v719 = vsel %vm716, %v718, %v714
    %v720 = vmul.f32 1.0, %v719
    %v721 = vrcp.pop %v607
    %v722 = vmul.f32 %v607, %v721
    %v723 = vsub.f32 1.0, %v722
    %v724 = vmul.f32 %v721, %v723
    %v725 = vadd.f32 %v721, %v724
    %vm726 = vweird.f32 %v607
    %vm727 = vweird.f32 %v721
    %vm728 = vmor %vm726, %vm727
    %v729 = vsel %vm728, %v721, %v725
    %v730 = vand.u32 2147483647, %v607
    %vm731 = vcmp.eq.f32.partialorder %v730, 8.507059e+37
    %v732 = vand.u32 %v607, 2147483648
    %v733 = vor.u32 1.1754944e-38, %v732
    %v734 = vsel %vm731, %v733, %v729
    %v735 = vmul.f32 1.0, %v734
    %v736 = vrcp.pop %v608
    %v737 = vmul.f32 %v608, %v736
    %v738 = vsub.f32 1.0, %v737
    %v739 = vmul.f32 %v736, %v738
    %v740 = vadd.f32 %v736, %v739
    %vm741 = vweird.f32 %v608
    %vm742 = vweird.f32 %v736
    %vm743 = vmor %vm741, %vm742
    %v744 = vsel %vm743, %v736, %v740
    %v745 = vand.u32 2147483647, %v608
    %vm746 = vcmp.eq.f32.partialorder %v745, 8.507059e+37
    %v747 = vand.u32 %v608, 2147483648
    %v748 = vor.u32 1.1754944e-38, %v747
    %v749 = vsel %vm746, %v748, %v744
    %v750 = vmul.f32 1.0, %v749
    %v751 = vrcp.pop %v609
    %v752 = vmul.f32 %v609, %v751
    %v753 = vsub.f32 1.0, %v752
    %v754 = vmul.f32 %v751, %v753
    %v755 = vadd.f32 %v751, %v754
    %vm756 = vweird.f32 %v609
    %vm757 = vweird.f32 %v751
    %vm758 = vmor %vm756, %vm757
    %v759 = vsel %vm758, %v751, %v755
    %v760 = vand.u32 2147483647, %v609
    %vm761 = vcmp.eq.f32.partialorder %v760, 8.507059e+37
    %v762 = vand.u32 %v609, 2147483648
    %v763 = vor.u32 1.1754944e-38, %v762
    %v764 = vsel %vm761, %v763, %v759
    %v765 = vmul.f32 1.0, %v764
    %v766 = vrcp.pop %v610
    %v767 = vmul.f32 %v610, %v766
    %v768 = vsub.f32 1.0, %v767
    %v769 = vmul.f32 %v766, %v768
    %v770 = vadd.f32 %v766, %v769
    %vm771 = vweird.f32 %v610
    %vm772 = vweird.f32 %v766
    %vm773 = vmor %vm771, %vm772
    %v774 = vsel %vm773, %v766, %v770
    %v775 = vand.u32 2147483647, %v610
    %vm776 = vcmp.eq.f32.partialorder %v775, 8.507059e+37
    %v777 = vand.u32 %v610, 2147483648
    %v778 = vor.u32 1.1754944e-38, %v777
    %v779 = vsel %vm776, %v778, %v774
    %v780 = vmul.f32 1.0, %v779
    %v781 = vrcp.pop %v611
    %v782 = vmul.f32 %v611, %v781
    %v783 = vsub.f32 1.0, %v782
    %v784 = vmul.f32 %v781, %v783
    %v785 = vadd.f32 %v781, %v784
    %vm786 = vweird.f32 %v611
    %vm787 = vweird.f32 %v781
    %vm788 = vmor %vm786, %vm787
    %v789 = vsel %vm788, %v781, %v785
    %v790 = vand.u32 2147483647, %v611
    %vm791 = vcmp.eq.f32.partialorder %v790, 8.507059e+37
    %v792 = vand.u32 %v611, 2147483648
    %v793 = vor.u32 1.1754944e-38, %v792
    %v794 = vsel %vm791, %v793, %v789
    %v795 = vmul.f32 1.0, %v794
    %v796 = vrcp.pop %v612
    %v797 = vmul.f32 %v612, %v796
    %v798 = vsub.f32 1.0, %v797
    %v799 = vmul.f32 %v796, %v798
    %v800 = vadd.f32 %v796, %v799
    %vm801 = vweird.f32 %v612
    %vm802 = vweird.f32 %v796
    %vm803 = vmor %vm801, %vm802
    %v804 = vsel %vm803, %v796, %v800
    %v805 = vand.u32 2147483647, %v612
    %vm806 = vcmp.eq.f32.partialorder %v805, 8.507059e+37
    %v807 = vand.u32 %v612, 2147483648
    %v808 = vor.u32 1.1754944e-38, %v807
    %v809 = vsel %vm806, %v808, %v804
    %v810 = vmul.f32 1.0, %v809
    %v811 = vrcp.pop %v613
    %v812 = vmul.f32 %v613, %v811
    %v813 = vsub.f32 1.0, %v812
    %v814 = vmul.f32 %v811, %v813
    %v815 = vadd.f32 %v811, %v814
    %vm816 = vweird.f32 %v613
    %vm817 = vweird.f32 %v811
    %vm818 = vmor %vm816, %vm817
    %v819 = vsel %vm818, %v811, %v815
    %v820 = vand.u32 2147483647, %v613
    %vm821 = vcmp.eq.f32.partialorder %v820, 8.507059e+37
    %v822 = vand.u32 %v613, 2147483648
    %v823 = vor.u32 1.1754944e-38, %v822
    %v824 = vsel %vm821, %v823, %v819
    %v825 = vmul.f32 1.0, %v824
    %v826 = vrcp.pop %v614
    %v827 = vmul.f32 %v614, %v826
    %v828 = vsub.f32 1.0, %v827
    %v829 = vmul.f32 %v826, %v828
    %v830 = vadd.f32 %v826, %v829
    %vm831 = vweird.f32 %v614
    %vm832 = vweird.f32 %v826
    %vm833 = vmor %vm831, %vm832
    %v834 = vsel %vm833, %v826, %v830
    %v835 = vand.u32 2147483647, %v614
    %vm836 = vcmp.eq.f32.partialorder %v835, 8.507059e+37
    %v837 = vand.u32 %v614, 2147483648
    %v838 = vor.u32 1.1754944e-38, %v837
    %v839 = vsel %vm836, %v838, %v834
    %v840 = vmul.f32 1.0, %v839
    %v841 = vrcp.pop %v615
    %v842 = vmul.f32 %v615, %v841
    %v843 = vsub.f32 1.0, %v842
    %v844 = vmul.f32 %v841, %v843
    %v845 = vadd.f32 %v841, %v844
    %vm846 = vweird.f32 %v615
    %vm847 = vweird.f32 %v841
    %vm848 = vmor %vm846, %vm847
    %v849 = vsel %vm848, %v841, %v845
    %v850 = vand.u32 2147483647, %v615
    %vm851 = vcmp.eq.f32.partialorder %v850, 8.507059e+37
    %v852 = vand.u32 %v615, 2147483648
    %v853 = vor.u32 1.1754944e-38, %v852
    %v854 = vsel %vm851, %v853, %v849
    %v855 = vmul.f32 1.0, %v854
    %v856 = vmul.f32 %v486, %v630
    %v857 = vmul.f32 %v505, %v645
    %v858 = vmul.f32 %v524, %v660
    %v859 = vmul.f32 %v543, %v675
    %v860 = vmul.f32 %v488, %v690
    %v861 = vmul.f32 %v507, %v705
    %v862 = vmul.f32 %v526, %v720
    %v863 = vmul.f32 %v545, %v735
    %v864 = vmul.f32 %v491, %v750
    %v865 = vmul.f32 %v510, %v765
    %v866 = vmul.f32 %v529, %v780
    %v867 = vmul.f32 %v548, %v795
    %v868 = vmul.f32 %v493, %v810
    %v869 = vmul.f32 %v512, %v825
    %v870 = vmul.f32 %v531, %v840
    %v871 = vmul.f32 %v550, %v855
    %v872 = vpack.c.bf16 %v860, %v856
    %v873 = vpack.c.bf16 %v861, %v857
    %v874 = vpack.c.bf16 %v862, %v858
    %v875 = vpack.c.bf16 %v863, %v859
    %v876 = vpack.c.bf16 %v868, %v864
    %v877 = vpack.c.bf16 %v869, %v865
    %v878 = vpack.c.bf16 %v870, %v866
    %v879 = vpack.c.bf16 %v871, %v867
    %v880 = vld [vmem:[#allocation8] sm:$0xff]
    %v881 = vld [vmem:[#allocation8 + $0x8] sm:$0xff]
    %v882 = vld [vmem:[#allocation8 + $0x10] sm:$0xff]
    %v883 = vld [vmem:[#allocation8 + $0x18] sm:$0xff]
    %v884 = vld [vmem:[#allocation8 + $0x20] sm:$0xff]
    %v885 = vld [vmem:[#allocation8 + $0x28] sm:$0xff]
    %v886 = vld [vmem:[#allocation8 + $0x30] sm:$0xff]
    %v887 = vld [vmem:[#allocation8 + $0x38] sm:$0xff]
    %v888 = vld [vmem:[#allocation8 + $0x40] sm:$0xff]
    %v889 = vld [vmem:[#allocation8 + $0x48] sm:$0xff]
    %v890 = vld [vmem:[#allocation8 + $0x50] sm:$0xff]
    %v891 = vld [vmem:[#allocation8 + $0x58] sm:$0xff]
    %v892 = vld [vmem:[#allocation8 + $0x60] sm:$0xff]
    %v893 = vld [vmem:[#allocation8 + $0x68] sm:$0xff]
    %v894 = vld [vmem:[#allocation8 + $0x70] sm:$0xff]
    %v895 = vld [vmem:[#allocation8 + $0x78] sm:$0xff]
    %v896 = vld [vmem:[#allocation8 + $0x80] sm:$0xff]
    %v897 = vld [vmem:[#allocation8 + $0x88] sm:$0xff]
    %v898 = vld [vmem:[#allocation8 + $0x90] sm:$0xff]
    %v899 = vld [vmem:[#allocation8 + $0x98] sm:$0xff]
    %v900 = vld [vmem:[#allocation8 + $0xa0] sm:$0xff]
    %v901 = vld [vmem:[#allocation8 + $0xa8] sm:$0xff]
    %v902 = vld [vmem:[#allocation8 + $0xb0] sm:$0xff]
    %v903 = vld [vmem:[#allocation8 + $0xb8] sm:$0xff]
    %v904 = vld [vmem:[#allocation8 + $0xc0] sm:$0xff]
    %v905 = vld [vmem:[#allocation8 + $0xc8] sm:$0xff]
    %v906 = vld [vmem:[#allocation8 + $0xd0] sm:$0xff]
    %v907 = vld [vmem:[#allocation8 + $0xd8] sm:$0xff]
    %v908 = vld [vmem:[#allocation8 + $0xe0] sm:$0xff]
    %v909 = vld [vmem:[#allocation8 + $0xe8] sm:$0xff]
    %v910 = vld [vmem:[#allocation8 + $0xf0] sm:$0xff]
    %v911 = vld [vmem:[#allocation8 + $0xf8] sm:$0xff]
    %v912 = vld [vmem:[#allocation8 + $0x100] sm:$0xff]
    %v913 = vld [vmem:[#allocation8 + $0x108] sm:$0xff]
    %v914 = vld [vmem:[#allocation8 + $0x110] sm:$0xff]
    %v915 = vld [vmem:[#allocation8 + $0x118] sm:$0xff]
    %v916 = vld [vmem:[#allocation8 + $0x120] sm:$0xff]
    %v917 = vld [vmem:[#allocation8 + $0x128] sm:$0xff]
    %v918 = vld [vmem:[#allocation8 + $0x130] sm:$0xff]
    %v919 = vld [vmem:[#allocation8 + $0x138] sm:$0xff]
    %v920 = vld [vmem:[#allocation8 + $0x140] sm:$0xff]
    %v921 = vld [vmem:[#allocation8 + $0x148] sm:$0xff]
    %v922 = vld [vmem:[#allocation8 + $0x150] sm:$0xff]
    %v923 = vld [vmem:[#allocation8 + $0x158] sm:$0xff]
    %v924 = vld [vmem:[#allocation8 + $0x160] sm:$0xff]
    %v925 = vld [vmem:[#allocation8 + $0x168] sm:$0xff]
    %v926 = vld [vmem:[#allocation8 + $0x170] sm:$0xff]
    %v927 = vld [vmem:[#allocation8 + $0x178] sm:$0xff]
    %v928 = vld [vmem:[#allocation8 + $0x180] sm:$0xff]
    %v929 = vld [vmem:[#allocation8 + $0x188] sm:$0xff]
    %v930 = vld [vmem:[#allocation8 + $0x190] sm:$0xff]
    %v931 = vld [vmem:[#allocation8 + $0x198] sm:$0xff]
    %v932 = vld [vmem:[#allocation8 + $0x1a0] sm:$0xff]
    %v933 = vld [vmem:[#allocation8 + $0x1a8] sm:$0xff]
    %v934 = vld [vmem:[#allocation8 + $0x1b0] sm:$0xff]
    %v935 = vld [vmem:[#allocation8 + $0x1b8] sm:$0xff]
    %v936 = vld [vmem:[#allocation8 + $0x1c0] sm:$0xff]
    %v937 = vld [vmem:[#allocation8 + $0x1c8] sm:$0xff]
    %v938 = vld [vmem:[#allocation8 + $0x1d0] sm:$0xff]
    %v939 = vld [vmem:[#allocation8 + $0x1d8] sm:$0xff]
    %v940 = vld [vmem:[#allocation8 + $0x1e0] sm:$0xff]
    %v941 = vld [vmem:[#allocation8 + $0x1e8] sm:$0xff]
    %v942 = vld [vmem:[#allocation8 + $0x1f0] sm:$0xff]
    %v943 = vld [vmem:[#allocation8 + $0x1f8] sm:$0xff]
    %v944 = vld [vmem:[#allocation8 + $0x200] sm:$0xff]
    %v945 = vld [vmem:[#allocation8 + $0x208] sm:$0xff]
    %v946 = vld [vmem:[#allocation8 + $0x210] sm:$0xff]
    %v947 = vld [vmem:[#allocation8 + $0x218] sm:$0xff]
    %v948 = vld [vmem:[#allocation8 + $0x220] sm:$0xff]
    %v949 = vld [vmem:[#allocation8 + $0x228] sm:$0xff]
    %v950 = vld [vmem:[#allocation8 + $0x230] sm:$0xff]
    %v951 = vld [vmem:[#allocation8 + $0x238] sm:$0xff]
    %v952 = vld [vmem:[#allocation8 + $0x240] sm:$0xff]
    %v953 = vld [vmem:[#allocation8 + $0x248] sm:$0xff]
    %v954 = vld [vmem:[#allocation8 + $0x250] sm:$0xff]
    %v955 = vld [vmem:[#allocation8 + $0x258] sm:$0xff]
    %v956 = vld [vmem:[#allocation8 + $0x260] sm:$0xff]
    %v957 = vld [vmem:[#allocation8 + $0x268] sm:$0xff]
    %v958 = vld [vmem:[#allocation8 + $0x270] sm:$0xff]
    %v959 = vld [vmem:[#allocation8 + $0x278] sm:$0xff]
    %v960 = vld [vmem:[#allocation8 + $0x280] sm:$0xff]
    %v961 = vld [vmem:[#allocation8 + $0x288] sm:$0xff]
    %v962 = vld [vmem:[#allocation8 + $0x290] sm:$0xff]
    %v963 = vld [vmem:[#allocation8 + $0x298] sm:$0xff]
    %v964 = vld [vmem:[#allocation8 + $0x2a0] sm:$0xff]
    %v965 = vld [vmem:[#allocation8 + $0x2a8] sm:$0xff]
    %v966 = vld [vmem:[#allocation8 + $0x2b0] sm:$0xff]
    %v967 = vld [vmem:[#allocation8 + $0x2b8] sm:$0xff]
    %v968 = vld [vmem:[#allocation8 + $0x2c0] sm:$0xff]
    %v969 = vld [vmem:[#allocation8 + $0x2c8] sm:$0xff]
    %v970 = vld [vmem:[#allocation8 + $0x2d0] sm:$0xff]
    %v971 = vld [vmem:[#allocation8 + $0x2d8] sm:$0xff]
    %v972 = vld [vmem:[#allocation8 + $0x2e0] sm:$0xff]
    %v973 = vld [vmem:[#allocation8 + $0x2e8] sm:$0xff]
    %v974 = vld [vmem:[#allocation8 + $0x2f0] sm:$0xff]
    %v975 = vld [vmem:[#allocation8 + $0x2f8] sm:$0xff]
    %v976 = vld [vmem:[#allocation8 + $0x300] sm:$0xff]
    %v977 = vld [vmem:[#allocation8 + $0x308] sm:$0xff]
    %v978 = vld [vmem:[#allocation8 + $0x310] sm:$0xff]
    %v979 = vld [vmem:[#allocation8 + $0x318] sm:$0xff]
    %v980 = vld [vmem:[#allocation8 + $0x320] sm:$0xff]
    %v981 = vld [vmem:[#allocation8 + $0x328] sm:$0xff]
    %v982 = vld [vmem:[#allocation8 + $0x330] sm:$0xff]
    %v983 = vld [vmem:[#allocation8 + $0x338] sm:$0xff]
    %v984 = vld [vmem:[#allocation8 + $0x340] sm:$0xff]
    %v985 = vld [vmem:[#allocation8 + $0x348] sm:$0xff]
    %v986 = vld [vmem:[#allocation8 + $0x350] sm:$0xff]
    %v987 = vld [vmem:[#allocation8 + $0x358] sm:$0xff]
    %v988 = vld [vmem:[#allocation8 + $0x360] sm:$0xff]
    %v989 = vld [vmem:[#allocation8 + $0x368] sm:$0xff]
    %v990 = vld [vmem:[#allocation8 + $0x370] sm:$0xff]
    %v991 = vld [vmem:[#allocation8 + $0x378] sm:$0xff]
    %v992 = vld [vmem:[#allocation8 + $0x380] sm:$0xff]
    %v993 = vld [vmem:[#allocation8 + $0x388] sm:$0xff]
    %v994 = vld [vmem:[#allocation8 + $0x390] sm:$0xff]
    %v995 = vld [vmem:[#allocation8 + $0x398] sm:$0xff]
    %v996 = vld [vmem:[#allocation8 + $0x3a0] sm:$0xff]
    %v997 = vld [vmem:[#allocation8 + $0x3a8] sm:$0xff]
    %v998 = vld [vmem:[#allocation8 + $0x3b0] sm:$0xff]
    %v999 = vld [vmem:[#allocation8 + $0x3b8] sm:$0xff]
    %v1000 = vld [vmem:[#allocation8 + $0x3c0] sm:$0xff]
    %v1001 = vld [vmem:[#allocation8 + $0x3c8] sm:$0xff]
    %v1002 = vld [vmem:[#allocation8 + $0x3d0] sm:$0xff]
    %v1003 = vld [vmem:[#allocation8 + $0x3d8] sm:$0xff]
    %v1004 = vld [vmem:[#allocation8 + $0x3e0] sm:$0xff]
    %v1005 = vld [vmem:[#allocation8 + $0x3e8] sm:$0xff]
    %v1006 = vld [vmem:[#allocation8 + $0x3f0] sm:$0xff]
    %v1007 = vld [vmem:[#allocation8 + $0x3f8] sm:$0xff]
    %v1008 = vld [vmem:[%s9] sm:$0xf]
    %v1010 = vperm.slane %v1008, 0
    %v1011 = vperm.slane %v1008, 1
    %v1012 = vperm.slane %v1008, 2
    %v1013 = vperm.slane %v1008, 3
    %v1146 = vunpack.c.l.b16 %v880
    %v1147 = vunpack.c.h.b16 %v880
    %v1148 = vunpack.c.l.b16 %v881
    %v1149 = vunpack.c.h.b16 %v881
    %v1150 = vunpack.c.l.b16 %v882
    %v1151 = vunpack.c.h.b16 %v882
    %v1152 = vunpack.c.l.b16 %v883
    %v1153 = vunpack.c.h.b16 %v883
    %v1154 = vunpack.c.l.b16 %v884
    %v1155 = vunpack.c.h.b16 %v884
    %v1156 = vunpack.c.l.b16 %v885
    %v1157 = vunpack.c.h.b16 %v885
    %v1158 = vunpack.c.l.b16 %v886
    %v1159 = vunpack.c.h.b16 %v886
    %v1160 = vunpack.c.l.b16 %v887
    %v1161 = vunpack.c.h.b16 %v887
    %v1162 = vunpack.c.l.b16 %v888
    %v1163 = vunpack.c.h.b16 %v888
    %v1164 = vunpack.c.l.b16 %v889
    %v1165 = vunpack.c.h.b16 %v889
    %v1166 = vunpack.c.l.b16 %v890
    %v1167 = vunpack.c.h.b16 %v890
    %v1168 = vunpack.c.l.b16 %v891
    %v1169 = vunpack.c.h.b16 %v891
    %v1170 = vunpack.c.l.b16 %v892
    %v1171 = vunpack.c.h.b16 %v892
    %v1172 = vunpack.c.l.b16 %v893
    %v1173 = vunpack.c.h.b16 %v893
    %v1174 = vunpack.c.l.b16 %v894
    %v1175 = vunpack.c.h.b16 %v894
    %v1176 = vunpack.c.l.b16 %v895
    %v1177 = vunpack.c.h.b16 %v895
    %v1178 = vunpack.c.l.b16 %v896
    %v1179 = vunpack.c.h.b16 %v896
    %v1180 = vunpack.c.l.b16 %v897
    %v1181 = vunpack.c.h.b16 %v897
    %v1182 = vunpack.c.l.b16 %v898
    %v1183 = vunpack.c.h.b16 %v898
    %v1184 = vunpack.c.l.b16 %v899
    %v1185 = vunpack.c.h.b16 %v899
    %v1186 = vunpack.c.l.b16 %v900
    %v1187 = vunpack.c.h.b16 %v900
    %v1188 = vunpack.c.l.b16 %v901
    %v1189 = vunpack.c.h.b16 %v901
    %v1190 = vunpack.c.l.b16 %v902
    %v1191 = vunpack.c.h.b16 %v902
    %v1192 = vunpack.c.l.b16 %v903
    %v1193 = vunpack.c.h.b16 %v903
    %v1194 = vunpack.c.l.b16 %v904
    %v1195 = vunpack.c.h.b16 %v904
    %v1196 = vunpack.c.l.b16 %v905
    %v1197 = vunpack.c.h.b16 %v905
    %v1198 = vunpack.c.l.b16 %v906
    %v1199 = vunpack.c.h.b16 %v906
    %v1200 = vunpack.c.l.b16 %v907
    %v1201 = vunpack.c.h.b16 %v907
    %v1202 = vunpack.c.l.b16 %v908
    %v1203 = vunpack.c.h.b16 %v908
    %v1204 = vunpack.c.l.b16 %v909
    %v1205 = vunpack.c.h.b16 %v909
    %v1206 = vunpack.c.l.b16 %v910
    %v1207 = vunpack.c.h.b16 %v910
    %v1208 = vunpack.c.l.b16 %v911
    %v1209 = vunpack.c.h.b16 %v911
    %v1210 = vunpack.c.l.b16 %v912
    %v1211 = vunpack.c.h.b16 %v912
    %v1212 = vunpack.c.l.b16 %v913
    %v1213 = vunpack.c.h.b16 %v913
    %v1214 = vunpack.c.l.b16 %v914
    %v1215 = vunpack.c.h.b16 %v914
    %v1216 = vunpack.c.l.b16 %v915
    %v1217 = vunpack.c.h.b16 %v915
    %v1218 = vunpack.c.l.b16 %v916
    %v1219 = vunpack.c.h.b16 %v916
    %v1220 = vunpack.c.l.b16 %v917
    %v1221 = vunpack.c.h.b16 %v917
    %v1222 = vunpack.c.l.b16 %v918
    %v1223 = vunpack.c.h.b16 %v918
    %v1224 = vunpack.c.l.b16 %v919
    %v1225 = vunpack.c.h.b16 %v919
    %v1226 = vunpack.c.l.b16 %v920
    %v1227 = vunpack.c.h.b16 %v920
    %v1228 = vunpack.c.l.b16 %v921
    %v1229 = vunpack.c.h.b16 %v921
    %v1230 = vunpack.c.l.b16 %v922
    %v1231 = vunpack.c.h.b16 %v922
    %v1232 = vunpack.c.l.b16 %v923
    %v1233 = vunpack.c.h.b16 %v923
    %v1234 = vunpack.c.l.b16 %v924
    %v1235 = vunpack.c.h.b16 %v924
    %v1236 = vunpack.c.l.b16 %v925
    %v1237 = vunpack.c.h.b16 %v925
    %v1238 = vunpack.c.l.b16 %v926
    %v1239 = vunpack.c.h.b16 %v926
    %v1240 = vunpack.c.l.b16 %v927
    %v1241 = vunpack.c.h.b16 %v927
    %v1242 = vunpack.c.l.b16 %v928
    %v1243 = vunpack.c.h.b16 %v928
    %v1244 = vunpack.c.l.b16 %v929
    %v1245 = vunpack.c.h.b16 %v929
    %v1246 = vunpack.c.l.b16 %v930
    %v1247 = vunpack.c.h.b16 %v930
    %v1248 = vunpack.c.l.b16 %v931
    %v1249 = vunpack.c.h.b16 %v931
    %v1250 = vunpack.c.l.b16 %v932
    %v1251 = vunpack.c.h.b16 %v932
    %v1252 = vunpack.c.l.b16 %v933
    %v1253 = vunpack.c.h.b16 %v933
    %v1254 = vunpack.c.l.b16 %v934
    %v1255 = vunpack.c.h.b16 %v934
    %v1256 = vunpack.c.l.b16 %v935
    %v1257 = vunpack.c.h.b16 %v935
    %v1258 = vunpack.c.l.b16 %v936
    %v1259 = vunpack.c.h.b16 %v936
    %v1260 = vunpack.c.l.b16 %v937
    %v1261 = vunpack.c.h.b16 %v937
    %v1262 = vunpack.c.l.b16 %v938
    %v1263 = vunpack.c.h.b16 %v938
    %v1264 = vunpack.c.l.b16 %v939
    %v1265 = vunpack.c.h.b16 %v939
    %v1266 = vunpack.c.l.b16 %v940
    %v1267 = vunpack.c.h.b16 %v940
    %v1268 = vunpack.c.l.b16 %v941
    %v1269 = vunpack.c.h.b16 %v941
    %v1270 = vunpack.c.l.b16 %v942
    %v1271 = vunpack.c.h.b16 %v942
    %v1272 = vunpack.c.l.b16 %v943
    %v1273 = vunpack.c.h.b16 %v943
    %v1274 = vunpack.c.l.b16 %v944
    %v1275 = vunpack.c.h.b16 %v944
    %v1276 = vunpack.c.l.b16 %v945
    %v1277 = vunpack.c.h.b16 %v945
    %v1278 = vunpack.c.l.b16 %v946
    %v1279 = vunpack.c.h.b16 %v946
    %v1280 = vunpack.c.l.b16 %v947
    %v1281 = vunpack.c.h.b16 %v947
    %v1282 = vunpack.c.l.b16 %v948
    %v1283 = vunpack.c.h.b16 %v948
    %v1284 = vunpack.c.l.b16 %v949
    %v1285 = vunpack.c.h.b16 %v949
    %v1286 = vunpack.c.l.b16 %v950
    %v1287 = vunpack.c.h.b16 %v950
    %v1288 = vunpack.c.l.b16 %v951
    %v1289 = vunpack.c.h.b16 %v951
    %v1290 = vunpack.c.l.b16 %v952
    %v1291 = vunpack.c.h.b16 %v952
    %v1292 = vunpack.c.l.b16 %v953
    %v1293 = vunpack.c.h.b16 %v953
    %v1294 = vunpack.c.l.b16 %v954
    %v1295 = vunpack.c.h.b16 %v954
    %v1296 = vunpack.c.l.b16 %v955
    %v1297 = vunpack.c.h.b16 %v955
    %v1298 = vunpack.c.l.b16 %v956
    %v1299 = vunpack.c.h.b16 %v956
    %v1300 = vunpack.c.l.b16 %v957
    %v1301 = vunpack.c.h.b16 %v957
    %v1302 = vunpack.c.l.b16 %v958
    %v1303 = vunpack.c.h.b16 %v958
    %v1304 = vunpack.c.l.b16 %v959
    %v1305 = vunpack.c.h.b16 %v959
    %v1306 = vunpack.c.l.b16 %v960
    %v1307 = vunpack.c.h.b16 %v960
    %v1308 = vunpack.c.l.b16 %v961
    %v1309 = vunpack.c.h.b16 %v961
    %v1310 = vunpack.c.l.b16 %v962
    %v1311 = vunpack.c.h.b16 %v962
    %v1312 = vunpack.c.l.b16 %v963
    %v1313 = vunpack.c.h.b16 %v963
    %v1314 = vunpack.c.l.b16 %v964
    %v1315 = vunpack.c.h.b16 %v964
    %v1316 = vunpack.c.l.b16 %v965
    %v1317 = vunpack.c.h.b16 %v965
    %v1318 = vunpack.c.l.b16 %v966
    %v1319 = vunpack.c.h.b16 %v966
    %v1320 = vunpack.c.l.b16 %v967
    %v1321 = vunpack.c.h.b16 %v967
    %v1322 = vunpack.c.l.b16 %v968
    %v1323 = vunpack.c.h.b16 %v968
    %v1324 = vunpack.c.l.b16 %v969
    %v1325 = vunpack.c.h.b16 %v969
    %v1326 = vunpack.c.l.b16 %v970
    %v1327 = vunpack.c.h.b16 %v970
    %v1328 = vunpack.c.l.b16 %v971
    %v1329 = vunpack.c.h.b16 %v971
    %v1330 = vunpack.c.l.b16 %v972
    %v1331 = vunpack.c.h.b16 %v972
    %v1332 = vunpack.c.l.b16 %v973
    %v1333 = vunpack.c.h.b16 %v973
    %v1334 = vunpack.c.l.b16 %v974
    %v1335 = vunpack.c.h.b16 %v974
    %v1336 = vunpack.c.l.b16 %v975
    %v1337 = vunpack.c.h.b16 %v975
    %v1338 = vunpack.c.l.b16 %v976
    %v1339 = vunpack.c.h.b16 %v976
    %v1340 = vunpack.c.l.b16 %v977
    %v1341 = vunpack.c.h.b16 %v977
    %v1342 = vunpack.c.l.b16 %v978
    %v1343 = vunpack.c.h.b16 %v978
    %v1344 = vunpack.c.l.b16 %v979
    %v1345 = vunpack.c.h.b16 %v979
    %v1346 = vunpack.c.l.b16 %v980
    %v1347 = vunpack.c.h.b16 %v980
    %v1348 = vunpack.c.l.b16 %v981
    %v1349 = vunpack.c.h.b16 %v981
    %v1350 = vunpack.c.l.b16 %v982
    %v1351 = vunpack.c.h.b16 %v982
    %v1352 = vunpack.c.l.b16 %v983
    %v1353 = vunpack.c.h.b16 %v983
    %v1354 = vunpack.c.l.b16 %v984
    %v1355 = vunpack.c.h.b16 %v984
    %v1356 = vunpack.c.l.b16 %v985
    %v1357 = vunpack.c.h.b16 %v985
    %v1358 = vunpack.c.l.b16 %v986
    %v1359 = vunpack.c.h.b16 %v986
    %v1360 = vunpack.c.l.b16 %v987
    %v1361 = vunpack.c.h.b16 %v987
    %v1362 = vunpack.c.l.b16 %v988
    %v1363 = vunpack.c.h.b16 %v988
    %v1364 = vunpack.c.l.b16 %v989
    %v1365 = vunpack.c.h.b16 %v989
    %v1366 = vunpack.c.l.b16 %v990
    %v1367 = vunpack.c.h.b16 %v990
    %v1368 = vunpack.c.l.b16 %v991
    %v1369 = vunpack.c.h.b16 %v991
    %v1370 = vunpack.c.l.b16 %v992
    %v1371 = vunpack.c.h.b16 %v992
    %v1372 = vunpack.c.l.b16 %v993
    %v1373 = vunpack.c.h.b16 %v993
    %v1374 = vunpack.c.l.b16 %v994
    %v1375 = vunpack.c.h.b16 %v994
    %v1376 = vunpack.c.l.b16 %v995
    %v1377 = vunpack.c.h.b16 %v995
    %v1378 = vunpack.c.l.b16 %v996
    %v1379 = vunpack.c.h.b16 %v996
    %v1380 = vunpack.c.l.b16 %v997
    %v1381 = vunpack.c.h.b16 %v997
    %v1382 = vunpack.c.l.b16 %v998
    %v1383 = vunpack.c.h.b16 %v998
    %v1384 = vunpack.c.l.b16 %v999
    %v1385 = vunpack.c.h.b16 %v999
    %v1386 = vunpack.c.l.b16 %v1000
    %v1387 = vunpack.c.h.b16 %v1000
    %v1388 = vunpack.c.l.b16 %v1001
    %v1389 = vunpack.c.h.b16 %v1001
    %v1390 = vunpack.c.l.b16 %v1002
    %v1391 = vunpack.c.h.b16 %v1002
    %v1392 = vunpack.c.l.b16 %v1003
    %v1393 = vunpack.c.h.b16 %v1003
    %v1394 = vunpack.c.l.b16 %v1004
    %v1395 = vunpack.c.h.b16 %v1004
    %v1396 = vunpack.c.l.b16 %v1005
    %v1397 = vunpack.c.h.b16 %v1005
    %v1398 = vunpack.c.l.b16 %v1006
    %v1399 = vunpack.c.h.b16 %v1006
    %v1400 = vunpack.c.l.b16 %v1007
    %v1401 = vunpack.c.h.b16 %v1007
    %v1402 = vpack.c.b16 %v1150, %v1146
    %v1403 = vpack.c.b16 %v1151, %v1147
    %v1404 = vpack.c.b16 %v1152, %v1148
    %v1405 = vpack.c.b16 %v1153, %v1149
    %v1406 = vpack.c.b16 %v1158, %v1154
    %v1407 = vpack.c.b16 %v1159, %v1155
    %v1408 = vpack.c.b16 %v1160, %v1156
    %v1409 = vpack.c.b16 %v1161, %v1157
    %v1410 = vpack.c.b16 %v1166, %v1162
    %v1411 = vpack.c.b16 %v1167, %v1163
    %v1412 = vpack.c.b16 %v1168, %v1164
    %v1413 = vpack.c.b16 %v1169, %v1165
    %v1414 = vpack.c.b16 %v1174, %v1170
    %v1415 = vpack.c.b16 %v1175, %v1171
    %v1416 = vpack.c.b16 %v1176, %v1172
    %v1417 = vpack.c.b16 %v1177, %v1173
    %v1418 = vpack.c.b16 %v1182, %v1178
    %v1419 = vpack.c.b16 %v1183, %v1179
    %v1420 = vpack.c.b16 %v1184, %v1180
    %v1421 = vpack.c.b16 %v1185, %v1181
    %v1422 = vpack.c.b16 %v1190, %v1186
    %v1423 = vpack.c.b16 %v1191, %v1187
    %v1424 = vpack.c.b16 %v1192, %v1188
    %v1425 = vpack.c.b16 %v1193, %v1189
    %v1426 = vpack.c.b16 %v1198, %v1194
    %v1427 = vpack.c.b16 %v1199, %v1195
    %v1428 = vpack.c.b16 %v1200, %v1196
    %v1429 = vpack.c.b16 %v1201, %v1197
    %v1430 = vpack.c.b16 %v1206, %v1202
    %v1431 = vpack.c.b16 %v1207, %v1203
    %v1432 = vpack.c.b16 %v1208, %v1204
    %v1433 = vpack.c.b16 %v1209, %v1205
    %v1434 = vpack.c.b16 %v1214, %v1210
    %v1435 = vpack.c.b16 %v1215, %v1211
    %v1436 = vpack.c.b16 %v1216, %v1212
    %v1437 = vpack.c.b16 %v1217, %v1213
    %v1438 = vpack.c.b16 %v1222, %v1218
    %v1439 = vpack.c.b16 %v1223, %v1219
    %v1440 = vpack.c.b16 %v1224, %v1220
    %v1441 = vpack.c.b16 %v1225, %v1221
    %v1442 = vpack.c.b16 %v1230, %v1226
    %v1443 = vpack.c.b16 %v1231, %v1227
    %v1444 = vpack.c.b16 %v1232, %v1228
    %v1445 = vpack.c.b16 %v1233, %v1229
    %v1446 = vpack.c.b16 %v1238, %v1234
    %v1447 = vpack.c.b16 %v1239, %v1235
    %v1448 = vpack.c.b16 %v1240, %v1236
    %v1449 = vpack.c.b16 %v1241, %v1237
    %v1450 = vpack.c.b16 %v1246, %v1242
    %v1451 = vpack.c.b16 %v1247, %v1243
    %v1452 = vpack.c.b16 %v1248, %v1244
    %v1453 = vpack.c.b16 %v1249, %v1245
    %v1454 = vpack.c.b16 %v1254, %v1250
    %v1455 = vpack.c.b16 %v1255, %v1251
    %v1456 = vpack.c.b16 %v1256, %v1252
    %v1457 = vpack.c.b16 %v1257, %v1253
    %v1458 = vpack.c.b16 %v1262, %v1258
    %v1459 = vpack.c.b16 %v1263, %v1259
    %v1460 = vpack.c.b16 %v1264, %v1260
    %v1461 = vpack.c.b16 %v1265, %v1261
    %v1462 = vpack.c.b16 %v1270, %v1266
    %v1463 = vpack.c.b16 %v1271, %v1267
    %v1464 = vpack.c.b16 %v1272, %v1268
    %v1465 = vpack.c.b16 %v1273, %v1269
    %v1466 = vpack.c.b16 %v1278, %v1274
    %v1467 = vpack.c.b16 %v1279, %v1275
    %v1468 = vpack.c.b16 %v1280, %v1276
    %v1469 = vpack.c.b16 %v1281, %v1277
    %v1470 = vpack.c.b16 %v1286, %v1282
    %v1471 = vpack.c.b16 %v1287, %v1283
    %v1472 = vpack.c.b16 %v1288, %v1284
    %v1473 = vpack.c.b16 %v1289, %v1285
    %v1474 = vpack.c.b16 %v1294, %v1290
    %v1475 = vpack.c.b16 %v1295, %v1291
    %v1476 = vpack.c.b16 %v1296, %v1292
    %v1477 = vpack.c.b16 %v1297, %v1293
    %v1478 = vpack.c.b16 %v1302, %v1298
    %v1479 = vpack.c.b16 %v1303, %v1299
    %v1480 = vpack.c.b16 %v1304, %v1300
    %v1481 = vpack.c.b16 %v1305, %v1301
    %v1482 = vpack.c.b16 %v1310, %v1306
    %v1483 = vpack.c.b16 %v1311, %v1307
    %v1484 = vpack.c.b16 %v1312, %v1308
    %v1485 = vpack.c.b16 %v1313, %v1309
    %v1486 = vpack.c.b16 %v1318, %v1314
    %v1487 = vpack.c.b16 %v1319, %v1315
    %v1488 = vpack.c.b16 %v1320, %v1316
    %v1489 = vpack.c.b16 %v1321, %v1317
    %v1490 = vpack.c.b16 %v1326, %v1322
    %v1491 = vpack.c.b16 %v1327, %v1323
    %v1492 = vpack.c.b16 %v1328, %v1324
    %v1493 = vpack.c.b16 %v1329, %v1325
    %v1494 = vpack.c.b16 %v1334, %v1330
    %v1495 = vpack.c.b16 %v1335, %v1331
    %v1496 = vpack.c.b16 %v1336, %v1332
    %v1497 = vpack.c.b16 %v1337, %v1333
    %v1498 = vpack.c.b16 %v1342, %v1338
    %v1499 = vpack.c.b16 %v1343, %v1339
    %v1500 = vpack.c.b16 %v1344, %v1340
    %v1501 = vpack.c.b16 %v1345, %v1341
    %v1502 = vpack.c.b16 %v1350, %v1346
    %v1503 = vpack.c.b16 %v1351, %v1347
    %v1504 = vpack.c.b16 %v1352, %v1348
    %v1505 = vpack.c.b16 %v1353, %v1349
    %v1506 = vpack.c.b16 %v1358, %v1354
    %v1507 = vpack.c.b16 %v1359, %v1355
    %v1508 = vpack.c.b16 %v1360, %v1356
    %v1509 = vpack.c.b16 %v1361, %v1357
    %v1510 = vpack.c.b16 %v1366, %v1362
    %v1511 = vpack.c.b16 %v1367, %v1363
    %v1512 = vpack.c.b16 %v1368, %v1364
    %v1513 = vpack.c.b16 %v1369, %v1365
    %v1514 = vpack.c.b16 %v1374, %v1370
    %v1515 = vpack.c.b16 %v1375, %v1371
    %v1516 = vpack.c.b16 %v1376, %v1372
    %v1517 = vpack.c.b16 %v1377, %v1373
    %v1518 = vpack.c.b16 %v1382, %v1378
    %v1519 = vpack.c.b16 %v1383, %v1379
    %v1520 = vpack.c.b16 %v1384, %v1380
    %v1521 = vpack.c.b16 %v1385, %v1381
    %v1522 = vpack.c.b16 %v1390, %v1386
    %v1523 = vpack.c.b16 %v1391, %v1387
    %v1524 = vpack.c.b16 %v1392, %v1388
    %v1525 = vpack.c.b16 %v1393, %v1389
    %v1526 = vpack.c.b16 %v1398, %v1394
    %v1527 = vpack.c.b16 %v1399, %v1395
    %v1528 = vpack.c.b16 %v1400, %v1396
    %v1529 = vpack.c.b16 %v1401, %v1397
    %1658 = vmatpush.bf16.msra.mxu0 %v1430
    %1659 = vmatpush.bf16.msra.mxu0 %v1426
    %1660 = vmatpush.bf16.msra.mxu0 %v1422
    %1661 = vmatpush.bf16.msra.mxu0 %v1418
    %1662 = vmatpush.bf16.msra.mxu0 %v1414
    %1663 = vmatpush.bf16.msra.mxu0 %v1410
    %1664 = vmatpush.bf16.msra.mxu0 %v1406
    %1665 = vmatpush.bf16.msra.mxu0 %v1402
    %1666 = vmatmul.bf16.gmra.mxu0 %v872
    %v1667 = vpop.f32.mrf.mxu0
    %v1668 = vadd.f32 %v1010, %v1667
    %v1669 = vpop.f32.mrf.mxu0
    %v1670 = vadd.f32 %v1010, %v1669
    %1671 = vmatmul.bf16.gmra.mxu0 %v876
    %v1672 = vpop.f32.mrf.mxu0
    %v1673 = vadd.f32 %v1010, %v1672
    %v1674 = vpop.f32.mrf.mxu0
    %v1675 = vadd.f32 %v1010, %v1674
    %1676 = vdwg.mxu0
    %1677 = vmatpush.bf16.msra.mxu0 %v1462
    %1678 = vmatpush.bf16.msra.mxu0 %v1458
    %1679 = vmatpush.bf16.msra.mxu0 %v1454
    %1680 = vmatpush.bf16.msra.mxu0 %v1450
    %1681 = vmatpush.bf16.msra.mxu0 %v1446
    %1682 = vmatpush.bf16.msra.mxu0 %v1442
    %1683 = vmatpush.bf16.msra.mxu0 %v1438
    %1684 = vmatpush.bf16.msra.mxu0 %v1434
    %1685 = vmatmul.bf16.gmra.mxu0 %v873
    %v1686 = vpop.f32.mrf.mxu0
    %v1687 = vadd.f32 %v1668, %v1686
    %v1688 = vpop.f32.mrf.mxu0
    %v1689 = vadd.f32 %v1670, %v1688
    %1690 = vmatmul.bf16.gmra.mxu0 %v877
    %v1691 = vpop.f32.mrf.mxu0
    %v1692 = vadd.f32 %v1673, %v1691
    %v1693 = vpop.f32.mrf.mxu0
    %v1694 = vadd.f32 %v1675, %v1693
    %1695 = vdwg.mxu0
    %1696 = vmatpush.bf16.msra.mxu0 %v1494
    %1697 = vmatpush.bf16.msra.mxu0 %v1490
    %1698 = vmatpush.bf16.msra.mxu0 %v1486
    %1699 = vmatpush.bf16.msra.mxu0 %v1482
    %1700 = vmatpush.bf16.msra.mxu0 %v1478
    %1701 = vmatpush.bf16.msra.mxu0 %v1474
    %1702 = vmatpush.bf16.msra.mxu0 %v1470
    %1703 = vmatpush.bf16.msra.mxu0 %v1466
    %1704 = vmatmul.bf16.gmra.mxu0 %v874
    %v1705 = vpop.f32.mrf.mxu0
    %v1706 = vadd.f32 %v1687, %v1705
    %v1707 = vpop.f32.mrf.mxu0
    %v1708 = vadd.f32 %v1689, %v1707
    %1709 = vmatmul.bf16.gmra.mxu0 %v878
    %v1710 = vpop.f32.mrf.mxu0
    %v1711 = vadd.f32 %v1692, %v1710
    %v1712 = vpop.f32.mrf.mxu0
    %v1713 = vadd.f32 %v1694, %v1712
    %1714 = vdwg.mxu0
    %1715 = vmatpush.bf16.msra.mxu0 %v1526
    %1716 = vmatpush.bf16.msra.mxu0 %v1522
    %1717 = vmatpush.bf16.msra.mxu0 %v1518
    %1718 = vmatpush.bf16.msra.mxu0 %v1514
    %1719 = vmatpush.bf16.msra.mxu0 %v1510
    %1720 = vmatpush.bf16.msra.mxu0 %v1506
    %1721 = vmatpush.bf16.msra.mxu0 %v1502
    %1722 = vmatpush.bf16.msra.mxu0 %v1498
    %1723 = vmatmul.bf16.gmra.mxu0 %v875
    %v1724 = vpop.f32.mrf.mxu0
    %v1725 = vadd.f32 %v1706, %v1724
    %v1726 = vpop.f32.mrf.mxu0
    %v1727 = vadd.f32 %v1708, %v1726
    %1728 = vmatmul.bf16.gmra.mxu0 %v879
    %v1729 = vpop.f32.mrf.mxu0
    %v1730 = vadd.f32 %v1711, %v1729
    %v1731 = vpop.f32.mrf.mxu0
    %v1732 = vadd.f32 %v1713, %v1731
    %1733 = vdwg.mxu0
    %1734 = vmatpush.bf16.msra.mxu0 %v1431
    %1735 = vmatpush.bf16.msra.mxu0 %v1427
    %1736 = vmatpush.bf16.msra.mxu0 %v1423
    %1737 = vmatpush.bf16.msra.mxu0 %v1419
    %1738 = vmatpush.bf16.msra.mxu0 %v1415
    %1739 = vmatpush.bf16.msra.mxu0 %v1411
    %1740 = vmatpush.bf16.msra.mxu0 %v1407
    %1741 = vmatpush.bf16.msra.mxu0 %v1403
    %1742 = vmatmul.bf16.gmra.mxu0 %v872
    %v1743 = vpop.f32.mrf.mxu0
    %v1744 = vadd.f32 %v1011, %v1743
    %v1745 = vpop.f32.mrf.mxu0
    %v1746 = vadd.f32 %v1011, %v1745
    %1747 = vmatmul.bf16.gmra.mxu0 %v876
    %v1748 = vpop.f32.mrf.mxu0
    %v1749 = vadd.f32 %v1011, %v1748
    %v1750 = vpop.f32.mrf.mxu0
    %v1751 = vadd.f32 %v1011, %v1750
    %1752 = vdwg.mxu0
    %1753 = vmatpush.bf16.msra.mxu0 %v1463
    %1754 = vmatpush.bf16.msra.mxu0 %v1459
    %1755 = vmatpush.bf16.msra.mxu0 %v1455
    %1756 = vmatpush.bf16.msra.mxu0 %v1451
    %1757 = vmatpush.bf16.msra.mxu0 %v1447
    %1758 = vmatpush.bf16.msra.mxu0 %v1443
    %1759 = vmatpush.bf16.msra.mxu0 %v1439
    %1760 = vmatpush.bf16.msra.mxu0 %v1435
    %1761 = vmatmul.bf16.gmra.mxu0 %v873
    %v1762 = vpop.f32.mrf.mxu0
    %v1763 = vadd.f32 %v1744, %v1762
    %v1764 = vpop.f32.mrf.mxu0
    %v1765 = vadd.f32 %v1746, %v1764
    %1766 = vmatmul.bf16.gmra.mxu0 %v877
    %v1767 = vpop.f32.mrf.mxu0
    %v1768 = vadd.f32 %v1749, %v1767
    %v1769 = vpop.f32.mrf.mxu0
    %v1770 = vadd.f32 %v1751, %v1769
    %1771 = vdwg.mxu0
    %1772 = vmatpush.bf16.msra.mxu0 %v1495
    %1773 = vmatpush.bf16.msra.mxu0 %v1491
    %1774 = vmatpush.bf16.msra.mxu0 %v1487
    %1775 = vmatpush.bf16.msra.mxu0 %v1483
    %1776 = vmatpush.bf16.msra.mxu0 %v1479
    %1777 = vmatpush.bf16.msra.mxu0 %v1475
    %1778 = vmatpush.bf16.msra.mxu0 %v1471
    %1779 = vmatpush.bf16.msra.mxu0 %v1467
    %1780 = vmatmul.bf16.gmra.mxu0 %v874
    %v1781 = vpop.f32.mrf.mxu0
    %v1782 = vadd.f32 %v1763, %v1781
    %v1783 = vpop.f32.mrf.mxu0
    %v1784 = vadd.f32 %v1765, %v1783
    %1785 = vmatmul.bf16.gmra.mxu0 %v878
    %v1786 = vpop.f32.mrf.mxu0
    %v1787 = vadd.f32 %v1768, %v1786
    %v1788 = vpop.f32.mrf.mxu0
    %v1789 = vadd.f32 %v1770, %v1788
    %1790 = vdwg.mxu0
    %1791 = vmatpush.bf16.msra.mxu0 %v1527
    %1792 = vmatpush.bf16.msra.mxu0 %v1523
    %1793 = vmatpush.bf16.msra.mxu0 %v1519
    %1794 = vmatpush.bf16.msra.mxu0 %v1515
    %1795 = vmatpush.bf16.msra.mxu0 %v1511
    %1796 = vmatpush.bf16.msra.mxu0 %v1507
    %1797 = vmatpush.bf16.msra.mxu0 %v1503
    %1798 = vmatpush.bf16.msra.mxu0 %v1499
    %1799 = vmatmul.bf16.gmra.mxu0 %v875
    %v1800 = vpop.f32.mrf.mxu0
    %v1801 = vadd.f32 %v1782, %v1800
    %v1802 = vpop.f32.mrf.mxu0
    %v1803 = vadd.f32 %v1784, %v1802
    %1804 = vmatmul.bf16.gmra.mxu0 %v879
    %v1805 = vpop.f32.mrf.mxu0
    %v1806 = vadd.f32 %v1787, %v1805
    %v1807 = vpop.f32.mrf.mxu0
    %v1808 = vadd.f32 %v1789, %v1807
    %1809 = vdwg.mxu0
    %1810 = vmatpush.bf16.msra.mxu0 %v1432
    %1811 = vmatpush.bf16.msra.mxu0 %v1428
    %1812 = vmatpush.bf16.msra.mxu0 %v1424
    %1813 = vmatpush.bf16.msra.mxu0 %v1420
    %1814 = vmatpush.bf16.msra.mxu0 %v1416
    %1815 = vmatpush.bf16.msra.mxu0 %v1412
    %1816 = vmatpush.bf16.msra.mxu0 %v1408
    %1817 = vmatpush.bf16.msra.mxu0 %v1404
    %1818 = vmatmul.bf16.gmra.mxu0 %v872
    %v1819 = vpop.f32.mrf.mxu0
    %v1820 = vadd.f32 %v1012, %v1819
    %v1821 = vpop.f32.mrf.mxu0
    %v1822 = vadd.f32 %v1012, %v1821
    %1823 = vmatmul.bf16.gmra.mxu0 %v876
    %v1824 = vpop.f32.mrf.mxu0
    %v1825 = vadd.f32 %v1012, %v1824
    %v1826 = vpop.f32.mrf.mxu0
    %v1827 = vadd.f32 %v1012, %v1826
    %1828 = vdwg.mxu0
    %1829 = vmatpush.bf16.msra.mxu0 %v1464
    %1830 = vmatpush.bf16.msra.mxu0 %v1460
    %1831 = vmatpush.bf16.msra.mxu0 %v1456
    %1832 = vmatpush.bf16.msra.mxu0 %v1452
    %1833 = vmatpush.bf16.msra.mxu0 %v1448
    %1834 = vmatpush.bf16.msra.mxu0 %v1444
    %1835 = vmatpush.bf16.msra.mxu0 %v1440
    %1836 = vmatpush.bf16.msra.mxu0 %v1436
    %1837 = vmatmul.bf16.gmra.mxu0 %v873
    %v1838 = vpop.f32.mrf.mxu0
    %v1839 = vadd.f32 %v1820, %v1838
    %v1840 = vpop.f32.mrf.mxu0
    %v1841 = vadd.f32 %v1822, %v1840
    %1842 = vmatmul.bf16.gmra.mxu0 %v877
    %v1843 = vpop.f32.mrf.mxu0
    %v1844 = vadd.f32 %v1825, %v1843
    %v1845 = vpop.f32.mrf.mxu0
    %v1846 = vadd.f32 %v1827, %v1845
    %1847 = vdwg.mxu0
    %1848 = vmatpush.bf16.msra.mxu0 %v1496
    %1849 = vmatpush.bf16.msra.mxu0 %v1492
    %1850 = vmatpush.bf16.msra.mxu0 %v1488
    %1851 = vmatpush.bf16.msra.mxu0 %v1484
    %1852 = vmatpush.bf16.msra.mxu0 %v1480
    %1853 = vmatpush.bf16.msra.mxu0 %v1476
    %1854 = vmatpush.bf16.msra.mxu0 %v1472
    %1855 = vmatpush.bf16.msra.mxu0 %v1468
    %1856 = vmatmul.bf16.gmra.mxu0 %v874
    %v1857 = vpop.f32.mrf.mxu0
    %v1858 = vadd.f32 %v1839, %v1857
    %v1859 = vpop.f32.mrf.mxu0
    %v1860 = vadd.f32 %v1841, %v1859
    %1861 = vmatmul.bf16.gmra.mxu0 %v878
    %v1862 = vpop.f32.mrf.mxu0
    %v1863 = vadd.f32 %v1844, %v1862
    %v1864 = vpop.f32.mrf.mxu0
    %v1865 = vadd.f32 %v1846, %v1864
    %1866 = vdwg.mxu0
    %1867 = vmatpush.bf16.msra.mxu0 %v1528
    %1868 = vmatpush.bf16.msra.mxu0 %v1524
    %1869 = vmatpush.bf16.msra.mxu0 %v1520
    %1870 = vmatpush.bf16.msra.mxu0 %v1516
    %1871 = vmatpush.bf16.msra.mxu0 %v1512
    %1872 = vmatpush.bf16.msra.mxu0 %v1508
    %1873 = vmatpush.bf16.msra.mxu0 %v1504
    %1874 = vmatpush.bf16.msra.mxu0 %v1500
    %1875 = vmatmul.bf16.gmra.mxu0 %v875
    %v1876 = vpop.f32.mrf.mxu0
    %v1877 = vadd.f32 %v1858, %v1876
    %v1878 = vpop.f32.mrf.mxu0
    %v1879 = vadd.f32 %v1860, %v1878
    %1880 = vmatmul.bf16.gmra.mxu0 %v879
    %v1881 = vpop.f32.mrf.mxu0
    %v1882 = vadd.f32 %v1863, %v1881
    %v1883 = vpop.f32.mrf.mxu0
    %v1884 = vadd.f32 %v1865, %v1883
    %1885 = vdwg.mxu0
    %1886 = vmatpush.bf16.msra.mxu0 %v1433
    %1887 = vmatpush.bf16.msra.mxu0 %v1429
    %1888 = vmatpush.bf16.msra.mxu0 %v1425
    %1889 = vmatpush.bf16.msra.mxu0 %v1421
    %1890 = vmatpush.bf16.msra.mxu0 %v1417
    %1891 = vmatpush.bf16.msra.mxu0 %v1413
    %1892 = vmatpush.bf16.msra.mxu0 %v1409
    %1893 = vmatpush.bf16.msra.mxu0 %v1405
    %1894 = vmatmul.bf16.gmra.mxu0 %v872
    %v1895 = vpop.f32.mrf.mxu0
    %v1896 = vadd.f32 %v1013, %v1895
    %v1897 = vpop.f32.mrf.mxu0
    %v1898 = vadd.f32 %v1013, %v1897
    %1899 = vmatmul.bf16.gmra.mxu0 %v876
    %v1900 = vpop.f32.mrf.mxu0
    %v1901 = vadd.f32 %v1013, %v1900
    %v1902 = vpop.f32.mrf.mxu0
    %v1903 = vadd.f32 %v1013, %v1902
    %1904 = vdwg.mxu0
    %1905 = vmatpush.bf16.msra.mxu0 %v1465
    %1906 = vmatpush.bf16.msra.mxu0 %v1461
    %1907 = vmatpush.bf16.msra.mxu0 %v1457
    %1908 = vmatpush.bf16.msra.mxu0 %v1453
    %1909 = vmatpush.bf16.msra.mxu0 %v1449
    %1910 = vmatpush.bf16.msra.mxu0 %v1445
    %1911 = vmatpush.bf16.msra.mxu0 %v1441
    %1912 = vmatpush.bf16.msra.mxu0 %v1437
    %1913 = vmatmul.bf16.gmra.mxu0 %v873
    %v1914 = vpop.f32.mrf.mxu0
    %v1915 = vadd.f32 %v1896, %v1914
    %v1916 = vpop.f32.mrf.mxu0
    %v1917 = vadd.f32 %v1898, %v1916
    %1918 = vmatmul.bf16.gmra.mxu0 %v877
    %v1919 = vpop.f32.mrf.mxu0
    %v1920 = vadd.f32 %v1901, %v1919
    %v1921 = vpop.f32.mrf.mxu0
    %v1922 = vadd.f32 %v1903, %v1921
    %1923 = vdwg.mxu0
    %1924 = vmatpush.bf16.msra.mxu0 %v1497
    %1925 = vmatpush.bf16.msra.mxu0 %v1493
    %1926 = vmatpush.bf16.msra.mxu0 %v1489
    %1927 = vmatpush.bf16.msra.mxu0 %v1485
    %1928 = vmatpush.bf16.msra.mxu0 %v1481
    %1929 = vmatpush.bf16.msra.mxu0 %v1477
    %1930 = vmatpush.bf16.msra.mxu0 %v1473
    %1931 = vmatpush.bf16.msra.mxu0 %v1469
    %1932 = vmatmul.bf16.gmra.mxu0 %v874
    %v1933 = vpop.f32.mrf.mxu0
    %v1934 = vadd.f32 %v1915, %v1933
    %v1935 = vpop.f32.mrf.mxu0
    %v1936 = vadd.f32 %v1917, %v1935
    %1937 = vmatmul.bf16.gmra.mxu0 %v878
    %v1938 = vpop.f32.mrf.mxu0
    %v1939 = vadd.f32 %v1920, %v1938
    %v1940 = vpop.f32.mrf.mxu0
    %v1941 = vadd.f32 %v1922, %v1940
    %1942 = vdwg.mxu0
    %1943 = vmatpush.bf16.msra.mxu0 %v1529
    %1944 = vmatpush.bf16.msra.mxu0 %v1525
    %1945 = vmatpush.bf16.msra.mxu0 %v1521
    %1946 = vmatpush.bf16.msra.mxu0 %v1517
    %1947 = vmatpush.bf16.msra.mxu0 %v1513
    %1948 = vmatpush.bf16.msra.mxu0 %v1509
    %1949 = vmatpush.bf16.msra.mxu0 %v1505
    %1950 = vmatpush.bf16.msra.mxu0 %v1501
    %1951 = vmatmul.bf16.gmra.mxu0 %v875
    %v1952 = vpop.f32.mrf.mxu0
    %v1953 = vadd.f32 %v1934, %v1952
    %v1954 = vpop.f32.mrf.mxu0
    %v1955 = vadd.f32 %v1936, %v1954
    %1956 = vmatmul.bf16.gmra.mxu0 %v879
    %v1957 = vpop.f32.mrf.mxu0
    %v1958 = vadd.f32 %v1939, %v1957
    %v1959 = vpop.f32.mrf.mxu0
    %v1960 = vadd.f32 %v1941, %v1959
    %1961 = vdwg.mxu0
    %v1962 = vxor.u32 %v1725, 2147483648
    %v1963 = vxor.u32 %v1801, 2147483648
    %v1964 = vxor.u32 %v1877, 2147483648
    %v1965 = vxor.u32 %v1953, 2147483648
    %v1966 = vxor.u32 %v1727, 2147483648
    %v1967 = vxor.u32 %v1803, 2147483648
    %v1968 = vxor.u32 %v1879, 2147483648
    %v1969 = vxor.u32 %v1955, 2147483648
    %v1970 = vxor.u32 %v1730, 2147483648
    %v1971 = vxor.u32 %v1806, 2147483648
    %v1972 = vxor.u32 %v1882, 2147483648
    %v1973 = vxor.u32 %v1958, 2147483648
    %v1974 = vxor.u32 %v1732, 2147483648
    %v1975 = vxor.u32 %v1808, 2147483648
    %v1976 = vxor.u32 %v1884, 2147483648
    %v1977 = vxor.u32 %v1960, 2147483648
    %v1978 = vmul.f32 %v1962, 1.442695
    %v1979 = vpow.pop %v1978
    %v1980 = vmul.f32 %v1963, 1.442695
    %v1981 = vpow.pop %v1980
    %v1982 = vmul.f32 %v1964, 1.442695
    %v1983 = vpow.pop %v1982
    %v1984 = vmul.f32 %v1965, 1.442695
    %v1985 = vpow.pop %v1984
    %v1986 = vmul.f32 %v1966, 1.442695
    %v1987 = vpow.pop %v1986
    %v1988 = vmul.f32 %v1967, 1.442695
    %v1989 = vpow.pop %v1988
    %v1990 = vmul.f32 %v1968, 1.442695
    %v1991 = vpow.pop %v1990
    %v1992 = vmul.f32 %v1969, 1.442695
    %v1993 = vpow.pop %v1992
    %v1994 = vmul.f32 %v1970, 1.442695
    %v1995 = vpow.pop %v1994
    %v1996 = vmul.f32 %v1971, 1.442695
    %v1997 = vpow.pop %v1996
    %v1998 = vmul.f32 %v1972, 1.442695
    %v1999 = vpow.pop %v1998
    %v2000 = vmul.f32 %v1973, 1.442695
    %v2001 = vpow.pop %v2000
    %v2002 = vmul.f32 %v1974, 1.442695
    %v2003 = vpow.pop %v2002
    %v2004 = vmul.f32 %v1975, 1.442695
    %v2005 = vpow.pop %v2004
    %v2006 = vmul.f32 %v1976, 1.442695
    %v2007 = vpow.pop %v2006
    %v2008 = vmul.f32 %v1977, 1.442695
    %v2009 = vpow.pop %v2008
    %v2010 = vadd.f32 %v1979, 1.0
    %v2011 = vadd.f32 %v1981, 1.0
    %v2012 = vadd.f32 %v1983, 1.0
    %v2013 = vadd.f32 %v1985, 1.0
    %v2014 = vadd.f32 %v1987, 1.0
    %v2015 = vadd.f32 %v1989, 1.0
    %v2016 = vadd.f32 %v1991, 1.0
    %v2017 = vadd.f32 %v1993, 1.0
    %v2018 = vadd.f32 %v1995, 1.0
    %v2019 = vadd.f32 %v1997, 1.0
    %v2020 = vadd.f32 %v1999, 1.0
    %v2021 = vadd.f32 %v2001, 1.0
    %v2022 = vadd.f32 %v2003, 1.0
    %v2023 = vadd.f32 %v2005, 1.0
    %v2024 = vadd.f32 %v2007, 1.0
    %v2025 = vadd.f32 %v2009, 1.0
    %v2026 = vrcp.pop %v2010
    %v2027 = vmul.f32 %v2010, %v2026
    %v2028 = vsub.f32 1.0, %v2027
    %v2029 = vmul.f32 %v2026, %v2028
    %v2030 = vadd.f32 %v2026, %v2029
    %vm2031 = vweird.f32 %v2010
    %vm2032 = vweird.f32 %v2026
    %vm2033 = vmor %vm2031, %vm2032
    %v2034 = vsel %vm2033, %v2026, %v2030
    %v2035 = vand.u32 2147483647, %v2010
    %vm2036 = vcmp.eq.f32.partialorder %v2035, 8.507059e+37
    %v2037 = vand.u32 %v2010, 2147483648
    %v2038 = vor.u32 1.1754944e-38, %v2037
    %v2039 = vsel %vm2036, %v2038, %v2034
    %v2040 = vmul.f32 1.0, %v2039
    %v2041 = vrcp.pop %v2011
    %v2042 = vmul.f32 %v2011, %v2041
    %v2043 = vsub.f32 1.0, %v2042
    %v2044 = vmul.f32 %v2041, %v2043
    %v2045 = vadd.f32 %v2041, %v2044
    %vm2046 = vweird.f32 %v2011
    %vm2047 = vweird.f32 %v2041
    %vm2048 = vmor %vm2046, %vm2047
    %v2049 = vsel %vm2048, %v2041, %v2045
    %v2050 = vand.u32 2147483647, %v2011
    %vm2051 = vcmp.eq.f32.partialorder %v2050, 8.507059e+37
    %v2052 = vand.u32 %v2011, 2147483648
    %v2053 = vor.u32 1.1754944e-38, %v2052
    %v2054 = vsel %vm2051, %v2053, %v2049
    %v2055 = vmul.f32 1.0, %v2054
    %v2056 = vrcp.pop %v2012
    %v2057 = vmul.f32 %v2012, %v2056
    %v2058 = vsub.f32 1.0, %v2057
    %v2059 = vmul.f32 %v2056, %v2058
    %v2060 = vadd.f32 %v2056, %v2059
    %vm2061 = vweird.f32 %v2012
    %vm2062 = vweird.f32 %v2056
    %vm2063 = vmor %vm2061, %vm2062
    %v2064 = vsel %vm2063, %v2056, %v2060
    %v2065 = vand.u32 2147483647, %v2012
    %vm2066 = vcmp.eq.f32.partialorder %v2065, 8.507059e+37
    %v2067 = vand.u32 %v2012, 2147483648
    %v2068 = vor.u32 1.1754944e-38, %v2067
    %v2069 = vsel %vm2066, %v2068, %v2064
    %v2070 = vmul.f32 1.0, %v2069
    %v2071 = vrcp.pop %v2013
    %v2072 = vmul.f32 %v2013, %v2071
    %v2073 = vsub.f32 1.0, %v2072
    %v2074 = vmul.f32 %v2071, %v2073
    %v2075 = vadd.f32 %v2071, %v2074
    %vm2076 = vweird.f32 %v2013
    %vm2077 = vweird.f32 %v2071
    %vm2078 = vmor %vm2076, %vm2077
    %v2079 = vsel %vm2078, %v2071, %v2075
    %v2080 = vand.u32 2147483647, %v2013
    %vm2081 = vcmp.eq.f32.partialorder %v2080, 8.507059e+37
    %v2082 = vand.u32 %v2013, 2147483648
    %v2083 = vor.u32 1.1754944e-38, %v2082
    %v2084 = vsel %vm2081, %v2083, %v2079
    %v2085 = vmul.f32 1.0, %v2084
    %v2086 = vrcp.pop %v2014
    %v2087 = vmul.f32 %v2014, %v2086
    %v2088 = vsub.f32 1.0, %v2087
    %v2089 = vmul.f32 %v2086, %v2088
    %v2090 = vadd.f32 %v2086, %v2089
    %vm2091 = vweird.f32 %v2014
    %vm2092 = vweird.f32 %v2086
    %vm2093 = vmor %vm2091, %vm2092
    %v2094 = vsel %vm2093, %v2086, %v2090
    %v2095 = vand.u32 2147483647, %v2014
    %vm2096 = vcmp.eq.f32.partialorder %v2095, 8.507059e+37
    %v2097 = vand.u32 %v2014, 2147483648
    %v2098 = vor.u32 1.1754944e-38, %v2097
    %v2099 = vsel %vm2096, %v2098, %v2094
    %v2100 = vmul.f32 1.0, %v2099
    %v2101 = vrcp.pop %v2015
    %v2102 = vmul.f32 %v2015, %v2101
    %v2103 = vsub.f32 1.0, %v2102
    %v2104 = vmul.f32 %v2101, %v2103
    %v2105 = vadd.f32 %v2101, %v2104
    %vm2106 = vweird.f32 %v2015
    %vm2107 = vweird.f32 %v2101
    %vm2108 = vmor %vm2106, %vm2107
    %v2109 = vsel %vm2108, %v2101, %v2105
    %v2110 = vand.u32 2147483647, %v2015
    %vm2111 = vcmp.eq.f32.partialorder %v2110, 8.507059e+37
    %v2112 = vand.u32 %v2015, 2147483648
    %v2113 = vor.u32 1.1754944e-38, %v2112
    %v2114 = vsel %vm2111, %v2113, %v2109
    %v2115 = vmul.f32 1.0, %v2114
    %v2116 = vrcp.pop %v2016
    %v2117 = vmul.f32 %v2016, %v2116
    %v2118 = vsub.f32 1.0, %v2117
    %v2119 = vmul.f32 %v2116, %v2118
    %v2120 = vadd.f32 %v2116, %v2119
    %vm2121 = vweird.f32 %v2016
    %vm2122 = vweird.f32 %v2116
    %vm2123 = vmor %vm2121, %vm2122
    %v2124 = vsel %vm2123, %v2116, %v2120
    %v2125 = vand.u32 2147483647, %v2016
    %vm2126 = vcmp.eq.f32.partialorder %v2125, 8.507059e+37
    %v2127 = vand.u32 %v2016, 2147483648
    %v2128 = vor.u32 1.1754944e-38, %v2127
    %v2129 = vsel %vm2126, %v2128, %v2124
    %v2130 = vmul.f32 1.0, %v2129
    %v2131 = vrcp.pop %v2017
    %v2132 = vmul.f32 %v2017, %v2131
    %v2133 = vsub.f32 1.0, %v2132
    %v2134 = vmul.f32 %v2131, %v2133
    %v2135 = vadd.f32 %v2131, %v2134
    %vm2136 = vweird.f32 %v2017
    %vm2137 = vweird.f32 %v2131
    %vm2138 = vmor %vm2136, %vm2137
    %v2139 = vsel %vm2138, %v2131, %v2135
    %v2140 = vand.u32 2147483647, %v2017
    %vm2141 = vcmp.eq.f32.partialorder %v2140, 8.507059e+37
    %v2142 = vand.u32 %v2017, 2147483648
    %v2143 = vor.u32 1.1754944e-38, %v2142
    %v2144 = vsel %vm2141, %v2143, %v2139
    %v2145 = vmul.f32 1.0, %v2144
    %v2146 = vrcp.pop %v2018
    %v2147 = vmul.f32 %v2018, %v2146
    %v2148 = vsub.f32 1.0, %v2147
    %v2149 = vmul.f32 %v2146, %v2148
    %v2150 = vadd.f32 %v2146, %v2149
    %vm2151 = vweird.f32 %v2018
    %vm2152 = vweird.f32 %v2146
    %vm2153 = vmor %vm2151, %vm2152
    %v2154 = vsel %vm2153, %v2146, %v2150
    %v2155 = vand.u32 2147483647, %v2018
    %vm2156 = vcmp.eq.f32.partialorder %v2155, 8.507059e+37
    %v2157 = vand.u32 %v2018, 2147483648
    %v2158 = vor.u32 1.1754944e-38, %v2157
    %v2159 = vsel %vm2156, %v2158, %v2154
    %v2160 = vmul.f32 1.0, %v2159
    %v2161 = vrcp.pop %v2019
    %v2162 = vmul.f32 %v2019, %v2161
    %v2163 = vsub.f32 1.0, %v2162
    %v2164 = vmul.f32 %v2161, %v2163
    %v2165 = vadd.f32 %v2161, %v2164
    %vm2166 = vweird.f32 %v2019
    %vm2167 = vweird.f32 %v2161
    %vm2168 = vmor %vm2166, %vm2167
    %v2169 = vsel %vm2168, %v2161, %v2165
    %v2170 = vand.u32 2147483647, %v2019
    %vm2171 = vcmp.eq.f32.partialorder %v2170, 8.507059e+37
    %v2172 = vand.u32 %v2019, 2147483648
    %v2173 = vor.u32 1.1754944e-38, %v2172
    %v2174 = vsel %vm2171, %v2173, %v2169
    %v2175 = vmul.f32 1.0, %v2174
    %v2176 = vrcp.pop %v2020
    %v2177 = vmul.f32 %v2020, %v2176
    %v2178 = vsub.f32 1.0, %v2177
    %v2179 = vmul.f32 %v2176, %v2178
    %v2180 = vadd.f32 %v2176, %v2179
    %vm2181 = vweird.f32 %v2020
    %vm2182 = vweird.f32 %v2176
    %vm2183 = vmor %vm2181, %vm2182
    %v2184 = vsel %vm2183, %v2176, %v2180
    %v2185 = vand.u32 2147483647, %v2020
    %vm2186 = vcmp.eq.f32.partialorder %v2185, 8.507059e+37
    %v2187 = vand.u32 %v2020, 2147483648
    %v2188 = vor.u32 1.1754944e-38, %v2187
    %v2189 = vsel %vm2186, %v2188, %v2184
    %v2190 = vmul.f32 1.0, %v2189
    %v2191 = vrcp.pop %v2021
    %v2192 = vmul.f32 %v2021, %v2191
    %v2193 = vsub.f32 1.0, %v2192
    %v2194 = vmul.f32 %v2191, %v2193
    %v2195 = vadd.f32 %v2191, %v2194
    %vm2196 = vweird.f32 %v2021
    %vm2197 = vweird.f32 %v2191
    %vm2198 = vmor %vm2196, %vm2197
    %v2199 = vsel %vm2198, %v2191, %v2195
    %v2200 = vand.u32 2147483647, %v2021
    %vm2201 = vcmp.eq.f32.partialorder %v2200, 8.507059e+37
    %v2202 = vand.u32 %v2021, 2147483648
    %v2203 = vor.u32 1.1754944e-38, %v2202
    %v2204 = vsel %vm2201, %v2203, %v2199
    %v2205 = vmul.f32 1.0, %v2204
    %v2206 = vrcp.pop %v2022
    %v2207 = vmul.f32 %v2022, %v2206
    %v2208 = vsub.f32 1.0, %v2207
    %v2209 = vmul.f32 %v2206, %v2208
    %v2210 = vadd.f32 %v2206, %v2209
    %vm2211 = vweird.f32 %v2022
    %vm2212 = vweird.f32 %v2206
    %vm2213 = vmor %vm2211, %vm2212
    %v2214 = vsel %vm2213, %v2206, %v2210
    %v2215 = vand.u32 2147483647, %v2022
    %vm2216 = vcmp.eq.f32.partialorder %v2215, 8.507059e+37
    %v2217 = vand.u32 %v2022, 2147483648
    %v2218 = vor.u32 1.1754944e-38, %v2217
    %v2219 = vsel %vm2216, %v2218, %v2214
    %v2220 = vmul.f32 1.0, %v2219
    %v2221 = vrcp.pop %v2023
    %v2222 = vmul.f32 %v2023, %v2221
    %v2223 = vsub.f32 1.0, %v2222
    %v2224 = vmul.f32 %v2221, %v2223
    %v2225 = vadd.f32 %v2221, %v2224
    %vm2226 = vweird.f32 %v2023
    %vm2227 = vweird.f32 %v2221
    %vm2228 = vmor %vm2226, %vm2227
    %v2229 = vsel %vm2228, %v2221, %v2225
    %v2230 = vand.u32 2147483647, %v2023
    %vm2231 = vcmp.eq.f32.partialorder %v2230, 8.507059e+37
    %v2232 = vand.u32 %v2023, 2147483648
    %v2233 = vor.u32 1.1754944e-38, %v2232
    %v2234 = vsel %vm2231, %v2233, %v2229
    %v2235 = vmul.f32 1.0, %v2234
    %v2236 = vrcp.pop %v2024
    %v2237 = vmul.f32 %v2024, %v2236
    %v2238 = vsub.f32 1.0, %v2237
    %v2239 = vmul.f32 %v2236, %v2238
    %v2240 = vadd.f32 %v2236, %v2239
    %vm2241 = vweird.f32 %v2024
    %vm2242 = vweird.f32 %v2236
    %vm2243 = vmor %vm2241, %vm2242
    %v2244 = vsel %vm2243, %v2236, %v2240
    %v2245 = vand.u32 2147483647, %v2024
    %vm2246 = vcmp.eq.f32.partialorder %v2245, 8.507059e+37
    %v2247 = vand.u32 %v2024, 2147483648
    %v2248 = vor.u32 1.1754944e-38, %v2247
    %v2249 = vsel %vm2246, %v2248, %v2244
    %v2250 = vmul.f32 1.0, %v2249
    %v2251 = vrcp.pop %v2025
    %v2252 = vmul.f32 %v2025, %v2251
    %v2253 = vsub.f32 1.0, %v2252
    %v2254 = vmul.f32 %v2251, %v2253
    %v2255 = vadd.f32 %v2251, %v2254
    %vm2256 = vweird.f32 %v2025
    %vm2257 = vweird.f32 %v2251
    %vm2258 = vmor %vm2256, %vm2257
    %v2259 = vsel %vm2258, %v2251, %v2255
    %v2260 = vand.u32 2147483647, %v2025
    %vm2261 = vcmp.eq.f32.partialorder %v2260, 8.507059e+37
    %v2262 = vand.u32 %v2025, 2147483648
    %v2263 = vor.u32 1.1754944e-38, %v2262
    %v2264 = vsel %vm2261, %v2263, %v2259
    %v2265 = vmul.f32 1.0, %v2264
    %v2266 = vmul.f32 %v1725, %v2040
    %v2267 = vmul.f32 %v1801, %v2055
    %v2268 = vmul.f32 %v1877, %v2070
    %v2269 = vmul.f32 %v1953, %v2085
    %v2270 = vmul.f32 %v1727, %v2100
    %v2271 = vmul.f32 %v1803, %v2115
    %v2272 = vmul.f32 %v1879, %v2130
    %v2273 = vmul.f32 %v1955, %v2145
    %v2274 = vmul.f32 %v1730, %v2160
    %v2275 = vmul.f32 %v1806, %v2175
    %v2276 = vmul.f32 %v1882, %v2190
    %v2277 = vmul.f32 %v1958, %v2205
    %v2278 = vmul.f32 %v1732, %v2220
    %v2279 = vmul.f32 %v1808, %v2235
    %v2280 = vmul.f32 %v1884, %v2250
    %v2281 = vmul.f32 %v1960, %v2265
    %v2282 = vpack.c.bf16 %v2270, %v2266
    %v2283 = vpack.c.bf16 %v2271, %v2267
    %v2284 = vpack.c.bf16 %v2272, %v2268
    %v2285 = vpack.c.bf16 %v2273, %v2269
    %v2286 = vpack.c.bf16 %v2278, %v2274
    %v2287 = vpack.c.bf16 %v2279, %v2275
    %v2288 = vpack.c.bf16 %v2280, %v2276
    %v2289 = vpack.c.bf16 %v2281, %v2277
    %v2290 = vld [vmem:[#allocation10] sm:$0xf]
    %v2291 = vld [vmem:[#allocation10 + $0x4] sm:$0xf]
    %v2292 = vld [vmem:[#allocation10 + $0x8] sm:$0xf]
    %v2293 = vld [vmem:[#allocation10 + $0xc] sm:$0xf]
    %v2294 = vld [vmem:[#allocation10 + $0x10] sm:$0xf]
    %v2295 = vld [vmem:[#allocation10 + $0x14] sm:$0xf]
    %v2296 = vld [vmem:[#allocation10 + $0x18] sm:$0xf]
    %v2297 = vld [vmem:[#allocation10 + $0x1c] sm:$0xf]
    %v2298 = vld [vmem:[#allocation10 + $0x20] sm:$0xf]
    %v2299 = vld [vmem:[#allocation10 + $0x24] sm:$0xf]
    %v2300 = vld [vmem:[#allocation10 + $0x28] sm:$0xf]
    %v2301 = vld [vmem:[#allocation10 + $0x2c] sm:$0xf]
    %v2302 = vld [vmem:[#allocation10 + $0x30] sm:$0xf]
    %v2303 = vld [vmem:[#allocation10 + $0x34] sm:$0xf]
    %v2304 = vld [vmem:[#allocation10 + $0x38] sm:$0xf]
    %v2305 = vld [vmem:[#allocation10 + $0x3c] sm:$0xf]
    %v2306 = vld [vmem:[#allocation10 + $0x40] sm:$0xf]
    %v2307 = vld [vmem:[#allocation10 + $0x44] sm:$0xf]
    %v2308 = vld [vmem:[#allocation10 + $0x48] sm:$0xf]
    %v2309 = vld [vmem:[#allocation10 + $0x4c] sm:$0xf]
    %v2310 = vld [vmem:[#allocation10 + $0x50] sm:$0xf]
    %v2311 = vld [vmem:[#allocation10 + $0x54] sm:$0xf]
    %v2312 = vld [vmem:[#allocation10 + $0x58] sm:$0xf]
    %v2313 = vld [vmem:[#allocation10 + $0x5c] sm:$0xf]
    %v2314 = vld [vmem:[#allocation10 + $0x60] sm:$0xf]
    %v2315 = vld [vmem:[#allocation10 + $0x64] sm:$0xf]
    %v2316 = vld [vmem:[#allocation10 + $0x68] sm:$0xf]
    %v2317 = vld [vmem:[#allocation10 + $0x6c] sm:$0xf]
    %v2318 = vld [vmem:[#allocation10 + $0x70] sm:$0xf]
    %v2319 = vld [vmem:[#allocation10 + $0x74] sm:$0xf]
    %v2320 = vld [vmem:[#allocation10 + $0x78] sm:$0xf]
    %v2321 = vld [vmem:[#allocation10 + $0x7c] sm:$0xf]
    %v2322 = vld [vmem:[#allocation10 + $0x80] sm:$0xf]
    %v2323 = vld [vmem:[#allocation10 + $0x84] sm:$0xf]
    %v2324 = vld [vmem:[#allocation10 + $0x88] sm:$0xf]
    %v2325 = vld [vmem:[#allocation10 + $0x8c] sm:$0xf]
    %v2326 = vld [vmem:[#allocation10 + $0x90] sm:$0xf]
    %v2327 = vld [vmem:[#allocation10 + $0x94] sm:$0xf]
    %v2328 = vld [vmem:[#allocation10 + $0x98] sm:$0xf]
    %v2329 = vld [vmem:[#allocation10 + $0x9c] sm:$0xf]
    %v2330 = vld [vmem:[#allocation10 + $0xa0] sm:$0xf]
    %v2331 = vld [vmem:[#allocation10 + $0xa4] sm:$0xf]
    %v2332 = vld [vmem:[#allocation10 + $0xa8] sm:$0xf]
    %v2333 = vld [vmem:[#allocation10 + $0xac] sm:$0xf]
    %v2334 = vld [vmem:[#allocation10 + $0xb0] sm:$0xf]
    %v2335 = vld [vmem:[#allocation10 + $0xb4] sm:$0xf]
    %v2336 = vld [vmem:[#allocation10 + $0xb8] sm:$0xf]
    %v2337 = vld [vmem:[#allocation10 + $0xbc] sm:$0xf]
    %v2338 = vld [vmem:[#allocation10 + $0xc0] sm:$0xf]
    %v2339 = vld [vmem:[#allocation10 + $0xc4] sm:$0xf]
    %v2340 = vld [vmem:[#allocation10 + $0xc8] sm:$0xf]
    %v2341 = vld [vmem:[#allocation10 + $0xcc] sm:$0xf]
    %v2342 = vld [vmem:[#allocation10 + $0xd0] sm:$0xf]
    %v2343 = vld [vmem:[#allocation10 + $0xd4] sm:$0xf]
    %v2344 = vld [vmem:[#allocation10 + $0xd8] sm:$0xf]
    %v2345 = vld [vmem:[#allocation10 + $0xdc] sm:$0xf]
    %v2346 = vld [vmem:[#allocation10 + $0xe0] sm:$0xf]
    %v2347 = vld [vmem:[#allocation10 + $0xe4] sm:$0xf]
    %v2348 = vld [vmem:[#allocation10 + $0xe8] sm:$0xf]
    %v2349 = vld [vmem:[#allocation10 + $0xec] sm:$0xf]
    %v2350 = vld [vmem:[#allocation10 + $0xf0] sm:$0xf]
    %v2351 = vld [vmem:[#allocation10 + $0xf4] sm:$0xf]
    %v2352 = vld [vmem:[#allocation10 + $0xf8] sm:$0xf]
    %v2353 = vld [vmem:[#allocation10 + $0xfc] sm:$0xf]
    %v2354 = vld [vmem:[#allocation11] sm:$0x1]
    %v2356 = vperm.slane %v2354, 0
    %v2422 = vunpack.c.l.b16 %v2290
    %v2423 = vunpack.c.l.b16 %v2291
    %v2424 = vunpack.c.l.b16 %v2292
    %v2425 = vunpack.c.l.b16 %v2293
    %v2426 = vunpack.c.l.b16 %v2294
    %v2427 = vunpack.c.l.b16 %v2295
    %v2428 = vunpack.c.l.b16 %v2296
    %v2429 = vunpack.c.l.b16 %v2297
    %v2430 = vunpack.c.l.b16 %v2298
    %v2431 = vunpack.c.l.b16 %v2299
    %v2432 = vunpack.c.l.b16 %v2300
    %v2433 = vunpack.c.l.b16 %v2301
    %v2434 = vunpack.c.l.b16 %v2302
    %v2435 = vunpack.c.l.b16 %v2303
    %v2436 = vunpack.c.l.b16 %v2304
    %v2437 = vunpack.c.l.b16 %v2305
    %v2438 = vunpack.c.l.b16 %v2306
    %v2439 = vunpack.c.l.b16 %v2307
    %v2440 = vunpack.c.l.b16 %v2308
    %v2441 = vunpack.c.l.b16 %v2309
    %v2442 = vunpack.c.l.b16 %v2310
    %v2443 = vunpack.c.l.b16 %v2311
    %v2444 = vunpack.c.l.b16 %v2312
    %v2445 = vunpack.c.l.b16 %v2313
    %v2446 = vunpack.c.l.b16 %v2314
    %v2447 = vunpack.c.l.b16 %v2315
    %v2448 = vunpack.c.l.b16 %v2316
    %v2449 = vunpack.c.l.b16 %v2317
    %v2450 = vunpack.c.l.b16 %v2318
    %v2451 = vunpack.c.l.b16 %v2319
    %v2452 = vunpack.c.l.b16 %v2320
    %v2453 = vunpack.c.l.b16 %v2321
    %v2454 = vunpack.c.l.b16 %v2322
    %v2455 = vunpack.c.l.b16 %v2323
    %v2456 = vunpack.c.l.b16 %v2324
    %v2457 = vunpack.c.l.b16 %v2325
    %v2458 = vunpack.c.l.b16 %v2326
    %v2459 = vunpack.c.l.b16 %v2327
    %v2460 = vunpack.c.l.b16 %v2328
    %v2461 = vunpack.c.l.b16 %v2329
    %v2462 = vunpack.c.l.b16 %v2330
    %v2463 = vunpack.c.l.b16 %v2331
    %v2464 = vunpack.c.l.b16 %v2332
    %v2465 = vunpack.c.l.b16 %v2333
    %v2466 = vunpack.c.l.b16 %v2334
    %v2467 = vunpack.c.l.b16 %v2335
    %v2468 = vunpack.c.l.b16 %v2336
    %v2469 = vunpack.c.l.b16 %v2337
    %v2470 = vunpack.c.l.b16 %v2338
    %v2471 = vunpack.c.l.b16 %v2339
    %v2472 = vunpack.c.l.b16 %v2340
    %v2473 = vunpack.c.l.b16 %v2341
    %v2474 = vunpack.c.l.b16 %v2342
    %v2475 = vunpack.c.l.b16 %v2343
    %v2476 = vunpack.c.l.b16 %v2344
    %v2477 = vunpack.c.l.b16 %v2345
    %v2478 = vunpack.c.l.b16 %v2346
    %v2479 = vunpack.c.l.b16 %v2347
    %v2480 = vunpack.c.l.b16 %v2348
    %v2481 = vunpack.c.l.b16 %v2349
    %v2482 = vunpack.c.l.b16 %v2350
    %v2483 = vunpack.c.l.b16 %v2351
    %v2484 = vunpack.c.l.b16 %v2352
    %v2485 = vunpack.c.l.b16 %v2353
    %v2486 = vpack.c.b16 %v2423, %v2422
    %v2487 = vpack.c.b16 %v2425, %v2424
    %v2488 = vpack.c.b16 %v2427, %v2426
    %v2489 = vpack.c.b16 %v2429, %v2428
    %v2490 = vpack.c.b16 %v2431, %v2430
    %v2491 = vpack.c.b16 %v2433, %v2432
    %v2492 = vpack.c.b16 %v2435, %v2434
    %v2493 = vpack.c.b16 %v2437, %v2436
    %v2494 = vpack.c.b16 %v2439, %v2438
    %v2495 = vpack.c.b16 %v2441, %v2440
    %v2496 = vpack.c.b16 %v2443, %v2442
    %v2497 = vpack.c.b16 %v2445, %v2444
    %v2498 = vpack.c.b16 %v2447, %v2446
    %v2499 = vpack.c.b16 %v2449, %v2448
    %v2500 = vpack.c.b16 %v2451, %v2450
    %v2501 = vpack.c.b16 %v2453, %v2452
    %v2502 = vpack.c.b16 %v2455, %v2454
    %v2503 = vpack.c.b16 %v2457, %v2456
    %v2504 = vpack.c.b16 %v2459, %v2458
    %v2505 = vpack.c.b16 %v2461, %v2460
    %v2506 = vpack.c.b16 %v2463, %v2462
    %v2507 = vpack.c.b16 %v2465, %v2464
    %v2508 = vpack.c.b16 %v2467, %v2466
    %v2509 = vpack.c.b16 %v2469, %v2468
    %v2510 = vpack.c.b16 %v2471, %v2470
    %v2511 = vpack.c.b16 %v2473, %v2472
    %v2512 = vpack.c.b16 %v2475, %v2474
    %v2513 = vpack.c.b16 %v2477, %v2476
    %v2514 = vpack.c.b16 %v2479, %v2478
    %v2515 = vpack.c.b16 %v2481, %v2480
    %v2516 = vpack.c.b16 %v2483, %v2482
    %v2517 = vpack.c.b16 %v2485, %v2484
    %2550 = vmatpush.bf16.msra.mxu0 %v2493
    %2551 = vmatpush.bf16.msra.mxu0 %v2492
    %2552 = vmatpush.bf16.msra.mxu0 %v2491
    %2553 = vmatpush.bf16.msra.mxu0 %v2490
    %2554 = vmatpush.bf16.msra.mxu0 %v2489
    %2555 = vmatpush.bf16.msra.mxu0 %v2488
    %2556 = vmatpush.bf16.msra.mxu0 %v2487
    %2557 = vmatpush.bf16.msra.mxu0 %v2486
    %2558 = vmatmul.bf16.gmra.mxu0 %v2282
    %v2559 = vpop.f32.mrf.mxu0
    %v2560 = vadd.f32 %v2356, %v2559
    %v2561 = vpop.f32.mrf.mxu0
    %v2562 = vadd.f32 %v2356, %v2561
    %2563 = vmatmul.bf16.gmra.mxu0 %v2286
    %v2564 = vpop.f32.mrf.mxu0
    %v2565 = vadd.f32 %v2356, %v2564
    %v2566 = vpop.f32.mrf.mxu0
    %v2567 = vadd.f32 %v2356, %v2566
    %2568 = vdwg.mxu0
    %2569 = vmatpush.bf16.msra.mxu0 %v2501
    %2570 = vmatpush.bf16.msra.mxu0 %v2500
    %2571 = vmatpush.bf16.msra.mxu0 %v2499
    %2572 = vmatpush.bf16.msra.mxu0 %v2498
    %2573 = vmatpush.bf16.msra.mxu0 %v2497
    %2574 = vmatpush.bf16.msra.mxu0 %v2496
    %2575 = vmatpush.bf16.msra.mxu0 %v2495
    %2576 = vmatpush.bf16.msra.mxu0 %v2494
    %2577 = vmatmul.bf16.gmra.mxu0 %v2283
    %v2578 = vpop.f32.mrf.mxu0
    %v2579 = vadd.f32 %v2560, %v2578
    %v2580 = vpop.f32.mrf.mxu0
    %v2581 = vadd.f32 %v2562, %v2580
    %2582 = vmatmul.bf16.gmra.mxu0 %v2287
    %v2583 = vpop.f32.mrf.mxu0
    %v2584 = vadd.f32 %v2565, %v2583
    %v2585 = vpop.f32.mrf.mxu0
    %v2586 = vadd.f32 %v2567, %v2585
    %2587 = vdwg.mxu0
    %2588 = vmatpush.bf16.msra.mxu0 %v2509
    %2589 = vmatpush.bf16.msra.mxu0 %v2508
    %2590 = vmatpush.bf16.msra.mxu0 %v2507
    %2591 = vmatpush.bf16.msra.mxu0 %v2506
    %2592 = vmatpush.bf16.msra.mxu0 %v2505
    %2593 = vmatpush.bf16.msra.mxu0 %v2504
    %2594 = vmatpush.bf16.msra.mxu0 %v2503
    %2595 = vmatpush.bf16.msra.mxu0 %v2502
    %2596 = vmatmul.bf16.gmra.mxu0 %v2284
    %v2597 = vpop.f32.mrf.mxu0
    %v2598 = vadd.f32 %v2579, %v2597
    %v2599 = vpop.f32.mrf.mxu0
    %v2600 = vadd.f32 %v2581, %v2599
    %2601 = vmatmul.bf16.gmra.mxu0 %v2288
    %v2602 = vpop.f32.mrf.mxu0
    %v2603 = vadd.f32 %v2584, %v2602
    %v2604 = vpop.f32.mrf.mxu0
    %v2605 = vadd.f32 %v2586, %v2604
    %2606 = vdwg.mxu0
    %2607 = vmatpush.bf16.msra.mxu0 %v2517
    %2608 = vmatpush.bf16.msra.mxu0 %v2516
    %2609 = vmatpush.bf16.msra.mxu0 %v2515
    %2610 = vmatpush.bf16.msra.mxu0 %v2514
    %2611 = vmatpush.bf16.msra.mxu0 %v2513
    %2612 = vmatpush.bf16.msra.mxu0 %v2512
    %2613 = vmatpush.bf16.msra.mxu0 %v2511
    %2614 = vmatpush.bf16.msra.mxu0 %v2510
    %2615 = vmatmul.bf16.gmra.mxu0 %v2285
    %v2616 = vpop.f32.mrf.mxu0
    %v2617 = vadd.f32 %v2598, %v2616
    %v2618 = vpop.f32.mrf.mxu0
    %v2619 = vadd.f32 %v2600, %v2618
    %2620 = vmatmul.bf16.gmra.mxu0 %v2289
    %v2621 = vpop.f32.mrf.mxu0
    %v2622 = vadd.f32 %v2603, %v2621
    %v2623 = vpop.f32.mrf.mxu0
    %v2624 = vadd.f32 %v2605, %v2623
    %2625 = vdwg.mxu0
    %v2626 = vld [vmem:[#allocation13] sm:$0xff]
    %v2627 = vld [vmem:[#allocation13 + $0x8] sm:$0xff]
    %v2628 = vld [vmem:[#allocation13 + $0x10] sm:$0xff]
    %v2629 = vld [vmem:[#allocation13 + $0x18] sm:$0xff]
    %v2630 = vld [vmem:[#allocation13 + $0x20] sm:$0xff]
    %v2631 = vld [vmem:[#allocation13 + $0x28] sm:$0xff]
    %v2632 = vld [vmem:[#allocation13 + $0x30] sm:$0xff]
    %v2633 = vld [vmem:[#allocation13 + $0x38] sm:$0xff]
    %v2634 = vld [vmem:[#allocation13 + $0x40] sm:$0xff]
    %v2635 = vld [vmem:[#allocation13 + $0x48] sm:$0xff]
    %v2636 = vld [vmem:[#allocation13 + $0x50] sm:$0xff]
    %v2637 = vld [vmem:[#allocation13 + $0x58] sm:$0xff]
    %v2638 = vld [vmem:[#allocation13 + $0x60] sm:$0xff]
    %v2639 = vld [vmem:[#allocation13 + $0x68] sm:$0xff]
    %v2640 = vld [vmem:[#allocation13 + $0x70] sm:$0xff]
    %v2641 = vld [vmem:[#allocation13 + $0x78] sm:$0xff]
    %v2642 = vld [vmem:[#allocation13 + $0x80] sm:$0xff]
    %v2643 = vld [vmem:[#allocation13 + $0x88] sm:$0xff]
    %v2644 = vld [vmem:[#allocation13 + $0x90] sm:$0xff]
    %v2645 = vld [vmem:[#allocation13 + $0x98] sm:$0xff]
    %v2646 = vld [vmem:[#allocation13 + $0xa0] sm:$0xff]
    %v2647 = vld [vmem:[#allocation13 + $0xa8] sm:$0xff]
    %v2648 = vld [vmem:[#allocation13 + $0xb0] sm:$0xff]
    %v2649 = vld [vmem:[#allocation13 + $0xb8] sm:$0xff]
    %v2650 = vld [vmem:[#allocation13 + $0xc0] sm:$0xff]
    %v2651 = vld [vmem:[#allocation13 + $0xc8] sm:$0xff]
    %v2652 = vld [vmem:[#allocation13 + $0xd0] sm:$0xff]
    %v2653 = vld [vmem:[#allocation13 + $0xd8] sm:$0xff]
    %v2654 = vld [vmem:[#allocation13 + $0xe0] sm:$0xff]
    %v2655 = vld [vmem:[#allocation13 + $0xe8] sm:$0xff]
    %v2656 = vld [vmem:[#allocation13 + $0xf0] sm:$0xff]
    %v2657 = vld [vmem:[#allocation13 + $0xf8] sm:$0xff]
    %v2658 = vld [vmem:[%s13] sm:$0xf]
    %v2660 = vperm.slane %v2658, 0
    %v2661 = vperm.slane %v2658, 1
    %v2662 = vperm.slane %v2658, 2
    %v2663 = vperm.slane %v2658, 3
    %v2700 = vunpack.c.l.b16 %v2626
    %v2701 = vunpack.c.h.b16 %v2626
    %v2702 = vunpack.c.l.b16 %v2627
    %v2703 = vunpack.c.h.b16 %v2627
    %v2704 = vunpack.c.l.b16 %v2628
    %v2705 = vunpack.c.h.b16 %v2628
    %v2706 = vunpack.c.l.b16 %v2629
    %v2707 = vunpack.c.h.b16 %v2629
    %v2708 = vunpack.c.l.b16 %v2630
    %v2709 = vunpack.c.h.b16 %v2630
    %v2710 = vunpack.c.l.b16 %v2631
    %v2711 = vunpack.c.h.b16 %v2631
    %v2712 = vunpack.c.l.b16 %v2632
    %v2713 = vunpack.c.h.b16 %v2632
    %v2714 = vunpack.c.l.b16 %v2633
    %v2715 = vunpack.c.h.b16 %v2633
    %v2716 = vunpack.c.l.b16 %v2634
    %v2717 = vunpack.c.h.b16 %v2634
    %v2718 = vunpack.c.l.b16 %v2635
    %v2719 = vunpack.c.h.b16 %v2635
    %v2720 = vunpack.c.l.b16 %v2636
    %v2721 = vunpack.c.h.b16 %v2636
    %v2722 = vunpack.c.l.b16 %v2637
    %v2723 = vunpack.c.h.b16 %v2637
    %v2724 = vunpack.c.l.b16 %v2638
    %v2725 = vunpack.c.h.b16 %v2638
    %v2726 = vunpack.c.l.b16 %v2639
    %v2727 = vunpack.c.h.b16 %v2639
    %v2728 = vunpack.c.l.b16 %v2640
    %v2729 = vunpack.c.h.b16 %v2640
    %v2730 = vunpack.c.l.b16 %v2641
    %v2731 = vunpack.c.h.b16 %v2641
    %v2732 = vunpack.c.l.b16 %v2642
    %v2733 = vunpack.c.h.b16 %v2642
    %v2734 = vunpack.c.l.b16 %v2643
    %v2735 = vunpack.c.h.b16 %v2643
    %v2736 = vunpack.c.l.b16 %v2644
    %v2737 = vunpack.c.h.b16 %v2644
    %v2738 = vunpack.c.l.b16 %v2645
    %v2739 = vunpack.c.h.b16 %v2645
    %v2740 = vunpack.c.l.b16 %v2646
    %v2741 = vunpack.c.h.b16 %v2646
    %v2742 = vunpack.c.l.b16 %v2647
    %v2743 = vunpack.c.h.b16 %v2647
    %v2744 = vunpack.c.l.b16 %v2648
    %v2745 = vunpack.c.h.b16 %v2648
    %v2746 = vunpack.c.l.b16 %v2649
    %v2747 = vunpack.c.h.b16 %v2649
    %v2748 = vunpack.c.l.b16 %v2650
    %v2749 = vunpack.c.h.b16 %v2650
    %v2750 = vunpack.c.l.b16 %v2651
    %v2751 = vunpack.c.h.b16 %v2651
    %v2752 = vunpack.c.l.b16 %v2652
    %v2753 = vunpack.c.h.b16 %v2652
    %v2754 = vunpack.c.l.b16 %v2653
    %v2755 = vunpack.c.h.b16 %v2653
    %v2756 = vunpack.c.l.b16 %v2654
    %v2757 = vunpack.c.h.b16 %v2654
    %v2758 = vunpack.c.l.b16 %v2655
    %v2759 = vunpack.c.h.b16 %v2655
    %v2760 = vunpack.c.l.b16 %v2656
    %v2761 = vunpack.c.h.b16 %v2656
    %v2762 = vunpack.c.l.b16 %v2657
    %v2763 = vunpack.c.h.b16 %v2657
    %v2764 = vpack.c.b16 %v2704, %v2700
    %v2765 = vpack.c.b16 %v2705, %v2701
    %v2766 = vpack.c.b16 %v2706, %v2702
    %v2767 = vpack.c.b16 %v2707, %v2703
    %v2768 = vpack.c.b16 %v2712, %v2708
    %v2769 = vpack.c.b16 %v2713, %v2709
    %v2770 = vpack.c.b16 %v2714, %v2710
    %v2771 = vpack.c.b16 %v2715, %v2711
    %v2772 = vpack.c.b16 %v2720, %v2716
    %v2773 = vpack.c.b16 %v2721, %v2717
    %v2774 = vpack.c.b16 %v2722, %v2718
    %v2775 = vpack.c.b16 %v2723, %v2719
    %v2776 = vpack.c.b16 %v2728, %v2724
    %v2777 = vpack.c.b16 %v2729, %v2725
    %v2778 = vpack.c.b16 %v2730, %v2726
    %v2779 = vpack.c.b16 %v2731, %v2727
    %v2780 = vpack.c.b16 %v2736, %v2732
    %v2781 = vpack.c.b16 %v2737, %v2733
    %v2782 = vpack.c.b16 %v2738, %v2734
    %v2783 = vpack.c.b16 %v2739, %v2735
    %v2784 = vpack.c.b16 %v2744, %v2740
    %v2785 = vpack.c.b16 %v2745, %v2741
    %v2786 = vpack.c.b16 %v2746, %v2742
    %v2787 = vpack.c.b16 %v2747, %v2743
    %v2788 = vpack.c.b16 %v2752, %v2748
    %v2789 = vpack.c.b16 %v2753, %v2749
    %v2790 = vpack.c.b16 %v2754, %v2750
    %v2791 = vpack.c.b16 %v2755, %v2751
    %v2792 = vpack.c.b16 %v2760, %v2756
    %v2793 = vpack.c.b16 %v2761, %v2757
    %v2794 = vpack.c.b16 %v2762, %v2758
    %v2795 = vpack.c.b16 %v2763, %v2759
    %2828 = vmatpush.bf16.msra.mxu0 %v2792
    %2829 = vmatpush.bf16.msra.mxu0 %v2788
    %2830 = vmatpush.bf16.msra.mxu0 %v2784
    %2831 = vmatpush.bf16.msra.mxu0 %v2780
    %2832 = vmatpush.bf16.msra.mxu0 %v2776
    %2833 = vmatpush.bf16.msra.mxu0 %v2772
    %2834 = vmatpush.bf16.msra.mxu0 %v2768
    %2835 = vmatpush.bf16.msra.mxu0 %v2764
    %2836 = vmatmul.bf16.gmra.mxu0 %v273
    %v2837 = vpop.f32.mrf.mxu0
    %v2838 = vadd.f32 %v2660, %v2837
    %v2839 = vpop.f32.mrf.mxu0
    %v2840 = vadd.f32 %v2660, %v2839
    %2841 = vdwg.mxu0
    %2842 = vmatpush.bf16.msra.mxu0 %v2793
    %2843 = vmatpush.bf16.msra.mxu0 %v2789
    %2844 = vmatpush.bf16.msra.mxu0 %v2785
    %2845 = vmatpush.bf16.msra.mxu0 %v2781
    %2846 = vmatpush.bf16.msra.mxu0 %v2777
    %2847 = vmatpush.bf16.msra.mxu0 %v2773
    %2848 = vmatpush.bf16.msra.mxu0 %v2769
    %2849 = vmatpush.bf16.msra.mxu0 %v2765
    %2850 = vmatmul.bf16.gmra.mxu0 %v273
    %v2851 = vpop.f32.mrf.mxu0
    %v2852 = vadd.f32 %v2661, %v2851
    %v2853 = vpop.f32.mrf.mxu0
    %v2854 = vadd.f32 %v2661, %v2853
    %2855 = vdwg.mxu0
    %2856 = vmatpush.bf16.msra.mxu0 %v2794
    %2857 = vmatpush.bf16.msra.mxu0 %v2790
    %2858 = vmatpush.bf16.msra.mxu0 %v2786
    %2859 = vmatpush.bf16.msra.mxu0 %v2782
    %2860 = vmatpush.bf16.msra.mxu0 %v2778
    %2861 = vmatpush.bf16.msra.mxu0 %v2774
    %2862 = vmatpush.bf16.msra.mxu0 %v2770
    %2863 = vmatpush.bf16.msra.mxu0 %v2766
    %2864 = vmatmul.bf16.gmra.mxu0 %v273
    %v2865 = vpop.f32.mrf.mxu0
    %v2866 = vadd.f32 %v2662, %v2865
    %v2867 = vpop.f32.mrf.mxu0
    %v2868 = vadd.f32 %v2662, %v2867
    %2869 = vdwg.mxu0
    %2870 = vmatpush.bf16.msra.mxu0 %v2795
    %2871 = vmatpush.bf16.msra.mxu0 %v2791
    %2872 = vmatpush.bf16.msra.mxu0 %v2787
    %2873 = vmatpush.bf16.msra.mxu0 %v2783
    %2874 = vmatpush.bf16.msra.mxu0 %v2779
    %2875 = vmatpush.bf16.msra.mxu0 %v2775
    %2876 = vmatpush.bf16.msra.mxu0 %v2771
    %2877 = vmatpush.bf16.msra.mxu0 %v2767
    %2878 = vmatmul.bf16.gmra.mxu0 %v273
    %v2879 = vpop.f32.mrf.mxu0
    %v2880 = vadd.f32 %v2663, %v2879
    %v2881 = vpop.f32.mrf.mxu0
    %v2882 = vadd.f32 %v2663, %v2881
    %2883 = vdwg.mxu0
    %v2884 = vxor.u32 %v2838, 2147483648
    %v2885 = vxor.u32 %v2852, 2147483648
    %v2886 = vxor.u32 %v2866, 2147483648
    %v2887 = vxor.u32 %v2880, 2147483648
    %v2888 = vxor.u32 %v2840, 2147483648
    %v2889 = vxor.u32 %v2854, 2147483648
    %v2890 = vxor.u32 %v2868, 2147483648
    %v2891 = vxor.u32 %v2882, 2147483648
    %v2892 = vmul.f32 %v2884, 1.442695
    %v2893 = vpow.pop %v2892
    %v2894 = vmul.f32 %v2885, 1.442695
    %v2895 = vpow.pop %v2894
    %v2896 = vmul.f32 %v2886, 1.442695
    %v2897 = vpow.pop %v2896
    %v2898 = vmul.f32 %v2887, 1.442695
    %v2899 = vpow.pop %v2898
    %v2900 = vmul.f32 %v2888, 1.442695
    %v2901 = vpow.pop %v2900
    %v2902 = vmul.f32 %v2889, 1.442695
    %v2903 = vpow.pop %v2902
    %v2904 = vmul.f32 %v2890, 1.442695
    %v2905 = vpow.pop %v2904
    %v2906 = vmul.f32 %v2891, 1.442695
    %v2907 = vpow.pop %v2906
    %v2908 = vadd.f32 %v2893, 1.0
    %v2909 = vadd.f32 %v2895, 1.0
    %v2910 = vadd.f32 %v2897, 1.0
    %v2911 = vadd.f32 %v2899, 1.0
    %v2912 = vadd.f32 %v2901, 1.0
    %v2913 = vadd.f32 %v2903, 1.0
    %v2914 = vadd.f32 %v2905, 1.0
    %v2915 = vadd.f32 %v2907, 1.0
    %v2916 = vrcp.pop %v2908
    %v2917 = vmul.f32 %v2908, %v2916
    %v2918 = vsub.f32 1.0, %v2917
    %v2919 = vmul.f32 %v2916, %v2918
    %v2920 = vadd.f32 %v2916, %v2919
    %vm2921 = vweird.f32 %v2908
    %vm2922 = vweird.f32 %v2916
    %vm2923 = vmor %vm2921, %vm2922
    %v2924 = vsel %vm2923, %v2916, %v2920
    %v2925 = vand.u32 2147483647, %v2908
    %vm2926 = vcmp.eq.f32.partialorder %v2925, 8.507059e+37
    %v2927 = vand.u32 %v2908, 2147483648
    %v2928 = vor.u32 1.1754944e-38, %v2927
    %v2929 = vsel %vm2926, %v2928, %v2924
    %v2930 = vmul.f32 1.0, %v2929
    %v2931 = vrcp.pop %v2909
    %v2932 = vmul.f32 %v2909, %v2931
    %v2933 = vsub.f32 1.0, %v2932
    %v2934 = vmul.f32 %v2931, %v2933
    %v2935 = vadd.f32 %v2931, %v2934
    %vm2936 = vweird.f32 %v2909
    %vm2937 = vweird.f32 %v2931
    %vm2938 = vmor %vm2936, %vm2937
    %v2939 = vsel %vm2938, %v2931, %v2935
    %v2940 = vand.u32 2147483647, %v2909
    %vm2941 = vcmp.eq.f32.partialorder %v2940, 8.507059e+37
    %v2942 = vand.u32 %v2909, 2147483648
    %v2943 = vor.u32 1.1754944e-38, %v2942
    %v2944 = vsel %vm2941, %v2943, %v2939
    %v2945 = vmul.f32 1.0, %v2944
    %v2946 = vrcp.pop %v2910
    %v2947 = vmul.f32 %v2910, %v2946
    %v2948 = vsub.f32 1.0, %v2947
    %v2949 = vmul.f32 %v2946, %v2948
    %v2950 = vadd.f32 %v2946, %v2949
    %vm2951 = vweird.f32 %v2910
    %vm2952 = vweird.f32 %v2946
    %vm2953 = vmor %vm2951, %vm2952
    %v2954 = vsel %vm2953, %v2946, %v2950
    %v2955 = vand.u32 2147483647, %v2910
    %vm2956 = vcmp.eq.f32.partialorder %v2955, 8.507059e+37
    %v2957 = vand.u32 %v2910, 2147483648
    %v2958 = vor.u32 1.1754944e-38, %v2957
    %v2959 = vsel %vm2956, %v2958, %v2954
    %v2960 = vmul.f32 1.0, %v2959
    %v2961 = vrcp.pop %v2911
    %v2962 = vmul.f32 %v2911, %v2961
    %v2963 = vsub.f32 1.0, %v2962
    %v2964 = vmul.f32 %v2961, %v2963
    %v2965 = vadd.f32 %v2961, %v2964
    %vm2966 = vweird.f32 %v2911
    %vm2967 = vweird.f32 %v2961
    %vm2968 = vmor %vm2966, %vm2967
    %v2969 = vsel %vm2968, %v2961, %v2965
    %v2970 = vand.u32 2147483647, %v2911
    %vm2971 = vcmp.eq.f32.partialorder %v2970, 8.507059e+37
    %v2972 = vand.u32 %v2911, 2147483648
    %v2973 = vor.u32 1.1754944e-38, %v2972
    %v2974 = vsel %vm2971, %v2973, %v2969
    %v2975 = vmul.f32 1.0, %v2974
    %v2976 = vrcp.pop %v2912
    %v2977 = vmul.f32 %v2912, %v2976
    %v2978 = vsub.f32 1.0, %v2977
    %v2979 = vmul.f32 %v2976, %v2978
    %v2980 = vadd.f32 %v2976, %v2979
    %vm2981 = vweird.f32 %v2912
    %vm2982 = vweird.f32 %v2976
    %vm2983 = vmor %vm2981, %vm2982
    %v2984 = vsel %vm2983, %v2976, %v2980
    %v2985 = vand.u32 2147483647, %v2912
    %vm2986 = vcmp.eq.f32.partialorder %v2985, 8.507059e+37
    %v2987 = vand.u32 %v2912, 2147483648
    %v2988 = vor.u32 1.1754944e-38, %v2987
    %v2989 = vsel %vm2986, %v2988, %v2984
    %v2990 = vmul.f32 1.0, %v2989
    %v2991 = vrcp.pop %v2913
    %v2992 = vmul.f32 %v2913, %v2991
    %v2993 = vsub.f32 1.0, %v2992
    %v2994 = vmul.f32 %v2991, %v2993
    %v2995 = vadd.f32 %v2991, %v2994
    %vm2996 = vweird.f32 %v2913
    %vm2997 = vweird.f32 %v2991
    %vm2998 = vmor %vm2996, %vm2997
    %v2999 = vsel %vm2998, %v2991, %v2995
    %v3000 = vand.u32 2147483647, %v2913
    %vm3001 = vcmp.eq.f32.partialorder %v3000, 8.507059e+37
    %v3002 = vand.u32 %v2913, 2147483648
    %v3003 = vor.u32 1.1754944e-38, %v3002
    %v3004 = vsel %vm3001, %v3003, %v2999
    %v3005 = vmul.f32 1.0, %v3004
    %v3006 = vrcp.pop %v2914
    %v3007 = vmul.f32 %v2914, %v3006
    %v3008 = vsub.f32 1.0, %v3007
    %v3009 = vmul.f32 %v3006, %v3008
    %v3010 = vadd.f32 %v3006, %v3009
    %vm3011 = vweird.f32 %v2914
    %vm3012 = vweird.f32 %v3006
    %vm3013 = vmor %vm3011, %vm3012
    %v3014 = vsel %vm3013, %v3006, %v3010
    %v3015 = vand.u32 2147483647, %v2914
    %vm3016 = vcmp.eq.f32.partialorder %v3015, 8.507059e+37
    %v3017 = vand.u32 %v2914, 2147483648
    %v3018 = vor.u32 1.1754944e-38, %v3017
    %v3019 = vsel %vm3016, %v3018, %v3014
    %v3020 = vmul.f32 1.0, %v3019
    %v3021 = vrcp.pop %v2915
    %v3022 = vmul.f32 %v2915, %v3021
    %v3023 = vsub.f32 1.0, %v3022
    %v3024 = vmul.f32 %v3021, %v3023
    %v3025 = vadd.f32 %v3021, %v3024
    %vm3026 = vweird.f32 %v2915
    %vm3027 = vweird.f32 %v3021
    %vm3028 = vmor %vm3026, %vm3027
    %v3029 = vsel %vm3028, %v3021, %v3025
    %v3030 = vand.u32 2147483647, %v2915
    %vm3031 = vcmp.eq.f32.partialorder %v3030, 8.507059e+37
    %v3032 = vand.u32 %v2915, 2147483648
    %v3033 = vor.u32 1.1754944e-38, %v3032
    %v3034 = vsel %vm3031, %v3033, %v3029
    %v3035 = vmul.f32 1.0, %v3034
    %v3036 = vmul.f32 %v2838, %v2930
    %v3037 = vmul.f32 %v2852, %v2945
    %v3038 = vmul.f32 %v2866, %v2960
    %v3039 = vmul.f32 %v2880, %v2975
    %v3040 = vmul.f32 %v2840, %v2990
    %v3041 = vmul.f32 %v2854, %v3005
    %v3042 = vmul.f32 %v2868, %v3020
    %v3043 = vmul.f32 %v2882, %v3035
    %v3044 = vpack.c.bf16 %v3040, %v3036
    %v3045 = vpack.c.bf16 %v3041, %v3037
    %v3046 = vpack.c.bf16 %v3042, %v3038
    %v3047 = vpack.c.bf16 %v3043, %v3039
    %v3048 = vld [vmem:[#allocation14] sm:$0xff]
    %v3049 = vld [vmem:[#allocation14 + $0x8] sm:$0xff]
    %v3050 = vld [vmem:[#allocation14 + $0x10] sm:$0xff]
    %v3051 = vld [vmem:[#allocation14 + $0x18] sm:$0xff]
    %v3052 = vld [vmem:[#allocation14 + $0x20] sm:$0xff]
    %v3053 = vld [vmem:[#allocation14 + $0x28] sm:$0xff]
    %v3054 = vld [vmem:[#allocation14 + $0x30] sm:$0xff]
    %v3055 = vld [vmem:[#allocation14 + $0x38] sm:$0xff]
    %v3056 = vld [vmem:[#allocation14 + $0x40] sm:$0xff]
    %v3057 = vld [vmem:[#allocation14 + $0x48] sm:$0xff]
    %v3058 = vld [vmem:[#allocation14 + $0x50] sm:$0xff]
    %v3059 = vld [vmem:[#allocation14 + $0x58] sm:$0xff]
    %v3060 = vld [vmem:[#allocation14 + $0x60] sm:$0xff]
    %v3061 = vld [vmem:[#allocation14 + $0x68] sm:$0xff]
    %v3062 = vld [vmem:[#allocation14 + $0x70] sm:$0xff]
    %v3063 = vld [vmem:[#allocation14 + $0x78] sm:$0xff]
    %v3064 = vld [vmem:[#allocation14 + $0x80] sm:$0xff]
    %v3065 = vld [vmem:[#allocation14 + $0x88] sm:$0xff]
    %v3066 = vld [vmem:[#allocation14 + $0x90] sm:$0xff]
    %v3067 = vld [vmem:[#allocation14 + $0x98] sm:$0xff]
    %v3068 = vld [vmem:[#allocation14 + $0xa0] sm:$0xff]
    %v3069 = vld [vmem:[#allocation14 + $0xa8] sm:$0xff]
    %v3070 = vld [vmem:[#allocation14 + $0xb0] sm:$0xff]
    %v3071 = vld [vmem:[#allocation14 + $0xb8] sm:$0xff]
    %v3072 = vld [vmem:[#allocation14 + $0xc0] sm:$0xff]
    %v3073 = vld [vmem:[#allocation14 + $0xc8] sm:$0xff]
    %v3074 = vld [vmem:[#allocation14 + $0xd0] sm:$0xff]
    %v3075 = vld [vmem:[#allocation14 + $0xd8] sm:$0xff]
    %v3076 = vld [vmem:[#allocation14 + $0xe0] sm:$0xff]
    %v3077 = vld [vmem:[#allocation14 + $0xe8] sm:$0xff]
    %v3078 = vld [vmem:[#allocation14 + $0xf0] sm:$0xff]
    %v3079 = vld [vmem:[#allocation14 + $0xf8] sm:$0xff]
    %v3080 = vld [vmem:[#allocation14 + $0x100] sm:$0xff]
    %v3081 = vld [vmem:[#allocation14 + $0x108] sm:$0xff]
    %v3082 = vld [vmem:[#allocation14 + $0x110] sm:$0xff]
    %v3083 = vld [vmem:[#allocation14 + $0x118] sm:$0xff]
    %v3084 = vld [vmem:[#allocation14 + $0x120] sm:$0xff]
    %v3085 = vld [vmem:[#allocation14 + $0x128] sm:$0xff]
    %v3086 = vld [vmem:[#allocation14 + $0x130] sm:$0xff]
    %v3087 = vld [vmem:[#allocation14 + $0x138] sm:$0xff]
    %v3088 = vld [vmem:[#allocation14 + $0x140] sm:$0xff]
    %v3089 = vld [vmem:[#allocation14 + $0x148] sm:$0xff]
    %v3090 = vld [vmem:[#allocation14 + $0x150] sm:$0xff]
    %v3091 = vld [vmem:[#allocation14 + $0x158] sm:$0xff]
    %v3092 = vld [vmem:[#allocation14 + $0x160] sm:$0xff]
    %v3093 = vld [vmem:[#allocation14 + $0x168] sm:$0xff]
    %v3094 = vld [vmem:[#allocation14 + $0x170] sm:$0xff]
    %v3095 = vld [vmem:[#allocation14 + $0x178] sm:$0xff]
    %v3096 = vld [vmem:[#allocation14 + $0x180] sm:$0xff]
    %v3097 = vld [vmem:[#allocation14 + $0x188] sm:$0xff]
    %v3098 = vld [vmem:[#allocation14 + $0x190] sm:$0xff]
    %v3099 = vld [vmem:[#allocation14 + $0x198] sm:$0xff]
    %v3100 = vld [vmem:[#allocation14 + $0x1a0] sm:$0xff]
    %v3101 = vld [vmem:[#allocation14 + $0x1a8] sm:$0xff]
    %v3102 = vld [vmem:[#allocation14 + $0x1b0] sm:$0xff]
    %v3103 = vld [vmem:[#allocation14 + $0x1b8] sm:$0xff]
    %v3104 = vld [vmem:[#allocation14 + $0x1c0] sm:$0xff]
    %v3105 = vld [vmem:[#allocation14 + $0x1c8] sm:$0xff]
    %v3106 = vld [vmem:[#allocation14 + $0x1d0] sm:$0xff]
    %v3107 = vld [vmem:[#allocation14 + $0x1d8] sm:$0xff]
    %v3108 = vld [vmem:[#allocation14 + $0x1e0] sm:$0xff]
    %v3109 = vld [vmem:[#allocation14 + $0x1e8] sm:$0xff]
    %v3110 = vld [vmem:[#allocation14 + $0x1f0] sm:$0xff]
    %v3111 = vld [vmem:[#allocation14 + $0x1f8] sm:$0xff]
    %v3112 = vld [vmem:[#allocation14 + $0x200] sm:$0xff]
    %v3113 = vld [vmem:[#allocation14 + $0x208] sm:$0xff]
    %v3114 = vld [vmem:[#allocation14 + $0x210] sm:$0xff]
    %v3115 = vld [vmem:[#allocation14 + $0x218] sm:$0xff]
    %v3116 = vld [vmem:[#allocation14 + $0x220] sm:$0xff]
    %v3117 = vld [vmem:[#allocation14 + $0x228] sm:$0xff]
    %v3118 = vld [vmem:[#allocation14 + $0x230] sm:$0xff]
    %v3119 = vld [vmem:[#allocation14 + $0x238] sm:$0xff]
    %v3120 = vld [vmem:[#allocation14 + $0x240] sm:$0xff]
    %v3121 = vld [vmem:[#allocation14 + $0x248] sm:$0xff]
    %v3122 = vld [vmem:[#allocation14 + $0x250] sm:$0xff]
    %v3123 = vld [vmem:[#allocation14 + $0x258] sm:$0xff]
    %v3124 = vld [vmem:[#allocation14 + $0x260] sm:$0xff]
    %v3125 = vld [vmem:[#allocation14 + $0x268] sm:$0xff]
    %v3126 = vld [vmem:[#allocation14 + $0x270] sm:$0xff]
    %v3127 = vld [vmem:[#allocation14 + $0x278] sm:$0xff]
    %v3128 = vld [vmem:[#allocation14 + $0x280] sm:$0xff]
    %v3129 = vld [vmem:[#allocation14 + $0x288] sm:$0xff]
    %v3130 = vld [vmem:[#allocation14 + $0x290] sm:$0xff]
    %v3131 = vld [vmem:[#allocation14 + $0x298] sm:$0xff]
    %v3132 = vld [vmem:[#allocation14 + $0x2a0] sm:$0xff]
    %v3133 = vld [vmem:[#allocation14 + $0x2a8] sm:$0xff]
    %v3134 = vld [vmem:[#allocation14 + $0x2b0] sm:$0xff]
    %v3135 = vld [vmem:[#allocation14 + $0x2b8] sm:$0xff]
    %v3136 = vld [vmem:[#allocation14 + $0x2c0] sm:$0xff]
    %v3137 = vld [vmem:[#allocation14 + $0x2c8] sm:$0xff]
    %v3138 = vld [vmem:[#allocation14 + $0x2d0] sm:$0xff]
    %v3139 = vld [vmem:[#allocation14 + $0x2d8] sm:$0xff]
    %v3140 = vld [vmem:[#allocation14 + $0x2e0] sm:$0xff]
    %v3141 = vld [vmem:[#allocation14 + $0x2e8] sm:$0xff]
    %v3142 = vld [vmem:[#allocation14 + $0x2f0] sm:$0xff]
    %v3143 = vld [vmem:[#allocation14 + $0x2f8] sm:$0xff]
    %v3144 = vld [vmem:[#allocation14 + $0x300] sm:$0xff]
    %v3145 = vld [vmem:[#allocation14 + $0x308] sm:$0xff]
    %v3146 = vld [vmem:[#allocation14 + $0x310] sm:$0xff]
    %v3147 = vld [vmem:[#allocation14 + $0x318] sm:$0xff]
    %v3148 = vld [vmem:[#allocation14 + $0x320] sm:$0xff]
    %v3149 = vld [vmem:[#allocation14 + $0x328] sm:$0xff]
    %v3150 = vld [vmem:[#allocation14 + $0x330] sm:$0xff]
    %v3151 = vld [vmem:[#allocation14 + $0x338] sm:$0xff]
    %v3152 = vld [vmem:[#allocation14 + $0x340] sm:$0xff]
    %v3153 = vld [vmem:[#allocation14 + $0x348] sm:$0xff]
    %v3154 = vld [vmem:[#allocation14 + $0x350] sm:$0xff]
    %v3155 = vld [vmem:[#allocation14 + $0x358] sm:$0xff]
    %v3156 = vld [vmem:[#allocation14 + $0x360] sm:$0xff]
    %v3157 = vld [vmem:[#allocation14 + $0x368] sm:$0xff]
    %v3158 = vld [vmem:[#allocation14 + $0x370] sm:$0xff]
    %v3159 = vld [vmem:[#allocation14 + $0x378] sm:$0xff]
    %v3160 = vld [vmem:[#allocation14 + $0x380] sm:$0xff]
    %v3161 = vld [vmem:[#allocation14 + $0x388] sm:$0xff]
    %v3162 = vld [vmem:[#allocation14 + $0x390] sm:$0xff]
    %v3163 = vld [vmem:[#allocation14 + $0x398] sm:$0xff]
    %v3164 = vld [vmem:[#allocation14 + $0x3a0] sm:$0xff]
    %v3165 = vld [vmem:[#allocation14 + $0x3a8] sm:$0xff]
    %v3166 = vld [vmem:[#allocation14 + $0x3b0] sm:$0xff]
    %v3167 = vld [vmem:[#allocation14 + $0x3b8] sm:$0xff]
    %v3168 = vld [vmem:[#allocation14 + $0x3c0] sm:$0xff]
    %v3169 = vld [vmem:[#allocation14 + $0x3c8] sm:$0xff]
    %v3170 = vld [vmem:[#allocation14 + $0x3d0] sm:$0xff]
    %v3171 = vld [vmem:[#allocation14 + $0x3d8] sm:$0xff]
    %v3172 = vld [vmem:[#allocation14 + $0x3e0] sm:$0xff]
    %v3173 = vld [vmem:[#allocation14 + $0x3e8] sm:$0xff]
    %v3174 = vld [vmem:[#allocation14 + $0x3f0] sm:$0xff]
    %v3175 = vld [vmem:[#allocation14 + $0x3f8] sm:$0xff]
    %v3176 = vld [vmem:[%s15] sm:$0xf]
    %v3178 = vperm.slane %v3176, 0
    %v3179 = vperm.slane %v3176, 1
    %v3180 = vperm.slane %v3176, 2
    %v3181 = vperm.slane %v3176, 3
    %v3314 = vunpack.c.l.b16 %v3048
    %v3315 = vunpack.c.h.b16 %v3048
    %v3316 = vunpack.c.l.b16 %v3049
    %v3317 = vunpack.c.h.b16 %v3049
    %v3318 = vunpack.c.l.b16 %v3050
    %v3319 = vunpack.c.h.b16 %v3050
    %v3320 = vunpack.c.l.b16 %v3051
    %v3321 = vunpack.c.h.b16 %v3051
    %v3322 = vunpack.c.l.b16 %v3052
    %v3323 = vunpack.c.h.b16 %v3052
    %v3324 = vunpack.c.l.b16 %v3053
    %v3325 = vunpack.c.h.b16 %v3053
    %v3326 = vunpack.c.l.b16 %v3054
    %v3327 = vunpack.c.h.b16 %v3054
    %v3328 = vunpack.c.l.b16 %v3055
    %v3329 = vunpack.c.h.b16 %v3055
    %v3330 = vunpack.c.l.b16 %v3056
    %v3331 = vunpack.c.h.b16 %v3056
    %v3332 = vunpack.c.l.b16 %v3057
    %v3333 = vunpack.c.h.b16 %v3057
    %v3334 = vunpack.c.l.b16 %v3058
    %v3335 = vunpack.c.h.b16 %v3058
    %v3336 = vunpack.c.l.b16 %v3059
    %v3337 = vunpack.c.h.b16 %v3059
    %v3338 = vunpack.c.l.b16 %v3060
    %v3339 = vunpack.c.h.b16 %v3060
    %v3340 = vunpack.c.l.b16 %v3061
    %v3341 = vunpack.c.h.b16 %v3061
    %v3342 = vunpack.c.l.b16 %v3062
    %v3343 = vunpack.c.h.b16 %v3062
    %v3344 = vunpack.c.l.b16 %v3063
    %v3345 = vunpack.c.h.b16 %v3063
    %v3346 = vunpack.c.l.b16 %v3064
    %v3347 = vunpack.c.h.b16 %v3064
    %v3348 = vunpack.c.l.b16 %v3065
    %v3349 = vunpack.c.h.b16 %v3065
    %v3350 = vunpack.c.l.b16 %v3066
    %v3351 = vunpack.c.h.b16 %v3066
    %v3352 = vunpack.c.l.b16 %v3067
    %v3353 = vunpack.c.h.b16 %v3067
    %v3354 = vunpack.c.l.b16 %v3068
    %v3355 = vunpack.c.h.b16 %v3068
    %v3356 = vunpack.c.l.b16 %v3069
    %v3357 = vunpack.c.h.b16 %v3069
    %v3358 = vunpack.c.l.b16 %v3070
    %v3359 = vunpack.c.h.b16 %v3070
    %v3360 = vunpack.c.l.b16 %v3071
    %v3361 = vunpack.c.h.b16 %v3071
    %v3362 = vunpack.c.l.b16 %v3072
    %v3363 = vunpack.c.h.b16 %v3072
    %v3364 = vunpack.c.l.b16 %v3073
    %v3365 = vunpack.c.h.b16 %v3073
    %v3366 = vunpack.c.l.b16 %v3074
    %v3367 = vunpack.c.h.b16 %v3074
    %v3368 = vunpack.c.l.b16 %v3075
    %v3369 = vunpack.c.h.b16 %v3075
    %v3370 = vunpack.c.l.b16 %v3076
    %v3371 = vunpack.c.h.b16 %v3076
    %v3372 = vunpack.c.l.b16 %v3077
    %v3373 = vunpack.c.h.b16 %v3077
    %v3374 = vunpack.c.l.b16 %v3078
    %v3375 = vunpack.c.h.b16 %v3078
    %v3376 = vunpack.c.l.b16 %v3079
    %v3377 = vunpack.c.h.b16 %v3079
    %v3378 = vunpack.c.l.b16 %v3080
    %v3379 = vunpack.c.h.b16 %v3080
    %v3380 = vunpack.c.l.b16 %v3081
    %v3381 = vunpack.c.h.b16 %v3081
    %v3382 = vunpack.c.l.b16 %v3082
    %v3383 = vunpack.c.h.b16 %v3082
    %v3384 = vunpack.c.l.b16 %v3083
    %v3385 = vunpack.c.h.b16 %v3083
    %v3386 = vunpack.c.l.b16 %v3084
    %v3387 = vunpack.c.h.b16 %v3084
    %v3388 = vunpack.c.l.b16 %v3085
    %v3389 = vunpack.c.h.b16 %v3085
    %v3390 = vunpack.c.l.b16 %v3086
    %v3391 = vunpack.c.h.b16 %v3086
    %v3392 = vunpack.c.l.b16 %v3087
    %v3393 = vunpack.c.h.b16 %v3087
    %v3394 = vunpack.c.l.b16 %v3088
    %v3395 = vunpack.c.h.b16 %v3088
    %v3396 = vunpack.c.l.b16 %v3089
    %v3397 = vunpack.c.h.b16 %v3089
    %v3398 = vunpack.c.l.b16 %v3090
    %v3399 = vunpack.c.h.b16 %v3090
    %v3400 = vunpack.c.l.b16 %v3091
    %v3401 = vunpack.c.h.b16 %v3091
    %v3402 = vunpack.c.l.b16 %v3092
    %v3403 = vunpack.c.h.b16 %v3092
    %v3404 = vunpack.c.l.b16 %v3093
    %v3405 = vunpack.c.h.b16 %v3093
    %v3406 = vunpack.c.l.b16 %v3094
    %v3407 = vunpack.c.h.b16 %v3094
    %v3408 = vunpack.c.l.b16 %v3095
    %v3409 = vunpack.c.h.b16 %v3095
    %v3410 = vunpack.c.l.b16 %v3096
    %v3411 = vunpack.c.h.b16 %v3096
    %v3412 = vunpack.c.l.b16 %v3097
    %v3413 = vunpack.c.h.b16 %v3097
    %v3414 = vunpack.c.l.b16 %v3098
    %v3415 = vunpack.c.h.b16 %v3098
    %v3416 = vunpack.c.l.b16 %v3099
    %v3417 = vunpack.c.h.b16 %v3099
    %v3418 = vunpack.c.l.b16 %v3100
    %v3419 = vunpack.c.h.b16 %v3100
    %v3420 = vunpack.c.l.b16 %v3101
    %v3421 = vunpack.c.h.b16 %v3101
    %v3422 = vunpack.c.l.b16 %v3102
    %v3423 = vunpack.c.h.b16 %v3102
    %v3424 = vunpack.c.l.b16 %v3103
    %v3425 = vunpack.c.h.b16 %v3103
    %v3426 = vunpack.c.l.b16 %v3104
    %v3427 = vunpack.c.h.b16 %v3104
    %v3428 = vunpack.c.l.b16 %v3105
    %v3429 = vunpack.c.h.b16 %v3105
    %v3430 = vunpack.c.l.b16 %v3106
    %v3431 = vunpack.c.h.b16 %v3106
    %v3432 = vunpack.c.l.b16 %v3107
    %v3433 = vunpack.c.h.b16 %v3107
    %v3434 = vunpack.c.l.b16 %v3108
    %v3435 = vunpack.c.h.b16 %v3108
    %v3436 = vunpack.c.l.b16 %v3109
    %v3437 = vunpack.c.h.b16 %v3109
    %v3438 = vunpack.c.l.b16 %v3110
    %v3439 = vunpack.c.h.b16 %v3110
    %v3440 = vunpack.c.l.b16 %v3111
    %v3441 = vunpack.c.h.b16 %v3111
    %v3442 = vunpack.c.l.b16 %v3112
    %v3443 = vunpack.c.h.b16 %v3112
    %v3444 = vunpack.c.l.b16 %v3113
    %v3445 = vunpack.c.h.b16 %v3113
    %v3446 = vunpack.c.l.b16 %v3114
    %v3447 = vunpack.c.h.b16 %v3114
    %v3448 = vunpack.c.l.b16 %v3115
    %v3449 = vunpack.c.h.b16 %v3115
    %v3450 = vunpack.c.l.b16 %v3116
    %v3451 = vunpack.c.h.b16 %v3116
    %v3452 = vunpack.c.l.b16 %v3117
    %v3453 = vunpack.c.h.b16 %v3117
    %v3454 = vunpack.c.l.b16 %v3118
    %v3455 = vunpack.c.h.b16 %v3118
    %v3456 = vunpack.c.l.b16 %v3119
    %v3457 = vunpack.c.h.b16 %v3119
    %v3458 = vunpack.c.l.b16 %v3120
    %v3459 = vunpack.c.h.b16 %v3120
    %v3460 = vunpack.c.l.b16 %v3121
    %v3461 = vunpack.c.h.b16 %v3121
    %v3462 = vunpack.c.l.b16 %v3122
    %v3463 = vunpack.c.h.b16 %v3122
    %v3464 = vunpack.c.l.b16 %v3123
    %v3465 = vunpack.c.h.b16 %v3123
    %v3466 = vunpack.c.l.b16 %v3124
    %v3467 = vunpack.c.h.b16 %v3124
    %v3468 = vunpack.c.l.b16 %v3125
    %v3469 = vunpack.c.h.b16 %v3125
    %v3470 = vunpack.c.l.b16 %v3126
    %v3471 = vunpack.c.h.b16 %v3126
    %v3472 = vunpack.c.l.b16 %v3127
    %v3473 = vunpack.c.h.b16 %v3127
    %v3474 = vunpack.c.l.b16 %v3128
    %v3475 = vunpack.c.h.b16 %v3128
    %v3476 = vunpack.c.l.b16 %v3129
    %v3477 = vunpack.c.h.b16 %v3129
    %v3478 = vunpack.c.l.b16 %v3130
    %v3479 = vunpack.c.h.b16 %v3130
    %v3480 = vunpack.c.l.b16 %v3131
    %v3481 = vunpack.c.h.b16 %v3131
    %v3482 = vunpack.c.l.b16 %v3132
    %v3483 = vunpack.c.h.b16 %v3132
    %v3484 = vunpack.c.l.b16 %v3133
    %v3485 = vunpack.c.h.b16 %v3133
    %v3486 = vunpack.c.l.b16 %v3134
    %v3487 = vunpack.c.h.b16 %v3134
    %v3488 = vunpack.c.l.b16 %v3135
    %v3489 = vunpack.c.h.b16 %v3135
    %v3490 = vunpack.c.l.b16 %v3136
    %v3491 = vunpack.c.h.b16 %v3136
    %v3492 = vunpack.c.l.b16 %v3137
    %v3493 = vunpack.c.h.b16 %v3137
    %v3494 = vunpack.c.l.b16 %v3138
    %v3495 = vunpack.c.h.b16 %v3138
    %v3496 = vunpack.c.l.b16 %v3139
    %v3497 = vunpack.c.h.b16 %v3139
    %v3498 = vunpack.c.l.b16 %v3140
    %v3499 = vunpack.c.h.b16 %v3140
    %v3500 = vunpack.c.l.b16 %v3141
    %v3501 = vunpack.c.h.b16 %v3141
    %v3502 = vunpack.c.l.b16 %v3142
    %v3503 = vunpack.c.h.b16 %v3142
    %v3504 = vunpack.c.l.b16 %v3143
    %v3505 = vunpack.c.h.b16 %v3143
    %v3506 = vunpack.c.l.b16 %v3144
    %v3507 = vunpack.c.h.b16 %v3144
    %v3508 = vunpack.c.l.b16 %v3145
    %v3509 = vunpack.c.h.b16 %v3145
    %v3510 = vunpack.c.l.b16 %v3146
    %v3511 = vunpack.c.h.b16 %v3146
    %v3512 = vunpack.c.l.b16 %v3147
    %v3513 = vunpack.c.h.b16 %v3147
    %v3514 = vunpack.c.l.b16 %v3148
    %v3515 = vunpack.c.h.b16 %v3148
    %v3516 = vunpack.c.l.b16 %v3149
    %v3517 = vunpack.c.h.b16 %v3149
    %v3518 = vunpack.c.l.b16 %v3150
    %v3519 = vunpack.c.h.b16 %v3150
    %v3520 = vunpack.c.l.b16 %v3151
    %v3521 = vunpack.c.h.b16 %v3151
    %v3522 = vunpack.c.l.b16 %v3152
    %v3523 = vunpack.c.h.b16 %v3152
    %v3524 = vunpack.c.l.b16 %v3153
    %v3525 = vunpack.c.h.b16 %v3153
    %v3526 = vunpack.c.l.b16 %v3154
    %v3527 = vunpack.c.h.b16 %v3154
    %v3528 = vunpack.c.l.b16 %v3155
    %v3529 = vunpack.c.h.b16 %v3155
    %v3530 = vunpack.c.l.b16 %v3156
    %v3531 = vunpack.c.h.b16 %v3156
    %v3532 = vunpack.c.l.b16 %v3157
    %v3533 = vunpack.c.h.b16 %v3157
    %v3534 = vunpack.c.l.b16 %v3158
    %v3535 = vunpack.c.h.b16 %v3158
    %v3536 = vunpack.c.l.b16 %v3159
    %v3537 = vunpack.c.h.b16 %v3159
    %v3538 = vunpack.c.l.b16 %v3160
    %v3539 = vunpack.c.h.b16 %v3160
    %v3540 = vunpack.c.l.b16 %v3161
    %v3541 = vunpack.c.h.b16 %v3161
    %v3542 = vunpack.c.l.b16 %v3162
    %v3543 = vunpack.c.h.b16 %v3162
    %v3544 = vunpack.c.l.b16 %v3163
    %v3545 = vunpack.c.h.b16 %v3163
    %v3546 = vunpack.c.l.b16 %v3164
    %v3547 = vunpack.c.h.b16 %v3164
    %v3548 = vunpack.c.l.b16 %v3165
    %v3549 = vunpack.c.h.b16 %v3165
    %v3550 = vunpack.c.l.b16 %v3166
    %v3551 = vunpack.c.h.b16 %v3166
    %v3552 = vunpack.c.l.b16 %v3167
    %v3553 = vunpack.c.h.b16 %v3167
    %v3554 = vunpack.c.l.b16 %v3168
    %v3555 = vunpack.c.h.b16 %v3168
    %v3556 = vunpack.c.l.b16 %v3169
    %v3557 = vunpack.c.h.b16 %v3169
    %v3558 = vunpack.c.l.b16 %v3170
    %v3559 = vunpack.c.h.b16 %v3170
    %v3560 = vunpack.c.l.b16 %v3171
    %v3561 = vunpack.c.h.b16 %v3171
    %v3562 = vunpack.c.l.b16 %v3172
    %v3563 = vunpack.c.h.b16 %v3172
    %v3564 = vunpack.c.l.b16 %v3173
    %v3565 = vunpack.c.h.b16 %v3173
    %v3566 = vunpack.c.l.b16 %v3174
    %v3567 = vunpack.c.h.b16 %v3174
    %v3568 = vunpack.c.l.b16 %v3175
    %v3569 = vunpack.c.h.b16 %v3175
    %v3570 = vpack.c.b16 %v3318, %v3314
    %v3571 = vpack.c.b16 %v3319, %v3315
    %v3572 = vpack.c.b16 %v3320, %v3316
    %v3573 = vpack.c.b16 %v3321, %v3317
    %v3574 = vpack.c.b16 %v3326, %v3322
    %v3575 = vpack.c.b16 %v3327, %v3323
    %v3576 = vpack.c.b16 %v3328, %v3324
    %v3577 = vpack.c.b16 %v3329, %v3325
    %v3578 = vpack.c.b16 %v3334, %v3330
    %v3579 = vpack.c.b16 %v3335, %v3331
    %v3580 = vpack.c.b16 %v3336, %v3332
    %v3581 = vpack.c.b16 %v3337, %v3333
    %v3582 = vpack.c.b16 %v3342, %v3338
    %v3583 = vpack.c.b16 %v3343, %v3339
    %v3584 = vpack.c.b16 %v3344, %v3340
    %v3585 = vpack.c.b16 %v3345, %v3341
    %v3586 = vpack.c.b16 %v3350, %v3346
    %v3587 = vpack.c.b16 %v3351, %v3347
    %v3588 = vpack.c.b16 %v3352, %v3348
    %v3589 = vpack.c.b16 %v3353, %v3349
    %v3590 = vpack.c.b16 %v3358, %v3354
    %v3591 = vpack.c.b16 %v3359, %v3355
    %v3592 = vpack.c.b16 %v3360, %v3356
    %v3593 = vpack.c.b16 %v3361, %v3357
    %v3594 = vpack.c.b16 %v3366, %v3362
    %v3595 = vpack.c.b16 %v3367, %v3363
    %v3596 = vpack.c.b16 %v3368, %v3364
    %v3597 = vpack.c.b16 %v3369, %v3365
    %v3598 = vpack.c.b16 %v3374, %v3370
    %v3599 = vpack.c.b16 %v3375, %v3371
    %v3600 = vpack.c.b16 %v3376, %v3372
    %v3601 = vpack.c.b16 %v3377, %v3373
    %v3602 = vpack.c.b16 %v3382, %v3378
    %v3603 = vpack.c.b16 %v3383, %v3379
    %v3604 = vpack.c.b16 %v3384, %v3380
    %v3605 = vpack.c.b16 %v3385, %v3381
    %v3606 = vpack.c.b16 %v3390, %v3386
    %v3607 = vpack.c.b16 %v3391, %v3387
    %v3608 = vpack.c.b16 %v3392, %v3388
    %v3609 = vpack.c.b16 %v3393, %v3389
    %v3610 = vpack.c.b16 %v3398, %v3394
    %v3611 = vpack.c.b16 %v3399, %v3395
    %v3612 = vpack.c.b16 %v3400, %v3396
    %v3613 = vpack.c.b16 %v3401, %v3397
    %v3614 = vpack.c.b16 %v3406, %v3402
    %v3615 = vpack.c.b16 %v3407, %v3403
    %v3616 = vpack.c.b16 %v3408, %v3404
    %v3617 = vpack.c.b16 %v3409, %v3405
    %v3618 = vpack.c.b16 %v3414, %v3410
    %v3619 = vpack.c.b16 %v3415, %v3411
    %v3620 = vpack.c.b16 %v3416, %v3412
    %v3621 = vpack.c.b16 %v3417, %v3413
    %v3622 = vpack.c.b16 %v3422, %v3418
    %v3623 = vpack.c.b16 %v3423, %v3419
    %v3624 = vpack.c.b16 %v3424, %v3420
    %v3625 = vpack.c.b16 %v3425, %v3421
    %v3626 = vpack.c.b16 %v3430, %v3426
    %v3627 = vpack.c.b16 %v3431, %v3427
    %v3628 = vpack.c.b16 %v3432, %v3428
    %v3629 = vpack.c.b16 %v3433, %v3429
    %v3630 = vpack.c.b16 %v3438, %v3434
    %v3631 = vpack.c.b16 %v3439, %v3435
    %v3632 = vpack.c.b16 %v3440, %v3436
    %v3633 = vpack.c.b16 %v3441, %v3437
    %v3634 = vpack.c.b16 %v3446, %v3442
    %v3635 = vpack.c.b16 %v3447, %v3443
    %v3636 = vpack.c.b16 %v3448, %v3444
    %v3637 = vpack.c.b16 %v3449, %v3445
    %v3638 = vpack.c.b16 %v3454, %v3450
    %v3639 = vpack.c.b16 %v3455, %v3451
    %v3640 = vpack.c.b16 %v3456, %v3452
    %v3641 = vpack.c.b16 %v3457, %v3453
    %v3642 = vpack.c.b16 %v3462, %v3458
    %v3643 = vpack.c.b16 %v3463, %v3459
    %v3644 = vpack.c.b16 %v3464, %v3460
    %v3645 = vpack.c.b16 %v3465, %v3461
    %v3646 = vpack.c.b16 %v3470, %v3466
    %v3647 = vpack.c.b16 %v3471, %v3467
    %v3648 = vpack.c.b16 %v3472, %v3468
    %v3649 = vpack.c.b16 %v3473, %v3469
    %v3650 = vpack.c.b16 %v3478, %v3474
    %v3651 = vpack.c.b16 %v3479, %v3475
    %v3652 = vpack.c.b16 %v3480, %v3476
    %v3653 = vpack.c.b16 %v3481, %v3477
    %v3654 = vpack.c.b16 %v3486, %v3482
    %v3655 = vpack.c.b16 %v3487, %v3483
    %v3656 = vpack.c.b16 %v3488, %v3484
    %v3657 = vpack.c.b16 %v3489, %v3485
    %v3658 = vpack.c.b16 %v3494, %v3490
    %v3659 = vpack.c.b16 %v3495, %v3491
    %v3660 = vpack.c.b16 %v3496, %v3492
    %v3661 = vpack.c.b16 %v3497, %v3493
    %v3662 = vpack.c.b16 %v3502, %v3498
    %v3663 = vpack.c.b16 %v3503, %v3499
    %v3664 = vpack.c.b16 %v3504, %v3500
    %v3665 = vpack.c.b16 %v3505, %v3501
    %v3666 = vpack.c.b16 %v3510, %v3506
    %v3667 = vpack.c.b16 %v3511, %v3507
    %v3668 = vpack.c.b16 %v3512, %v3508
    %v3669 = vpack.c.b16 %v3513, %v3509
    %v3670 = vpack.c.b16 %v3518, %v3514
    %v3671 = vpack.c.b16 %v3519, %v3515
    %v3672 = vpack.c.b16 %v3520, %v3516
    %v3673 = vpack.c.b16 %v3521, %v3517
    %v3674 = vpack.c.b16 %v3526, %v3522
    %v3675 = vpack.c.b16 %v3527, %v3523
    %v3676 = vpack.c.b16 %v3528, %v3524
    %v3677 = vpack.c.b16 %v3529, %v3525
    %v3678 = vpack.c.b16 %v3534, %v3530
    %v3679 = vpack.c.b16 %v3535, %v3531
    %v3680 = vpack.c.b16 %v3536, %v3532
    %v3681 = vpack.c.b16 %v3537, %v3533
    %v3682 = vpack.c.b16 %v3542, %v3538
    %v3683 = vpack.c.b16 %v3543, %v3539
    %v3684 = vpack.c.b16 %v3544, %v3540
    %v3685 = vpack.c.b16 %v3545, %v3541
    %v3686 = vpack.c.b16 %v3550, %v3546
    %v3687 = vpack.c.b16 %v3551, %v3547
    %v3688 = vpack.c.b16 %v3552, %v3548
    %v3689 = vpack.c.b16 %v3553, %v3549
    %v3690 = vpack.c.b16 %v3558, %v3554
    %v3691 = vpack.c.b16 %v3559, %v3555
    %v3692 = vpack.c.b16 %v3560, %v3556
    %v3693 = vpack.c.b16 %v3561, %v3557
    %v3694 = vpack.c.b16 %v3566, %v3562
    %v3695 = vpack.c.b16 %v3567, %v3563
    %v3696 = vpack.c.b16 %v3568, %v3564
    %v3697 = vpack.c.b16 %v3569, %v3565
    %3826 = vmatpush.bf16.msra.mxu0 %v3598
    %3827 = vmatpush.bf16.msra.mxu0 %v3594
    %3828 = vmatpush.bf16.msra.mxu0 %v3590
    %3829 = vmatpush.bf16.msra.mxu0 %v3586
    %3830 = vmatpush.bf16.msra.mxu0 %v3582
    %3831 = vmatpush.bf16.msra.mxu0 %v3578
    %3832 = vmatpush.bf16.msra.mxu0 %v3574
    %3833 = vmatpush.bf16.msra.mxu0 %v3570
    %3834 = vmatmul.bf16.gmra.mxu0 %v3044
    %v3835 = vpop.f32.mrf.mxu0
    %v3836 = vadd.f32 %v3178, %v3835
    %v3837 = vpop.f32.mrf.mxu0
    %v3838 = vadd.f32 %v3178, %v3837
    %3839 = vdwg.mxu0
    %3840 = vmatpush.bf16.msra.mxu0 %v3630
    %3841 = vmatpush.bf16.msra.mxu0 %v3626
    %3842 = vmatpush.bf16.msra.mxu0 %v3622
    %3843 = vmatpush.bf16.msra.mxu0 %v3618
    %3844 = vmatpush.bf16.msra.mxu0 %v3614
    %3845 = vmatpush.bf16.msra.mxu0 %v3610
    %3846 = vmatpush.bf16.msra.mxu0 %v3606
    %3847 = vmatpush.bf16.msra.mxu0 %v3602
    %3848 = vmatmul.bf16.gmra.mxu0 %v3045
    %v3849 = vpop.f32.mrf.mxu0
    %v3850 = vadd.f32 %v3836, %v3849
    %v3851 = vpop.f32.mrf.mxu0
    %v3852 = vadd.f32 %v3838, %v3851
    %3853 = vdwg.mxu0
    %3854 = vmatpush.bf16.msra.mxu0 %v3662
    %3855 = vmatpush.bf16.msra.mxu0 %v3658
    %3856 = vmatpush.bf16.msra.mxu0 %v3654
    %3857 = vmatpush.bf16.msra.mxu0 %v3650
    %3858 = vmatpush.bf16.msra.mxu0 %v3646
    %3859 = vmatpush.bf16.msra.mxu0 %v3642
    %3860 = vmatpush.bf16.msra.mxu0 %v3638
    %3861 = vmatpush.bf16.msra.mxu0 %v3634
    %3862 = vmatmul.bf16.gmra.mxu0 %v3046
    %v3863 = vpop.f32.mrf.mxu0
    %v3864 = vadd.f32 %v3850, %v3863
    %v3865 = vpop.f32.mrf.mxu0
    %v3866 = vadd.f32 %v3852, %v3865
    %3867 = vdwg.mxu0
    %3868 = vmatpush.bf16.msra.mxu0 %v3694
    %3869 = vmatpush.bf16.msra.mxu0 %v3690
    %3870 = vmatpush.bf16.msra.mxu0 %v3686
    %3871 = vmatpush.bf16.msra.mxu0 %v3682
    %3872 = vmatpush.bf16.msra.mxu0 %v3678
    %3873 = vmatpush.bf16.msra.mxu0 %v3674
    %3874 = vmatpush.bf16.msra.mxu0 %v3670
    %3875 = vmatpush.bf16.msra.mxu0 %v3666
    %3876 = vmatmul.bf16.gmra.mxu0 %v3047
    %v3877 = vpop.f32.mrf.mxu0
    %v3878 = vadd.f32 %v3864, %v3877
    %v3879 = vpop.f32.mrf.mxu0
    %v3880 = vadd.f32 %v3866, %v3879
    %3881 = vdwg.mxu0
    %3882 = vmatpush.bf16.msra.mxu0 %v3599
    %3883 = vmatpush.bf16.msra.mxu0 %v3595
    %3884 = vmatpush.bf16.msra.mxu0 %v3591
    %3885 = vmatpush.bf16.msra.mxu0 %v3587
    %3886 = vmatpush.bf16.msra.mxu0 %v3583
    %3887 = vmatpush.bf16.msra.mxu0 %v3579
    %3888 = vmatpush.bf16.msra.mxu0 %v3575
    %3889 = vmatpush.bf16.msra.mxu0 %v3571
    %3890 = vmatmul.bf16.gmra.mxu0 %v3044
    %v3891 = vpop.f32.mrf.mxu0
    %v3892 = vadd.f32 %v3179, %v3891
    %v3893 = vpop.f32.mrf.mxu0
    %v3894 = vadd.f32 %v3179, %v3893
    %3895 = vdwg.mxu0
    %3896 = vmatpush.bf16.msra.mxu0 %v3631
    %3897 = vmatpush.bf16.msra.mxu0 %v3627
    %3898 = vmatpush.bf16.msra.mxu0 %v3623
    %3899 = vmatpush.bf16.msra.mxu0 %v3619
    %3900 = vmatpush.bf16.msra.mxu0 %v3615
    %3901 = vmatpush.bf16.msra.mxu0 %v3611
    %3902 = vmatpush.bf16.msra.mxu0 %v3607
    %3903 = vmatpush.bf16.msra.mxu0 %v3603
    %3904 = vmatmul.bf16.gmra.mxu0 %v3045
    %v3905 = vpop.f32.mrf.mxu0
    %v3906 = vadd.f32 %v3892, %v3905
    %v3907 = vpop.f32.mrf.mxu0
    %v3908 = vadd.f32 %v3894, %v3907
    %3909 = vdwg.mxu0
    %3910 = vmatpush.bf16.msra.mxu0 %v3663
    %3911 = vmatpush.bf16.msra.mxu0 %v3659
    %3912 = vmatpush.bf16.msra.mxu0 %v3655
    %3913 = vmatpush.bf16.msra.mxu0 %v3651
    %3914 = vmatpush.bf16.msra.mxu0 %v3647
    %3915 = vmatpush.bf16.msra.mxu0 %v3643
    %3916 = vmatpush.bf16.msra.mxu0 %v3639
    %3917 = vmatpush.bf16.msra.mxu0 %v3635
    %3918 = vmatmul.bf16.gmra.mxu0 %v3046
    %v3919 = vpop.f32.mrf.mxu0
    %v3920 = vadd.f32 %v3906, %v3919
    %v3921 = vpop.f32.mrf.mxu0
    %v3922 = vadd.f32 %v3908, %v3921
    %3923 = vdwg.mxu0
    %3924 = vmatpush.bf16.msra.mxu0 %v3695
    %3925 = vmatpush.bf16.msra.mxu0 %v3691
    %3926 = vmatpush.bf16.msra.mxu0 %v3687
    %3927 = vmatpush.bf16.msra.mxu0 %v3683
    %3928 = vmatpush.bf16.msra.mxu0 %v3679
    %3929 = vmatpush.bf16.msra.mxu0 %v3675
    %3930 = vmatpush.bf16.msra.mxu0 %v3671
    %3931 = vmatpush.bf16.msra.mxu0 %v3667
    %3932 = vmatmul.bf16.gmra.mxu0 %v3047
    %v3933 = vpop.f32.mrf.mxu0
    %v3934 = vadd.f32 %v3920, %v3933
    %v3935 = vpop.f32.mrf.mxu0
    %v3936 = vadd.f32 %v3922, %v3935
    %3937 = vdwg.mxu0
    %3938 = vmatpush.bf16.msra.mxu0 %v3600
    %3939 = vmatpush.bf16.msra.mxu0 %v3596
    %3940 = vmatpush.bf16.msra.mxu0 %v3592
    %3941 = vmatpush.bf16.msra.mxu0 %v3588
    %3942 = vmatpush.bf16.msra.mxu0 %v3584
    %3943 = vmatpush.bf16.msra.mxu0 %v3580
    %3944 = vmatpush.bf16.msra.mxu0 %v3576
    %3945 = vmatpush.bf16.msra.mxu0 %v3572
    %3946 = vmatmul.bf16.gmra.mxu0 %v3044
    %v3947 = vpop.f32.mrf.mxu0
    %v3948 = vadd.f32 %v3180, %v3947
    %v3949 = vpop.f32.mrf.mxu0
    %v3950 = vadd.f32 %v3180, %v3949
    %3951 = vdwg.mxu0
    %3952 = vmatpush.bf16.msra.mxu0 %v3632
    %3953 = vmatpush.bf16.msra.mxu0 %v3628
    %3954 = vmatpush.bf16.msra.mxu0 %v3624
    %3955 = vmatpush.bf16.msra.mxu0 %v3620
    %3956 = vmatpush.bf16.msra.mxu0 %v3616
    %3957 = vmatpush.bf16.msra.mxu0 %v3612
    %3958 = vmatpush.bf16.msra.mxu0 %v3608
    %3959 = vmatpush.bf16.msra.mxu0 %v3604
    %3960 = vmatmul.bf16.gmra.mxu0 %v3045
    %v3961 = vpop.f32.mrf.mxu0
    %v3962 = vadd.f32 %v3948, %v3961
    %v3963 = vpop.f32.mrf.mxu0
    %v3964 = vadd.f32 %v3950, %v3963
    %3965 = vdwg.mxu0
    %3966 = vmatpush.bf16.msra.mxu0 %v3664
    %3967 = vmatpush.bf16.msra.mxu0 %v3660
    %3968 = vmatpush.bf16.msra.mxu0 %v3656
    %3969 = vmatpush.bf16.msra.mxu0 %v3652
    %3970 = vmatpush.bf16.msra.mxu0 %v3648
    %3971 = vmatpush.bf16.msra.mxu0 %v3644
    %3972 = vmatpush.bf16.msra.mxu0 %v3640
    %3973 = vmatpush.bf16.msra.mxu0 %v3636
    %3974 = vmatmul.bf16.gmra.mxu0 %v3046
    %v3975 = vpop.f32.mrf.mxu0
    %v3976 = vadd.f32 %v3962, %v3975
    %v3977 = vpop.f32.mrf.mxu0
    %v3978 = vadd.f32 %v3964, %v3977
    %3979 = vdwg.mxu0
    %3980 = vmatpush.bf16.msra.mxu0 %v3696
    %3981 = vmatpush.bf16.msra.mxu0 %v3692
    %3982 = vmatpush.bf16.msra.mxu0 %v3688
    %3983 = vmatpush.bf16.msra.mxu0 %v3684
    %3984 = vmatpush.bf16.msra.mxu0 %v3680
    %3985 = vmatpush.bf16.msra.mxu0 %v3676
    %3986 = vmatpush.bf16.msra.mxu0 %v3672
    %3987 = vmatpush.bf16.msra.mxu0 %v3668
    %3988 = vmatmul.bf16.gmra.mxu0 %v3047
    %v3989 = vpop.f32.mrf.mxu0
    %v3990 = vadd.f32 %v3976, %v3989
    %v3991 = vpop.f32.mrf.mxu0
    %v3992 = vadd.f32 %v3978, %v3991
    %3993 = vdwg.mxu0
    %3994 = vmatpush.bf16.msra.mxu0 %v3601
    %3995 = vmatpush.bf16.msra.mxu0 %v3597
    %3996 = vmatpush.bf16.msra.mxu0 %v3593
    %3997 = vmatpush.bf16.msra.mxu0 %v3589
    %3998 = vmatpush.bf16.msra.mxu0 %v3585
    %3999 = vmatpush.bf16.msra.mxu0 %v3581
    %4000 = vmatpush.bf16.msra.mxu0 %v3577
    %4001 = vmatpush.bf16.msra.mxu0 %v3573
    %4002 = vmatmul.bf16.gmra.mxu0 %v3044
    %v4003 = vpop.f32.mrf.mxu0
    %v4004 = vadd.f32 %v3181, %v4003
    %v4005 = vpop.f32.mrf.mxu0
    %v4006 = vadd.f32 %v3181, %v4005
    %4007 = vdwg.mxu0
    %4008 = vmatpush.bf16.msra.mxu0 %v3633
    %4009 = vmatpush.bf16.msra.mxu0 %v3629
    %4010 = vmatpush.bf16.msra.mxu0 %v3625
    %4011 = vmatpush.bf16.msra.mxu0 %v3621
    %4012 = vmatpush.bf16.msra.mxu0 %v3617
    %4013 = vmatpush.bf16.msra.mxu0 %v3613
    %4014 = vmatpush.bf16.msra.mxu0 %v3609
    %4015 = vmatpush.bf16.msra.mxu0 %v3605
    %4016 = vmatmul.bf16.gmra.mxu0 %v3045
    %v4017 = vpop.f32.mrf.mxu0
    %v4018 = vadd.f32 %v4004, %v4017
    %v4019 = vpop.f32.mrf.mxu0
    %v4020 = vadd.f32 %v4006, %v4019
    %4021 = vdwg.mxu0
    %4022 = vmatpush.bf16.msra.mxu0 %v3665
    %4023 = vmatpush.bf16.msra.mxu0 %v3661
    %4024 = vmatpush.bf16.msra.mxu0 %v3657
    %4025 = vmatpush.bf16.msra.mxu0 %v3653
    %4026 = vmatpush.bf16.msra.mxu0 %v3649
    %4027 = vmatpush.bf16.msra.mxu0 %v3645
    %4028 = vmatpush.bf16.msra.mxu0 %v3641
    %4029 = vmatpush.bf16.msra.mxu0 %v3637
    %4030 = vmatmul.bf16.gmra.mxu0 %v3046
    %v4031 = vpop.f32.mrf.mxu0
    %v4032 = vadd.f32 %v4018, %v4031
    %v4033 = vpop.f32.mrf.mxu0
    %v4034 = vadd.f32 %v4020, %v4033
    %4035 = vdwg.mxu0
    %4036 = vmatpush.bf16.msra.mxu0 %v3697
    %4037 = vmatpush.bf16.msra.mxu0 %v3693
    %4038 = vmatpush.bf16.msra.mxu0 %v3689
    %4039 = vmatpush.bf16.msra.mxu0 %v3685
    %4040 = vmatpush.bf16.msra.mxu0 %v3681
    %4041 = vmatpush.bf16.msra.mxu0 %v3677
    %4042 = vmatpush.bf16.msra.mxu0 %v3673
    %4043 = vmatpush.bf16.msra.mxu0 %v3669
    %4044 = vmatmul.bf16.gmra.mxu0 %v3047
    %v4045 = vpop.f32.mrf.mxu0
    %v4046 = vadd.f32 %v4032, %v4045
    %v4047 = vpop.f32.mrf.mxu0
    %v4048 = vadd.f32 %v4034, %v4047
    %4049 = vdwg.mxu0
    %v4050 = vxor.u32 %v3878, 2147483648
    %v4051 = vxor.u32 %v3934, 2147483648
    %v4052 = vxor.u32 %v3990, 2147483648
    %v4053 = vxor.u32 %v4046, 2147483648
    %v4054 = vxor.u32 %v3880, 2147483648
    %v4055 = vxor.u32 %v3936, 2147483648
    %v4056 = vxor.u32 %v3992, 2147483648
    %v4057 = vxor.u32 %v4048, 2147483648
    %v4058 = vmul.f32 %v4050, 1.442695
    %v4059 = vpow.pop %v4058
    %v4060 = vmul.f32 %v4051, 1.442695
    %v4061 = vpow.pop %v4060
    %v4062 = vmul.f32 %v4052, 1.442695
    %v4063 = vpow.pop %v4062
    %v4064 = vmul.f32 %v4053, 1.442695
    %v4065 = vpow.pop %v4064
    %v4066 = vmul.f32 %v4054, 1.442695
    %v4067 = vpow.pop %v4066
    %v4068 = vmul.f32 %v4055, 1.442695
    %v4069 = vpow.pop %v4068
    %v4070 = vmul.f32 %v4056, 1.442695
    %v4071 = vpow.pop %v4070
    %v4072 = vmul.f32 %v4057, 1.442695
    %v4073 = vpow.pop %v4072
    %v4074 = vadd.f32 %v4059, 1.0
    %v4075 = vadd.f32 %v4061, 1.0
    %v4076 = vadd.f32 %v4063, 1.0
    %v4077 = vadd.f32 %v4065, 1.0
    %v4078 = vadd.f32 %v4067, 1.0
    %v4079 = vadd.f32 %v4069, 1.0
    %v4080 = vadd.f32 %v4071, 1.0
    %v4081 = vadd.f32 %v4073, 1.0
    %v4082 = vrcp.pop %v4074
    %v4083 = vmul.f32 %v4074, %v4082
    %v4084 = vsub.f32 1.0, %v4083
    %v4085 = vmul.f32 %v4082, %v4084
    %v4086 = vadd.f32 %v4082, %v4085
    %vm4087 = vweird.f32 %v4074
    %vm4088 = vweird.f32 %v4082
    %vm4089 = vmor %vm4087, %vm4088
    %v4090 = vsel %vm4089, %v4082, %v4086
    %v4091 = vand.u32 2147483647, %v4074
    %vm4092 = vcmp.eq.f32.partialorder %v4091, 8.507059e+37
    %v4093 = vand.u32 %v4074, 2147483648
    %v4094 = vor.u32 1.1754944e-38, %v4093
    %v4095 = vsel %vm4092, %v4094, %v4090
    %v4096 = vmul.f32 1.0, %v4095
    %v4097 = vrcp.pop %v4075
    %v4098 = vmul.f32 %v4075, %v4097
    %v4099 = vsub.f32 1.0, %v4098
    %v4100 = vmul.f32 %v4097, %v4099
    %v4101 = vadd.f32 %v4097, %v4100
    %vm4102 = vweird.f32 %v4075
    %vm4103 = vweird.f32 %v4097
    %vm4104 = vmor %vm4102, %vm4103
    %v4105 = vsel %vm4104, %v4097, %v4101
    %v4106 = vand.u32 2147483647, %v4075
    %vm4107 = vcmp.eq.f32.partialorder %v4106, 8.507059e+37
    %v4108 = vand.u32 %v4075, 2147483648
    %v4109 = vor.u32 1.1754944e-38, %v4108
    %v4110 = vsel %vm4107, %v4109, %v4105
    %v4111 = vmul.f32 1.0, %v4110
    %v4112 = vrcp.pop %v4076
    %v4113 = vmul.f32 %v4076, %v4112
    %v4114 = vsub.f32 1.0, %v4113
    %v4115 = vmul.f32 %v4112, %v4114
    %v4116 = vadd.f32 %v4112, %v4115
    %vm4117 = vweird.f32 %v4076
    %vm4118 = vweird.f32 %v4112
    %vm4119 = vmor %vm4117, %vm4118
    %v4120 = vsel %vm4119, %v4112, %v4116
    %v4121 = vand.u32 2147483647, %v4076
    %vm4122 = vcmp.eq.f32.partialorder %v4121, 8.507059e+37
    %v4123 = vand.u32 %v4076, 2147483648
    %v4124 = vor.u32 1.1754944e-38, %v4123
    %v4125 = vsel %vm4122, %v4124, %v4120
    %v4126 = vmul.f32 1.0, %v4125
    %v4127 = vrcp.pop %v4077
    %v4128 = vmul.f32 %v4077, %v4127
    %v4129 = vsub.f32 1.0, %v4128
    %v4130 = vmul.f32 %v4127, %v4129
    %v4131 = vadd.f32 %v4127, %v4130
    %vm4132 = vweird.f32 %v4077
    %vm4133 = vweird.f32 %v4127
    %vm4134 = vmor %vm4132, %vm4133
    %v4135 = vsel %vm4134, %v4127, %v4131
    %v4136 = vand.u32 2147483647, %v4077
    %vm4137 = vcmp.eq.f32.partialorder %v4136, 8.507059e+37
    %v4138 = vand.u32 %v4077, 2147483648
    %v4139 = vor.u32 1.1754944e-38, %v4138
    %v4140 = vsel %vm4137, %v4139, %v4135
    %v4141 = vmul.f32 1.0, %v4140
    %v4142 = vrcp.pop %v4078
    %v4143 = vmul.f32 %v4078, %v4142
    %v4144 = vsub.f32 1.0, %v4143
    %v4145 = vmul.f32 %v4142, %v4144
    %v4146 = vadd.f32 %v4142, %v4145
    %vm4147 = vweird.f32 %v4078
    %vm4148 = vweird.f32 %v4142
    %vm4149 = vmor %vm4147, %vm4148
    %v4150 = vsel %vm4149, %v4142, %v4146
    %v4151 = vand.u32 2147483647, %v4078
    %vm4152 = vcmp.eq.f32.partialorder %v4151, 8.507059e+37
    %v4153 = vand.u32 %v4078, 2147483648
    %v4154 = vor.u32 1.1754944e-38, %v4153
    %v4155 = vsel %vm4152, %v4154, %v4150
    %v4156 = vmul.f32 1.0, %v4155
    %v4157 = vrcp.pop %v4079
    %v4158 = vmul.f32 %v4079, %v4157
    %v4159 = vsub.f32 1.0, %v4158
    %v4160 = vmul.f32 %v4157, %v4159
    %v4161 = vadd.f32 %v4157, %v4160
    %vm4162 = vweird.f32 %v4079
    %vm4163 = vweird.f32 %v4157
    %vm4164 = vmor %vm4162, %vm4163
    %v4165 = vsel %vm4164, %v4157, %v4161
    %v4166 = vand.u32 2147483647, %v4079
    %vm4167 = vcmp.eq.f32.partialorder %v4166, 8.507059e+37
    %v4168 = vand.u32 %v4079, 2147483648
    %v4169 = vor.u32 1.1754944e-38, %v4168
    %v4170 = vsel %vm4167, %v4169, %v4165
    %v4171 = vmul.f32 1.0, %v4170
    %v4172 = vrcp.pop %v4080
    %v4173 = vmul.f32 %v4080, %v4172
    %v4174 = vsub.f32 1.0, %v4173
    %v4175 = vmul.f32 %v4172, %v4174
    %v4176 = vadd.f32 %v4172, %v4175
    %vm4177 = vweird.f32 %v4080
    %vm4178 = vweird.f32 %v4172
    %vm4179 = vmor %vm4177, %vm4178
    %v4180 = vsel %vm4179, %v4172, %v4176
    %v4181 = vand.u32 2147483647, %v4080
    %vm4182 = vcmp.eq.f32.partialorder %v4181, 8.507059e+37
    %v4183 = vand.u32 %v4080, 2147483648
    %v4184 = vor.u32 1.1754944e-38, %v4183
    %v4185 = vsel %vm4182, %v4184, %v4180
    %v4186 = vmul.f32 1.0, %v4185
    %v4187 = vrcp.pop %v4081
    %v4188 = vmul.f32 %v4081, %v4187
    %v4189 = vsub.f32 1.0, %v4188
    %v4190 = vmul.f32 %v4187, %v4189
    %v4191 = vadd.f32 %v4187, %v4190
    %vm4192 = vweird.f32 %v4081
    %vm4193 = vweird.f32 %v4187
    %vm4194 = vmor %vm4192, %vm4193
    %v4195 = vsel %vm4194, %v4187, %v4191
    %v4196 = vand.u32 2147483647, %v4081
    %vm4197 = vcmp.eq.f32.partialorder %v4196, 8.507059e+37
    %v4198 = vand.u32 %v4081, 2147483648
    %v4199 = vor.u32 1.1754944e-38, %v4198
    %v4200 = vsel %vm4197, %v4199, %v4195
    %v4201 = vmul.f32 1.0, %v4200
    %v4202 = vmul.f32 %v3878, %v4096
    %v4203 = vmul.f32 %v3934, %v4111
    %v4204 = vmul.f32 %v3990, %v4126
    %v4205 = vmul.f32 %v4046, %v4141
    %v4206 = vmul.f32 %v3880, %v4156
    %v4207 = vmul.f32 %v3936, %v4171
    %v4208 = vmul.f32 %v3992, %v4186
    %v4209 = vmul.f32 %v4048, %v4201
    %v4210 = vpack.c.bf16 %v4206, %v4202
    %v4211 = vpack.c.bf16 %v4207, %v4203
    %v4212 = vpack.c.bf16 %v4208, %v4204
    %v4213 = vpack.c.bf16 %v4209, %v4205
    %v4214 = vld [vmem:[#allocation16] sm:$0xf]
    %v4215 = vld [vmem:[#allocation16 + $0x4] sm:$0xf]
    %v4216 = vld [vmem:[#allocation16 + $0x8] sm:$0xf]
    %v4217 = vld [vmem:[#allocation16 + $0xc] sm:$0xf]
    %v4218 = vld [vmem:[#allocation16 + $0x10] sm:$0xf]
    %v4219 = vld [vmem:[#allocation16 + $0x14] sm:$0xf]
    %v4220 = vld [vmem:[#allocation16 + $0x18] sm:$0xf]
    %v4221 = vld [vmem:[#allocation16 + $0x1c] sm:$0xf]
    %v4222 = vld [vmem:[#allocation16 + $0x20] sm:$0xf]
    %v4223 = vld [vmem:[#allocation16 + $0x24] sm:$0xf]
    %v4224 = vld [vmem:[#allocation16 + $0x28] sm:$0xf]
    %v4225 = vld [vmem:[#allocation16 + $0x2c] sm:$0xf]
    %v4226 = vld [vmem:[#allocation16 + $0x30] sm:$0xf]
    %v4227 = vld [vmem:[#allocation16 + $0x34] sm:$0xf]
    %v4228 = vld [vmem:[#allocation16 + $0x38] sm:$0xf]
    %v4229 = vld [vmem:[#allocation16 + $0x3c] sm:$0xf]
    %v4230 = vld [vmem:[#allocation16 + $0x40] sm:$0xf]
    %v4231 = vld [vmem:[#allocation16 + $0x44] sm:$0xf]
    %v4232 = vld [vmem:[#allocation16 + $0x48] sm:$0xf]
    %v4233 = vld [vmem:[#allocation16 + $0x4c] sm:$0xf]
    %v4234 = vld [vmem:[#allocation16 + $0x50] sm:$0xf]
    %v4235 = vld [vmem:[#allocation16 + $0x54] sm:$0xf]
    %v4236 = vld [vmem:[#allocation16 + $0x58] sm:$0xf]
    %v4237 = vld [vmem:[#allocation16 + $0x5c] sm:$0xf]
    %v4238 = vld [vmem:[#allocation16 + $0x60] sm:$0xf]
    %v4239 = vld [vmem:[#allocation16 + $0x64] sm:$0xf]
    %v4240 = vld [vmem:[#allocation16 + $0x68] sm:$0xf]
    %v4241 = vld [vmem:[#allocation16 + $0x6c] sm:$0xf]
    %v4242 = vld [vmem:[#allocation16 + $0x70] sm:$0xf]
    %v4243 = vld [vmem:[#allocation16 + $0x74] sm:$0xf]
    %v4244 = vld [vmem:[#allocation16 + $0x78] sm:$0xf]
    %v4245 = vld [vmem:[#allocation16 + $0x7c] sm:$0xf]
    %v4246 = vld [vmem:[#allocation16 + $0x80] sm:$0xf]
    %v4247 = vld [vmem:[#allocation16 + $0x84] sm:$0xf]
    %v4248 = vld [vmem:[#allocation16 + $0x88] sm:$0xf]
    %v4249 = vld [vmem:[#allocation16 + $0x8c] sm:$0xf]
    %v4250 = vld [vmem:[#allocation16 + $0x90] sm:$0xf]
    %v4251 = vld [vmem:[#allocation16 + $0x94] sm:$0xf]
    %v4252 = vld [vmem:[#allocation16 + $0x98] sm:$0xf]
    %v4253 = vld [vmem:[#allocation16 + $0x9c] sm:$0xf]
    %v4254 = vld [vmem:[#allocation16 + $0xa0] sm:$0xf]
    %v4255 = vld [vmem:[#allocation16 + $0xa4] sm:$0xf]
    %v4256 = vld [vmem:[#allocation16 + $0xa8] sm:$0xf]
    %v4257 = vld [vmem:[#allocation16 + $0xac] sm:$0xf]
    %v4258 = vld [vmem:[#allocation16 + $0xb0] sm:$0xf]
    %v4259 = vld [vmem:[#allocation16 + $0xb4] sm:$0xf]
    %v4260 = vld [vmem:[#allocation16 + $0xb8] sm:$0xf]
    %v4261 = vld [vmem:[#allocation16 + $0xbc] sm:$0xf]
    %v4262 = vld [vmem:[#allocation16 + $0xc0] sm:$0xf]
    %v4263 = vld [vmem:[#allocation16 + $0xc4] sm:$0xf]
    %v4264 = vld [vmem:[#allocation16 + $0xc8] sm:$0xf]
    %v4265 = vld [vmem:[#allocation16 + $0xcc] sm:$0xf]
    %v4266 = vld [vmem:[#allocation16 + $0xd0] sm:$0xf]
    %v4267 = vld [vmem:[#allocation16 + $0xd4] sm:$0xf]
    %v4268 = vld [vmem:[#allocation16 + $0xd8] sm:$0xf]
    %v4269 = vld [vmem:[#allocation16 + $0xdc] sm:$0xf]
    %v4270 = vld [vmem:[#allocation16 + $0xe0] sm:$0xf]
    %v4271 = vld [vmem:[#allocation16 + $0xe4] sm:$0xf]
    %v4272 = vld [vmem:[#allocation16 + $0xe8] sm:$0xf]
    %v4273 = vld [vmem:[#allocation16 + $0xec] sm:$0xf]
    %v4274 = vld [vmem:[#allocation16 + $0xf0] sm:$0xf]
    %v4275 = vld [vmem:[#allocation16 + $0xf4] sm:$0xf]
    %v4276 = vld [vmem:[#allocation16 + $0xf8] sm:$0xf]
    %v4277 = vld [vmem:[#allocation16 + $0xfc] sm:$0xf]
    %v4278 = vld [vmem:[%s17] sm:$0x1]
    %v4280 = vperm.slane %v4278, 0
    %v4346 = vunpack.c.l.b16 %v4214
    %v4347 = vunpack.c.l.b16 %v4215
    %v4348 = vunpack.c.l.b16 %v4216
    %v4349 = vunpack.c.l.b16 %v4217
    %v4350 = vunpack.c.l.b16 %v4218
    %v4351 = vunpack.c.l.b16 %v4219
    %v4352 = vunpack.c.l.b16 %v4220
    %v4353 = vunpack.c.l.b16 %v4221
    %v4354 = vunpack.c.l.b16 %v4222
    %v4355 = vunpack.c.l.b16 %v4223
    %v4356 = vunpack.c.l.b16 %v4224
    %v4357 = vunpack.c.l.b16 %v4225
    %v4358 = vunpack.c.l.b16 %v4226
    %v4359 = vunpack.c.l.b16 %v4227
    %v4360 = vunpack.c.l.b16 %v4228
    %v4361 = vunpack.c.l.b16 %v4229
    %v4362 = vunpack.c.l.b16 %v4230
    %v4363 = vunpack.c.l.b16 %v4231
    %v4364 = vunpack.c.l.b16 %v4232
    %v4365 = vunpack.c.l.b16 %v4233
    %v4366 = vunpack.c.l.b16 %v4234
    %v4367 = vunpack.c.l.b16 %v4235
    %v4368 = vunpack.c.l.b16 %v4236
    %v4369 = vunpack.c.l.b16 %v4237
    %v4370 = vunpack.c.l.b16 %v4238
    %v4371 = vunpack.c.l.b16 %v4239
    %v4372 = vunpack.c.l.b16 %v4240
    %v4373 = vunpack.c.l.b16 %v4241
    %v4374 = vunpack.c.l.b16 %v4242
    %v4375 = vunpack.c.l.b16 %v4243
    %v4376 = vunpack.c.l.b16 %v4244
    %v4377 = vunpack.c.l.b16 %v4245
    %v4378 = vunpack.c.l.b16 %v4246
    %v4379 = vunpack.c.l.b16 %v4247
    %v4380 = vunpack.c.l.b16 %v4248
    %v4381 = vunpack.c.l.b16 %v4249
    %v4382 = vunpack.c.l.b16 %v4250
    %v4383 = vunpack.c.l.b16 %v4251
    %v4384 = vunpack.c.l.b16 %v4252
    %v4385 = vunpack.c.l.b16 %v4253
    %v4386 = vunpack.c.l.b16 %v4254
    %v4387 = vunpack.c.l.b16 %v4255
    %v4388 = vunpack.c.l.b16 %v4256
    %v4389 = vunpack.c.l.b16 %v4257
    %v4390 = vunpack.c.l.b16 %v4258
    %v4391 = vunpack.c.l.b16 %v4259
    %v4392 = vunpack.c.l.b16 %v4260
    %v4393 = vunpack.c.l.b16 %v4261
    %v4394 = vunpack.c.l.b16 %v4262
    %v4395 = vunpack.c.l.b16 %v4263
    %v4396 = vunpack.c.l.b16 %v4264
    %v4397 = vunpack.c.l.b16 %v4265
    %v4398 = vunpack.c.l.b16 %v4266
    %v4399 = vunpack.c.l.b16 %v4267
    %v4400 = vunpack.c.l.b16 %v4268
    %v4401 = vunpack.c.l.b16 %v4269
    %v4402 = vunpack.c.l.b16 %v4270
    %v4403 = vunpack.c.l.b16 %v4271
    %v4404 = vunpack.c.l.b16 %v4272
    %v4405 = vunpack.c.l.b16 %v4273
    %v4406 = vunpack.c.l.b16 %v4274
    %v4407 = vunpack.c.l.b16 %v4275
    %v4408 = vunpack.c.l.b16 %v4276
    %v4409 = vunpack.c.l.b16 %v4277
    %v4410 = vpack.c.b16 %v4347, %v4346
    %v4411 = vpack.c.b16 %v4349, %v4348
    %v4412 = vpack.c.b16 %v4351, %v4350
    %v4413 = vpack.c.b16 %v4353, %v4352
    %v4414 = vpack.c.b16 %v4355, %v4354
    %v4415 = vpack.c.b16 %v4357, %v4356
    %v4416 = vpack.c.b16 %v4359, %v4358
    %v4417 = vpack.c.b16 %v4361, %v4360
    %v4418 = vpack.c.b16 %v4363, %v4362
    %v4419 = vpack.c.b16 %v4365, %v4364
    %v4420 = vpack.c.b16 %v4367, %v4366
    %v4421 = vpack.c.b16 %v4369, %v4368
    %v4422 = vpack.c.b16 %v4371, %v4370
    %v4423 = vpack.c.b16 %v4373, %v4372
    %v4424 = vpack.c.b16 %v4375, %v4374
    %v4425 = vpack.c.b16 %v4377, %v4376
    %v4426 = vpack.c.b16 %v4379, %v4378
    %v4427 = vpack.c.b16 %v4381, %v4380
    %v4428 = vpack.c.b16 %v4383, %v4382
    %v4429 = vpack.c.b16 %v4385, %v4384
    %v4430 = vpack.c.b16 %v4387, %v4386
    %v4431 = vpack.c.b16 %v4389, %v4388
    %v4432 = vpack.c.b16 %v4391, %v4390
    %v4433 = vpack.c.b16 %v4393, %v4392
    %v4434 = vpack.c.b16 %v4395, %v4394
    %v4435 = vpack.c.b16 %v4397, %v4396
    %v4436 = vpack.c.b16 %v4399, %v4398
    %v4437 = vpack.c.b16 %v4401, %v4400
    %v4438 = vpack.c.b16 %v4403, %v4402
    %v4439 = vpack.c.b16 %v4405, %v4404
    %v4440 = vpack.c.b16 %v4407, %v4406
    %v4441 = vpack.c.b16 %v4409, %v4408
    %4474 = vmatpush.bf16.msra.mxu0 %v4417
    %4475 = vmatpush.bf16.msra.mxu0 %v4416
    %4476 = vmatpush.bf16.msra.mxu0 %v4415
    %4477 = vmatpush.bf16.msra.mxu0 %v4414
    %4478 = vmatpush.bf16.msra.mxu0 %v4413
    %4479 = vmatpush.bf16.msra.mxu0 %v4412
    %4480 = vmatpush.bf16.msra.mxu0 %v4411
    %4481 = vmatpush.bf16.msra.mxu0 %v4410
    %4482 = vmatmul.bf16.gmra.mxu0 %v4210
    %v4483 = vpop.f32.mrf.mxu0
    %v4484 = vadd.f32 %v4280, %v4483
    %v4485 = vpop.f32.mrf.mxu0
    %v4486 = vadd.f32 %v4280, %v4485
    %4487 = vdwg.mxu0
    %4488 = vmatpush.bf16.msra.mxu0 %v4425
    %4489 = vmatpush.bf16.msra.mxu0 %v4424
    %4490 = vmatpush.bf16.msra.mxu0 %v4423
    %4491 = vmatpush.bf16.msra.mxu0 %v4422
    %4492 = vmatpush.bf16.msra.mxu0 %v4421
    %4493 = vmatpush.bf16.msra.mxu0 %v4420
    %4494 = vmatpush.bf16.msra.mxu0 %v4419
    %4495 = vmatpush.bf16.msra.mxu0 %v4418
    %4496 = vmatmul.bf16.gmra.mxu0 %v4211
    %v4497 = vpop.f32.mrf.mxu0
    %v4498 = vadd.f32 %v4484, %v4497
    %v4499 = vpop.f32.mrf.mxu0
    %v4500 = vadd.f32 %v4486, %v4499
    %4501 = vdwg.mxu0
    %4502 = vmatpush.bf16.msra.mxu0 %v4433
    %4503 = vmatpush.bf16.msra.mxu0 %v4432
    %4504 = vmatpush.bf16.msra.mxu0 %v4431
    %4505 = vmatpush.bf16.msra.mxu0 %v4430
    %4506 = vmatpush.bf16.msra.mxu0 %v4429
    %4507 = vmatpush.bf16.msra.mxu0 %v4428
    %4508 = vmatpush.bf16.msra.mxu0 %v4427
    %4509 = vmatpush.bf16.msra.mxu0 %v4426
    %4510 = vmatmul.bf16.gmra.mxu0 %v4212
    %v4511 = vpop.f32.mrf.mxu0
    %v4512 = vadd.f32 %v4498, %v4511
    %v4513 = vpop.f32.mrf.mxu0
    %v4514 = vadd.f32 %v4500, %v4513
    %4515 = vdwg.mxu0
    %4516 = vmatpush.bf16.msra.mxu0 %v4441
    %4517 = vmatpush.bf16.msra.mxu0 %v4440
    %4518 = vmatpush.bf16.msra.mxu0 %v4439
    %4519 = vmatpush.bf16.msra.mxu0 %v4438
    %4520 = vmatpush.bf16.msra.mxu0 %v4437
    %4521 = vmatpush.bf16.msra.mxu0 %v4436
    %4522 = vmatpush.bf16.msra.mxu0 %v4435
    %4523 = vmatpush.bf16.msra.mxu0 %v4434
    %4524 = vmatmul.bf16.gmra.mxu0 %v4213
    %v4525 = vpop.f32.mrf.mxu0
    %v4526 = vadd.f32 %v4512, %v4525
    %v4527 = vpop.f32.mrf.mxu0
    %v4528 = vadd.f32 %v4514, %v4527
    %4529 = vdwg.mxu0
    %v4530 = vld [vmem:[%s18] sm:$0xff]
    %v4531 = vld [vmem:[%s18 + $0x8] sm:$0xff]
    %v4532 = vld [vmem:[%s18 + $0x10] sm:$0xff]
    %v4533 = vadd.f32 %v2617, %v4530
    %v4534 = vadd.f32 %v2622, %v4530
    %v4535 = vadd.f32 %v4526, %v4531
    %v4536 = vadd.f32 %v4528, %v4531
    %v4537 = vadd.f32 %v2619, %v4532
    %v4538 = vadd.f32 %v2624, %v4532
    %4539 = vst [vmem:[#allocation17] sm:$0xff] %v4533
    %4540 = vst [vmem:[#allocation17 + $0x8] sm:$0xff] %v4535
    %4541 = vst [vmem:[#allocation17 + $0x10] sm:$0xff] %v4537
    %4542 = vst [vmem:[#allocation17 + $0x18] sm:$0xff] %v4534
    %4543 = vst [vmem:[#allocation17 + $0x20] sm:$0xff] %v4536
    %4544 = vst [vmem:[#allocation17 + $0x28] sm:$0xff] %v4538
    // Predicated region
    $region114: #{tpu_custom_call.1} parent=1 // pred_check
      _
    $region115: #{tpu_custom_call.1} parent=1 // pred_check_branch
      %4546 = sbr.rel (0) target = $region117
    $region116: #{tpu_custom_call.1} parent=1 // pred_region
      %4548 = vsyncadd [#allocation4], 0
      %s4549 = sshll.u32 [#allocation17], 4
      %s4550 = int_to_ptr.vmem [resolvable:$true] %s4549
      %s4551 = sshll.u32 %s19, 4
      %s4552 = int_to_ptr.hbm [resolvable:$true] %s4551
      %4557 = dma.vmem_to_hbm [thread:$0]  %s4550, 768, %s4552, [#allocation4], 128, 128, 8
    $region117: #{tpu_custom_call.1} parent=1 // pred_fallthru
      _
    // Predicated region
    $region118: #{tpu_custom_call.1} parent=1 // pred_check
      _
    $region119: #{tpu_custom_call.1} parent=1 // pred_check_branch
      %4559 = sbr.rel (0) target = $region121
    $region120: #{tpu_custom_call.1} parent=1 // pred_region
      %4561 = dma.done [#allocation4], 768
    $region121: #{tpu_custom_call.1} parent=1 // pred_fallthru
      _
    %4562 = vsyncpa [#allocation3], 1
    %4563 = vsyncpa [#allocation6], 1
    %4564 = vsyncpa [#allocation9], 1
    %4565 = vsyncpa [#allocation12], 1
    %4566 = vsyncpa [#allocation15], 1
    %4567 = vsyncpa [#allocation4], 1

</llo_original>
